<compile_context>
chip_gen: v6e
topology: v6e:2x2x1
jax: 0.10.0
libtpu: 0.0.40
codegen_flags: <defaults>
</compile_context>

<pallas_src>
import functools

import jax
import jax.numpy as jnp
from jax import lax
from jax.experimental import pallas as pl
from jax.experimental.pallas import tpu as pltpu


def _vmem_limit_bytes():
    """Per-generation scoped-VMEM budget: ~3/4 of physical VMEM, capped."""
    try:
        cap = int(getattr(pltpu.get_tpu_info(), "vmem_capacity_bytes",
                          64 * 1024 * 1024))
    except Exception:
        cap = 64 * 1024 * 1024
    return max(32 * 1024 * 1024, min((cap * 3) // 4, 100 * 1024 * 1024))


# ----------------------------------------------------------------------------
# Kernel A: fused channel-LayerNorm (single pass) + BOTH depthwise k x k conv
# branches (q: stride 1, kv: stride folded into the tap loads), channels-last.
# Input is the UNPADDED NHWC tensor; zero padding lives only in the VMEM
# scratch halo.  One grid step per batch element.
# TODO(synk): tile over output rows (with a p-row halo) for very large feature
# maps on v7x's 64 MiB VMEM instead of whole-image blocks.
# ----------------------------------------------------------------------------
def _ln_dwconv_dual_kernel(x_ref, g_ref, b_ref, qdw_ref, kvdw_ref,
                           oq_ref, okv_ref, xn_ref, *,
                           k, p, s, H, W, Hk, Wk, eps):
    C = x_ref.shape[-1]
    Hp, Wp = H + 2 * p, W + 2 * p

    # LayerNorm over channels, interior pixels only (single-pass var form).
    x = x_ref[0].astype(jnp.float32)                       # (H, W, C)
    mean = jnp.mean(x, axis=-1, keepdims=True)
    msq = jnp.mean(x * x, axis=-1, keepdims=True)
    xn = (x - mean) * lax.rsqrt(msq - mean * mean + eps)
    xn = xn * g_ref[...].astype(jnp.float32) + b_ref[...].astype(jnp.float32)

    # Zero only the p-wide halo (kept per step: scratch contents are not
    # guaranteed across parallel-sharded grid iterations on megacore parts),
    # then store the LN result into the interior.  No jnp.pad HBM pass.
    if p > 0:
        xn_ref[0:p, :, :] = jnp.zeros((p, Wp, C), jnp.float32)
        xn_ref[Hp - p:Hp, :, :] = jnp.zeros((p, Wp, C), jnp.float32)
        xn_ref[:, 0:p, :] = jnp.zeros((Hp, p, C), jnp.float32)
        xn_ref[:, Wp - p:Wp, :] = jnp.zeros((Hp, p, C), jnp.float32)
    xn_ref[p:p + H, p:p + W, :] = xn

    # Both depthwise branches off the single LN result.
    qdw = qdw_ref[...].astype(jnp.float32)                 # (k*k, C)
    kvdw = kvdw_ref[...].astype(jnp.float32)               # (k*k, C)
    accq = jnp.zeros((H, W, C), jnp.float32)
    acck = jnp.zeros((Hk, Wk, C), jnp.float32)
    for di in range(k):
        for dj in range(k):
            t = di * k + dj
            xt = xn_ref[di:di + H, dj:dj + W, :]
            accq = accq + xt * qdw[t]
            if s == 1:
                xt_kv = xt
            else:
                # TODO(synk): if the sublane-strided load lowers to XLU
                # shuffles, pre-split even/odd W columns in the wrapper.
                xt_kv = xn_ref[pl.ds(di, Hk, stride=s),
                               pl.ds(dj, Wk, stride=s), :]
            acck = acck + xt_kv * kvdw[t]
    oq_ref[0] = accq.astype(oq_ref.dtype)
    okv_ref[0] = acck.astype(okv_ref.dtype)


def ln_dwconv_dual(x_cl, g, b, q_dw_w, kv_dw_w, *, k, stride, eps=1e-5,
                   out_dtype=jnp.bfloat16):
    """x_cl: (B, H, W, C) unpadded NHWC.  Returns (B,H*W,C), (B,Hk*Wk,C)."""
    B, H, W, C = x_cl.shape
    p = k // 2
    Hp, Wp = H + 2 * p, W + 2 * p
    Hk = (H + 2 * p - k) // stride + 1
    Wk = (W + 2 * p - k) // stride + 1
    qdw2 = q_dw_w.reshape(C, k * k).T                      # (k*k, C)
    kvdw2 = kv_dw_w.reshape(C, k * k).T
    q_out, kv_out = pl.pallas_call(
        functools.partial(_ln_dwconv_dual_kernel, k=k, p=p, s=stride,
                          H=H, W=W, Hk=Hk, Wk=Wk, eps=eps),
        grid=(B,),
        out_shape=(jax.ShapeDtypeStruct((B, H, W, C), out_dtype),
                   jax.ShapeDtypeStruct((B, Hk, Wk, C), out_dtype)),
        in_specs=[
            pl.BlockSpec((1, H, W, C), lambda bb: (bb, 0, 0, 0)),
            pl.BlockSpec((1, C), lambda bb: (0, 0)),
            pl.BlockSpec((1, C), lambda bb: (0, 0)),
            pl.BlockSpec((k * k, C), lambda bb: (0, 0)),
            pl.BlockSpec((k * k, C), lambda bb: (0, 0)),
        ],
        out_specs=(pl.BlockSpec((1, H, W, C), lambda bb: (bb, 0, 0, 0)),
                   pl.BlockSpec((1, Hk, Wk, C), lambda bb: (bb, 0, 0, 0))),
        scratch_shapes=[pltpu.VMEM((Hp, Wp, C), jnp.float32)],
        compiler_params=pltpu.CompilerParams(
            dimension_semantics=("parallel",),
            vmem_limit_bytes=_vmem_limit_bytes()),
    )(x_cl, g.reshape(1, C), b.reshape(1, C), qdw2, kvdw2)
    return q_out.reshape(B, H * W, C), kv_out.reshape(B, Hk * Wk, C)


# ----------------------------------------------------------------------------
# Kernel B: fused pointwise projections + flash-style multi-head attention +
# wide to_out.  Grid = (batch, q-tile, kv-tile); kv axis is 'arbitrary' with
# running (m, l, acc) scratch; bf16 MXU operands, f32 accumulation.
# ----------------------------------------------------------------------------
def _attn_flash_kernel(qd_ref, kvd_ref, qw_ref, kwt_ref, vw_ref, ow_ref, ob_ref,
                       o_ref, q_sc, m_sc, l_sc, o_sc, *,
                       heads, dim_head, Nk, TK):
    k_idx = pl.program_id(2)

    @pl.when(k_idx == 0)
    def _init():
        # q projection (attention scale folded into qw), cached per head.
        q = jnp.dot(qd_ref[0].astype(jnp.bfloat16), qw_ref[...],
                    preferred_element_type=jnp.float32)     # (TQ, inner)
        qb = q.astype(jnp.bfloat16)
        for h in range(heads):
            q_sc[h] = qb[:, h * dim_head:(h + 1) * dim_head]
        m_sc[...] = jnp.full(m_sc.shape, -jnp.inf, m_sc.dtype)
        l_sc[...] = jnp.zeros(l_sc.shape, l_sc.dtype)
        o_sc[...] = jnp.zeros(o_sc.shape, o_sc.dtype)

    # Current KV tile: K^T (inner, TK) built once per step (no per-head
    # transpose) and V (TK, inner) once; both bf16.
    kvd = kvd_ref[0].astype(jnp.bfloat16)                   # (TK, C)
    kT = lax.dot_general(kwt_ref[...], kvd, (((1,), (1,)), ((), ())),
                         preferred_element_type=jnp.float32).astype(jnp.bfloat16)
    v = jnp.dot(kvd, vw_ref[...],
                preferred_element_type=jnp.float32).astype(jnp.bfloat16)

    tail = (Nk % TK) != 0
    if tail:
        col = k_idx * TK + lax.broadcasted_iota(jnp.int32, (1, TK), 1)
        kv_valid = col < Nk

    for h in range(heads):
        lo = h * dim_head
        s = jnp.dot(q_sc[h], kT[lo:lo + dim_head, :],
                    preferred_element_type=jnp.float32)      # (TQ, TK)
        if tail:
            s = jnp.where(kv_valid, s, -jnp.inf)
        m_prev = m_sc[h]
        m_new = jnp.maximum(m_prev, jnp.max(s, axis=-1, keepdims=True))
        alpha = jnp.exp(m_prev - m_new)
        # TODO(synk): bf16 exp on v6e/v7x if the EUP becomes the bottleneck.
        p = jnp.exp(s - m_new)
        l_sc[h] = alpha * l_sc[h] + jnp.sum(p, axis=-1, keepdims=True)
        o_sc[h] = alpha * o_sc[h] + jnp.dot(p.astype(jnp.bfloat16),
                                            v[:, lo:lo + dim_head],
                                            preferred_element_type=jnp.float32)
        m_sc[h] = m_new

    @pl.when(k_idx == pl.num_programs(2) - 1)
    def _finalize():
        outs = []
        for h in range(heads):
            inv = pl.reciprocal(l_sc[h], approx=False)       # exact denominator
            outs.append((o_sc[h] * inv).astype(jnp.bfloat16))
        o_heads = jnp.concatenate(outs, axis=-1)             # (TQ, inner)
        # Single wide to_out matmul (K = inner) + bias; dropout p=0 -> identity.
        out = jnp.dot(o_heads, ow_ref[...],
                      preferred_element_type=jnp.float32)    # (TQ, dim)
        o_ref[0] = (out + ob_ref[...].astype(jnp.float32)).astype(o_ref.dtype)


def attention_fused(q_dw, kv_dw, q_pw, kv_pw, out_w, out_b, *,
                    heads, dim_head, scale, out_dtype):
    B, Nq, C = q_dw.shape
    Nk = kv_dw.shape[1]
    inner = heads * dim_head
    dim = out_w.shape[0]
    TQ = Nq if Nq <= 1024 else 512
    TK = Nk if Nk <= 1024 else 512
    nq_t = pl.cdiv(Nq, TQ)
    nk_t = pl.cdiv(Nk, TK)

    qw = (q_pw.astype(jnp.float32) * scale).T.astype(jnp.bfloat16)  # (C, inner)
    kwt = kv_pw[:inner, :].astype(jnp.bfloat16)                     # (inner, C)
    vw = kv_pw[inner:, :].T.astype(jnp.bfloat16)                    # (C, inner)
    ow = out_w.T.astype(jnp.bfloat16)                               # (inner, dim)
    ob = out_b.reshape(1, dim).astype(jnp.float32)

    # TODO(synk): present a lane-dense output slab when dim < 128 (pad C
    # end-to-end) to avoid masked partial stores.
    return pl.pallas_call(
        functools.partial(_attn_flash_kernel, heads=heads, dim_head=dim_head,
                          Nk=Nk, TK=TK),
        grid=(B, nq_t, nk_t),
        out_shape=jax.ShapeDtypeStruct((B, Nq, dim), out_dtype),
        in_specs=[
            pl.BlockSpec((1, TQ, C), lambda b, i, k: (b, i, 0)),
            pl.BlockSpec((1, TK, C), lambda b, i, k: (b, k, 0)),
            pl.BlockSpec((C, inner), lambda b, i, k: (0, 0)),
            pl.BlockSpec((inner, C), lambda b, i, k: (0, 0)),
            pl.BlockSpec((C, inner), lambda b, i, k: (0, 0)),
            pl.BlockSpec((inner, dim), lambda b, i, k: (0, 0)),
            pl.BlockSpec((1, dim), lambda b, i, k: (0, 0)),
        ],
        out_specs=pl.BlockSpec((1, TQ, dim), lambda b, i, k: (b, i, 0)),
        scratch_shapes=[
            pltpu.VMEM((heads, TQ, dim_head), jnp.bfloat16),  # cached q per head
            pltpu.VMEM((heads, TQ, 1), jnp.float32),          # running max
            pltpu.VMEM((heads, TQ, 1), jnp.float32),          # running denom
            pltpu.VMEM((heads, TQ, dim_head), jnp.float32),   # running PV acc
        ],
        compiler_params=pltpu.CompilerParams(
            dimension_semantics=("parallel", "parallel", "arbitrary"),
            vmem_limit_bytes=_vmem_limit_bytes()),
    )(q_dw, kv_dw, qw, kwt, vw, ow, ob)


# ----------------------------------------------------------------------------
# Full forward pass.
# TODO(synk): DepthwiseSeparableConv is assumed to be depthwise kxk conv
# (groups=C_in) followed by a pointwise 1x1 conv, both bias-free (any
# intermediate BatchNorm is identity at init / eval).
# ----------------------------------------------------------------------------
def attention_forward(x, params, *, heads, dim_head, kv_proj_stride,
                      proj_kernel=3):
    B, C, H, W = x.shape
    scale = dim_head ** (-0.5)

    x_cl = jnp.transpose(x, (0, 2, 3, 1))                   # NCHW -> NHWC (once)

    # One fused pass: LayerNorm once + both depthwise branches (bf16 outputs).
    q_dw, kv_dw = ln_dwconv_dual(
        x_cl, params["ln_g"], params["ln_b"], params["q_dw"], params["kv_dw"],
        k=proj_kernel, stride=kv_proj_stride)

    # Fused pointwise projections + flash attention + wide to_out.
    out = attention_fused(q_dw, kv_dw, params["q_pw"], params["kv_pw"],
                          params["out_w"], params["out_b"],
                          heads=heads, dim_head=dim_head, scale=scale,
                          out_dtype=x.dtype)                 # (B, H*W, C)

    out = out.reshape(B, H, W, C)                            # contiguous -> free
    return jnp.transpose(out, (0, 3, 1, 2))                  # NHWC -> NCHW (once)


def init_params(key, dim, inner_dim, proj_kernel=3):
    ks = jax.random.split(key, 6)
    s = 0.1
    return {
        "ln_g": jnp.ones((dim,), jnp.float32),
        "ln_b": jnp.zeros((dim,), jnp.float32),
        "q_dw": s * jax.random.normal(ks[0], (dim, proj_kernel, proj_kernel), jnp.float32),
        "q_pw": s * jax.random.normal(ks[1], (inner_dim, dim), jnp.float32),
        "kv_dw": s * jax.random.normal(ks[2], (dim, proj_kernel, proj_kernel), jnp.float32),
        "kv_pw": s * jax.random.normal(ks[3], (2 * inner_dim, dim), jnp.float32),
        "out_w": s * jax.random.normal(ks[4], (dim, inner_dim), jnp.float32),
        "out_b": s * jax.random.normal(ks[5], (dim,), jnp.float32),
    }


if __name__ == "__main__":
    dim, heads, dim_head, kv_stride = 16, 2, 16, 2
    inner_dim = heads * dim_head
    B, H, W = 2, 8, 8

    key = jax.random.PRNGKey(0)
    kx, kp = jax.random.split(key)
    x = jax.random.normal(kx, (B, dim, H, W), jnp.float32)
    params = init_params(kp, dim, inner_dim)

    fwd = jax.jit(functools.partial(attention_forward, heads=heads,
                                    dim_head=dim_head, kv_proj_stride=kv_stride))
    y = fwd(x, params)
    jax.block_until_ready(y)
    assert y.shape == (B, dim, H, W), y.shape
    assert bool(jnp.all(jnp.isfinite(y)))
    print("KERNEL_OK")
</pallas_src>

<mosaic_0001>
module attributes {stable_mosaic.version = 11 : i64} {
  func.func @_ln_dwconv_dual_kernel(%arg0: i32, %arg1: memref<1x8x8x16xf32, #tpu.memory_space<vmem>>, %arg2: memref<1x16xf32, #tpu.memory_space<vmem>>, %arg3: memref<1x16xf32, #tpu.memory_space<vmem>>, %arg4: memref<9x16xf32, #tpu.memory_space<vmem>>, %arg5: memref<9x16xf32, #tpu.memory_space<vmem>>, %arg6: memref<1x8x8x16xbf16, #tpu.memory_space<vmem>>, %arg7: memref<1x4x4x16xbf16, #tpu.memory_space<vmem>>, %arg8: memref<10x10x16xf32, #tpu.memory_space<vmem>>) attributes {dimension_semantics = [#tpu.dimension_semantics<parallel>], iteration_bounds = array<i64: 2>, scalar_prefetch = 0 : i64, scratch_operands = 1 : i64, tpu.core_type = #tpu.core_type<tc>, window_params = [{transform_indices = @transform_0, window_bounds = array<i64: 1, 8, 8, 16>}, {pipeline_mode = #tpu.pipeline_mode<synchronous>, transform_indices = @transform_1, window_bounds = array<i64: 1, 16>}, {pipeline_mode = #tpu.pipeline_mode<synchronous>, transform_indices = @transform_2, window_bounds = array<i64: 1, 16>}, {pipeline_mode = #tpu.pipeline_mode<synchronous>, transform_indices = @transform_3, window_bounds = array<i64: 9, 16>}, {pipeline_mode = #tpu.pipeline_mode<synchronous>, transform_indices = @transform_4, window_bounds = array<i64: 9, 16>}, {transform_indices = @transform_5, window_bounds = array<i64: 1, 8, 8, 16>}, {transform_indices = @transform_6, window_bounds = array<i64: 1, 4, 4, 16>}]} {
    %c0 = arith.constant 0 : index
    %c0_0 = arith.constant 0 : index
    %c0_1 = arith.constant 0 : index
    %c0_2 = arith.constant 0 : index
    %0 = vector.load %arg1[%c0, %c0_0, %c0_1, %c0_2] : memref<1x8x8x16xf32, #tpu.memory_space<vmem>>, vector<1x8x8x16xf32>
    %1 = vector.shape_cast %0 : vector<1x8x8x16xf32> to vector<8x8x16xf32>
    %cst = arith.constant dense<0.000000e+00> : vector<8x8xf32>
    %2 = vector.multi_reduction <add>, %1, %cst [2] : vector<8x8x16xf32> to vector<8x8xf32>
    %3 = vector.shape_cast %2 : vector<8x8xf32> to vector<8x8x1xf32>
    %cst_3 = arith.constant 1.600000e+01 : f32
    %4 = vector.broadcast %cst_3 : f32 to vector<8x8x1xf32>
    %5 = arith.divf %3, %4 : vector<8x8x1xf32>
    %6 = arith.mulf %1, %1 : vector<8x8x16xf32>
    %cst_4 = arith.constant dense<0.000000e+00> : vector<8x8xf32>
    %7 = vector.multi_reduction <add>, %6, %cst_4 [2] : vector<8x8x16xf32> to vector<8x8xf32>
    %8 = vector.shape_cast %7 : vector<8x8xf32> to vector<8x8x1xf32>
    %cst_5 = arith.constant 1.600000e+01 : f32
    %9 = vector.broadcast %cst_5 : f32 to vector<8x8x1xf32>
    %10 = arith.divf %8, %9 : vector<8x8x1xf32>
    %11 = vector.broadcast %5 : vector<8x8x1xf32> to vector<8x8x16xf32>
    %12 = arith.subf %1, %11 : vector<8x8x16xf32>
    %13 = arith.mulf %5, %5 : vector<8x8x1xf32>
    %14 = arith.subf %10, %13 : vector<8x8x1xf32>
    %cst_6 = arith.constant 9.99999974E-6 : f32
    %15 = vector.broadcast %cst_6 : f32 to vector<8x8x1xf32>
    %16 = arith.addf %14, %15 : vector<8x8x1xf32>
    %17 = math.rsqrt %16 : vector<8x8x1xf32>
    %18 = vector.broadcast %17 : vector<8x8x1xf32> to vector<8x8x16xf32>
    %19 = arith.mulf %12, %18 : vector<8x8x16xf32>
    %c0_7 = arith.constant 0 : index
    %c0_8 = arith.constant 0 : index
    %20 = vector.load %arg2[%c0_7, %c0_8] : memref<1x16xf32, #tpu.memory_space<vmem>>, vector<1x16xf32>
    %21 = vector.shape_cast %20 : vector<1x16xf32> to vector<1x1x16xf32>
    %22 = vector.broadcast %21 : vector<1x1x16xf32> to vector<8x8x16xf32>
    %23 = arith.mulf %19, %22 : vector<8x8x16xf32>
    %c0_9 = arith.constant 0 : index
    %c0_10 = arith.constant 0 : index
    %24 = vector.load %arg3[%c0_9, %c0_10] : memref<1x16xf32, #tpu.memory_space<vmem>>, vector<1x16xf32>
    %25 = vector.shape_cast %24 : vector<1x16xf32> to vector<1x1x16xf32>
    %26 = vector.broadcast %25 : vector<1x1x16xf32> to vector<8x8x16xf32>
    %27 = arith.addf %23, %26 : vector<8x8x16xf32>
    %cst_11 = arith.constant 0.000000e+00 : f32
    %28 = vector.broadcast %cst_11 : f32 to vector<1x10x16xf32>
    %c0_12 = arith.constant 0 : index
    %c0_13 = arith.constant 0 : index
    %c0_14 = arith.constant 0 : index
    %29 = vector.load %arg8[%c0_12, %c0_13, %c0_14] : memref<10x10x16xf32, #tpu.memory_space<vmem>>, vector<1x10x16xf32>
    tpu.vector_store %arg8[%c0_12, %c0_13, %c0_14], %28 {strides = array<i32>} : memref<10x10x16xf32, #tpu.memory_space<vmem>>, vector<1x10x16xf32>,
    %cst_15 = arith.constant 0.000000e+00 : f32
    %30 = vector.broadcast %cst_15 : f32 to vector<1x10x16xf32>
    %c9 = arith.constant 9 : index
    %c0_16 = arith.constant 0 : index
    %c0_17 = arith.constant 0 : index
    %31 = vector.load %arg8[%c9, %c0_16, %c0_17] : memref<10x10x16xf32, #tpu.memory_space<vmem>>, vector<1x10x16xf32>
    tpu.vector_store %arg8[%c9, %c0_16, %c0_17], %30 {strides = array<i32>} : memref<10x10x16xf32, #tpu.memory_space<vmem>>, vector<1x10x16xf32>,
    %cst_18 = arith.constant 0.000000e+00 : f32
    %32 = vector.broadcast %cst_18 : f32 to vector<10x1x16xf32>
    %c0_19 = arith.constant 0 : index
    %c0_20 = arith.constant 0 : index
    %c0_21 = arith.constant 0 : index
    %33 = vector.load %arg8[%c0_19, %c0_20, %c0_21] : memref<10x10x16xf32, #tpu.memory_space<vmem>>, vector<10x1x16xf32>
    tpu.vector_store %arg8[%c0_19, %c0_20, %c0_21], %32 {strides = array<i32>} : memref<10x10x16xf32, #tpu.memory_space<vmem>>, vector<10x1x16xf32>,
    %cst_22 = arith.constant 0.000000e+00 : f32
    %34 = vector.broadcast %cst_22 : f32 to vector<10x1x16xf32>
    %c0_23 = arith.constant 0 : index
    %c9_24 = arith.constant 9 : index
    %c0_25 = arith.constant 0 : index
    %35 = vector.load %arg8[%c0_23, %c9_24, %c0_25] : memref<10x10x16xf32, #tpu.memory_space<vmem>>, vector<10x1x16xf32>
    tpu.vector_store %arg8[%c0_23, %c9_24, %c0_25], %34 {strides = array<i32>} : memref<10x10x16xf32, #tpu.memory_space<vmem>>, vector<10x1x16xf32>,
    %c1 = arith.constant 1 : index
    %c1_26 = arith.constant 1 : index
    %c0_27 = arith.constant 0 : index
    %36 = vector.load %arg8[%c1, %c1_26, %c0_27] : memref<10x10x16xf32, #tpu.memory_space<vmem>>, vector<8x8x16xf32>
    tpu.vector_store %arg8[%c1, %c1_26, %c0_27], %27 {strides = array<i32>} : memref<10x10x16xf32, #tpu.memory_space<vmem>>, vector<8x8x16xf32>,
    %c0_28 = arith.constant 0 : index
    %c0_29 = arith.constant 0 : index
    %37 = vector.load %arg4[%c0_28, %c0_29] : memref<9x16xf32, #tpu.memory_space<vmem>>, vector<9x16xf32>
    %c0_30 = arith.constant 0 : index
    %c0_31 = arith.constant 0 : index
    %38 = vector.load %arg5[%c0_30, %c0_31] : memref<9x16xf32, #tpu.memory_space<vmem>>, vector<9x16xf32>
    %cst_32 = arith.constant 0.000000e+00 : f32
    %39 = vector.broadcast %cst_32 : f32 to vector<8x8x16xf32>
    %cst_33 = arith.constant 0.000000e+00 : f32
    %40 = vector.broadcast %cst_33 : f32 to vector<4x4x16xf32>
    %c0_34 = arith.constant 0 : index
    %c0_35 = arith.constant 0 : index
    %c0_36 = arith.constant 0 : index
    %41 = vector.load %arg8[%c0_34, %c0_35, %c0_36] : memref<10x10x16xf32, #tpu.memory_space<vmem>>, vector<8x8x16xf32>
    %42 = vector.extract_strided_slice %37 {offsets = [0, 0], sizes = [1, 16], strides = [1, 1]} : vector<9x16xf32> to vector<1x16xf32>
    %43 = vector.shape_cast %42 : vector<1x16xf32> to vector<16xf32>
    %44 = vector.shape_cast %43 : vector<16xf32> to vector<1x1x16xf32>
    %45 = vector.broadcast %44 : vector<1x1x16xf32> to vector<8x8x16xf32>
    %46 = arith.mulf %41, %45 : vector<8x8x16xf32>
    %47 = arith.addf %39, %46 : vector<8x8x16xf32>
    %c0_37 = arith.constant 0 : index
    %c0_38 = arith.constant 0 : index
    %c0_39 = arith.constant 0 : index
    %48 = tpu.strided_load %arg8[%c0_37, %c0_38, %c0_39] {strides = array<i32: 2, 2, 1>} : memref<10x10x16xf32, #tpu.memory_space<vmem>>, vector<4x4x16xf32>
    %49 = vector.extract_strided_slice %38 {offsets = [0, 0], sizes = [1, 16], strides = [1, 1]} : vector<9x16xf32> to vector<1x16xf32>
    %50 = vector.shape_cast %49 : vector<1x16xf32> to vector<16xf32>
    %51 = vector.shape_cast %50 : vector<16xf32> to vector<1x1x16xf32>
    %52 = vector.broadcast %51 : vector<1x1x16xf32> to vector<4x4x16xf32>
    %53 = arith.mulf %48, %52 : vector<4x4x16xf32>
    %54 = arith.addf %40, %53 : vector<4x4x16xf32>
    %c0_40 = arith.constant 0 : index
    %c1_41 = arith.constant 1 : index
    %c0_42 = arith.constant 0 : index
    %55 = vector.load %arg8[%c0_40, %c1_41, %c0_42] : memref<10x10x16xf32, #tpu.memory_space<vmem>>, vector<8x8x16xf32>
    %56 = vector.extract_strided_slice %37 {offsets = [1, 0], sizes = [1, 16], strides = [1, 1]} : vector<9x16xf32> to vector<1x16xf32>
    %57 = vector.shape_cast %56 : vector<1x16xf32> to vector<16xf32>
    %58 = vector.shape_cast %57 : vector<16xf32> to vector<1x1x16xf32>
    %59 = vector.broadcast %58 : vector<1x1x16xf32> to vector<8x8x16xf32>
    %60 = arith.mulf %55, %59 : vector<8x8x16xf32>
    %61 = arith.addf %47, %60 : vector<8x8x16xf32>
    %c0_43 = arith.constant 0 : index
    %c1_44 = arith.constant 1 : index
    %c0_45 = arith.constant 0 : index
    %62 = tpu.strided_load %arg8[%c0_43, %c1_44, %c0_45] {strides = array<i32: 2, 2, 1>} : memref<10x10x16xf32, #tpu.memory_space<vmem>>, vector<4x4x16xf32>
    %63 = vector.extract_strided_slice %38 {offsets = [1, 0], sizes = [1, 16], strides = [1, 1]} : vector<9x16xf32> to vector<1x16xf32>
    %64 = vector.shape_cast %63 : vector<1x16xf32> to vector<16xf32>
    %65 = vector.shape_cast %64 : vector<16xf32> to vector<1x1x16xf32>
    %66 = vector.broadcast %65 : vector<1x1x16xf32> to vector<4x4x16xf32>
    %67 = arith.mulf %62, %66 : vector<4x4x16xf32>
    %68 = arith.addf %54, %67 : vector<4x4x16xf32>
    %c0_46 = arith.constant 0 : index
    %c2 = arith.constant 2 : index
    %c0_47 = arith.constant 0 : index
    %69 = vector.load %arg8[%c0_46, %c2, %c0_47] : memref<10x10x16xf32, #tpu.memory_space<vmem>>, vector<8x8x16xf32>
    %70 = vector.extract_strided_slice %37 {offsets = [2, 0], sizes = [1, 16], strides = [1, 1]} : vector<9x16xf32> to vector<1x16xf32>
    %71 = vector.shape_cast %70 : vector<1x16xf32> to vector<16xf32>
    %72 = vector.shape_cast %71 : vector<16xf32> to vector<1x1x16xf32>
    %73 = vector.broadcast %72 : vector<1x1x16xf32> to vector<8x8x16xf32>
    %74 = arith.mulf %69, %73 : vector<8x8x16xf32>
    %75 = arith.addf %61, %74 : vector<8x8x16xf32>
    %c0_48 = arith.constant 0 : index
    %c2_49 = arith.constant 2 : index
    %c0_50 = arith.constant 0 : index
    %76 = tpu.strided_load %arg8[%c0_48, %c2_49, %c0_50] {strides = array<i32: 2, 2, 1>} : memref<10x10x16xf32, #tpu.memory_space<vmem>>, vector<4x4x16xf32>
    %77 = vector.extract_strided_slice %38 {offsets = [2, 0], sizes = [1, 16], strides = [1, 1]} : vector<9x16xf32> to vector<1x16xf32>
    %78 = vector.shape_cast %77 : vector<1x16xf32> to vector<16xf32>
    %79 = vector.shape_cast %78 : vector<16xf32> to vector<1x1x16xf32>
    %80 = vector.broadcast %79 : vector<1x1x16xf32> to vector<4x4x16xf32>
    %81 = arith.mulf %76, %80 : vector<4x4x16xf32>
    %82 = arith.addf %68, %81 : vector<4x4x16xf32>
    %c1_51 = arith.constant 1 : index
    %c0_52 = arith.constant 0 : index
    %c0_53 = arith.constant 0 : index
    %83 = vector.load %arg8[%c1_51, %c0_52, %c0_53] : memref<10x10x16xf32, #tpu.memory_space<vmem>>, vector<8x8x16xf32>
    %84 = vector.extract_strided_slice %37 {offsets = [3, 0], sizes = [1, 16], strides = [1, 1]} : vector<9x16xf32> to vector<1x16xf32>
    %85 = vector.shape_cast %84 : vector<1x16xf32> to vector<16xf32>
    %86 = vector.shape_cast %85 : vector<16xf32> to vector<1x1x16xf32>
    %87 = vector.broadcast %86 : vector<1x1x16xf32> to vector<8x8x16xf32>
    %88 = arith.mulf %83, %87 : vector<8x8x16xf32>
    %89 = arith.addf %75, %88 : vector<8x8x16xf32>
    %c1_54 = arith.constant 1 : index
    %c0_55 = arith.constant 0 : index
    %c0_56 = arith.constant 0 : index
    %90 = tpu.strided_load %arg8[%c1_54, %c0_55, %c0_56] {strides = array<i32: 2, 2, 1>} : memref<10x10x16xf32, #tpu.memory_space<vmem>>, vector<4x4x16xf32>
    %91 = vector.extract_strided_slice %38 {offsets = [3, 0], sizes = [1, 16], strides = [1, 1]} : vector<9x16xf32> to vector<1x16xf32>
    %92 = vector.shape_cast %91 : vector<1x16xf32> to vector<16xf32>
    %93 = vector.shape_cast %92 : vector<16xf32> to vector<1x1x16xf32>
    %94 = vector.broadcast %93 : vector<1x1x16xf32> to vector<4x4x16xf32>
    %95 = arith.mulf %90, %94 : vector<4x4x16xf32>
    %96 = arith.addf %82, %95 : vector<4x4x16xf32>
    %c1_57 = arith.constant 1 : index
    %c1_58 = arith.constant 1 : index
    %c0_59 = arith.constant 0 : index
    %97 = vector.load %arg8[%c1_57, %c1_58, %c0_59] : memref<10x10x16xf32, #tpu.memory_space<vmem>>, vector<8x8x16xf32>
    %98 = vector.extract_strided_slice %37 {offsets = [4, 0], sizes = [1, 16], strides = [1, 1]} : vector<9x16xf32> to vector<1x16xf32>
    %99 = vector.shape_cast %98 : vector<1x16xf32> to vector<16xf32>
    %100 = vector.shape_cast %99 : vector<16xf32> to vector<1x1x16xf32>
    %101 = vector.broadcast %100 : vector<1x1x16xf32> to vector<8x8x16xf32>
    %102 = arith.mulf %97, %101 : vector<8x8x16xf32>
    %103 = arith.addf %89, %102 : vector<8x8x16xf32>
    %c1_60 = arith.constant 1 : index
    %c1_61 = arith.constant 1 : index
    %c0_62 = arith.constant 0 : index
    %104 = tpu.strided_load %arg8[%c1_60, %c1_61, %c0_62] {strides = array<i32: 2, 2, 1>} : memref<10x10x16xf32, #tpu.memory_space<vmem>>, vector<4x4x16xf32>
    %105 = vector.extract_strided_slice %38 {offsets = [4, 0], sizes = [1, 16], strides = [1, 1]} : vector<9x16xf32> to vector<1x16xf32>
    %106 = vector.shape_cast %105 : vector<1x16xf32> to vector<16xf32>
    %107 = vector.shape_cast %106 : vector<16xf32> to vector<1x1x16xf32>
    %108 = vector.broadcast %107 : vector<1x1x16xf32> to vector<4x4x16xf32>
    %109 = arith.mulf %104, %108 : vector<4x4x16xf32>
    %110 = arith.addf %96, %109 : vector<4x4x16xf32>
    %c1_63 = arith.constant 1 : index
    %c2_64 = arith.constant 2 : index
    %c0_65 = arith.constant 0 : index
    %111 = vector.load %arg8[%c1_63, %c2_64, %c0_65] : memref<10x10x16xf32, #tpu.memory_space<vmem>>, vector<8x8x16xf32>
    %112 = vector.extract_strided_slice %37 {offsets = [5, 0], sizes = [1, 16], strides = [1, 1]} : vector<9x16xf32> to vector<1x16xf32>
    %113 = vector.shape_cast %112 : vector<1x16xf32> to vector<16xf32>
    %114 = vector.shape_cast %113 : vector<16xf32> to vector<1x1x16xf32>
    %115 = vector.broadcast %114 : vector<1x1x16xf32> to vector<8x8x16xf32>
    %116 = arith.mulf %111, %115 : vector<8x8x16xf32>
    %117 = arith.addf %103, %116 : vector<8x8x16xf32>
    %c1_66 = arith.constant 1 : index
    %c2_67 = arith.constant 2 : index
    %c0_68 = arith.constant 0 : index
    %118 = tpu.strided_load %arg8[%c1_66, %c2_67, %c0_68] {strides = array<i32: 2, 2, 1>} : memref<10x10x16xf32, #tpu.memory_space<vmem>>, vector<4x4x16xf32>
    %119 = vector.extract_strided_slice %38 {offsets = [5, 0], sizes = [1, 16], strides = [1, 1]} : vector<9x16xf32> to vector<1x16xf32>
    %120 = vector.shape_cast %119 : vector<1x16xf32> to vector<16xf32>
    %121 = vector.shape_cast %120 : vector<16xf32> to vector<1x1x16xf32>
    %122 = vector.broadcast %121 : vector<1x1x16xf32> to vector<4x4x16xf32>
    %123 = arith.mulf %118, %122 : vector<4x4x16xf32>
    %124 = arith.addf %110, %123 : vector<4x4x16xf32>
    %c2_69 = arith.constant 2 : index
    %c0_70 = arith.constant 0 : index
    %c0_71 = arith.constant 0 : index
    %125 = vector.load %arg8[%c2_69, %c0_70, %c0_71] : memref<10x10x16xf32, #tpu.memory_space<vmem>>, vector<8x8x16xf32>
    %126 = vector.extract_strided_slice %37 {offsets = [6, 0], sizes = [1, 16], strides = [1, 1]} : vector<9x16xf32> to vector<1x16xf32>
    %127 = vector.shape_cast %126 : vector<1x16xf32> to vector<16xf32>
    %128 = vector.shape_cast %127 : vector<16xf32> to vector<1x1x16xf32>
    %129 = vector.broadcast %128 : vector<1x1x16xf32> to vector<8x8x16xf32>
    %130 = arith.mulf %125, %129 : vector<8x8x16xf32>
    %131 = arith.addf %117, %130 : vector<8x8x16xf32>
    %c2_72 = arith.constant 2 : index
    %c0_73 = arith.constant 0 : index
    %c0_74 = arith.constant 0 : index
    %132 = tpu.strided_load %arg8[%c2_72, %c0_73, %c0_74] {strides = array<i32: 2, 2, 1>} : memref<10x10x16xf32, #tpu.memory_space<vmem>>, vector<4x4x16xf32>
    %133 = vector.extract_strided_slice %38 {offsets = [6, 0], sizes = [1, 16], strides = [1, 1]} : vector<9x16xf32> to vector<1x16xf32>
    %134 = vector.shape_cast %133 : vector<1x16xf32> to vector<16xf32>
    %135 = vector.shape_cast %134 : vector<16xf32> to vector<1x1x16xf32>
    %136 = vector.broadcast %135 : vector<1x1x16xf32> to vector<4x4x16xf32>
    %137 = arith.mulf %132, %136 : vector<4x4x16xf32>
    %138 = arith.addf %124, %137 : vector<4x4x16xf32>
    %c2_75 = arith.constant 2 : index
    %c1_76 = arith.constant 1 : index
    %c0_77 = arith.constant 0 : index
    %139 = vector.load %arg8[%c2_75, %c1_76, %c0_77] : memref<10x10x16xf32, #tpu.memory_space<vmem>>, vector<8x8x16xf32>
    %140 = vector.extract_strided_slice %37 {offsets = [7, 0], sizes = [1, 16], strides = [1, 1]} : vector<9x16xf32> to vector<1x16xf32>
    %141 = vector.shape_cast %140 : vector<1x16xf32> to vector<16xf32>
    %142 = vector.shape_cast %141 : vector<16xf32> to vector<1x1x16xf32>
    %143 = vector.broadcast %142 : vector<1x1x16xf32> to vector<8x8x16xf32>
    %144 = arith.mulf %139, %143 : vector<8x8x16xf32>
    %145 = arith.addf %131, %144 : vector<8x8x16xf32>
    %c2_78 = arith.constant 2 : index
    %c1_79 = arith.constant 1 : index
    %c0_80 = arith.constant 0 : index
    %146 = tpu.strided_load %arg8[%c2_78, %c1_79, %c0_80] {strides = array<i32: 2, 2, 1>} : memref<10x10x16xf32, #tpu.memory_space<vmem>>, vector<4x4x16xf32>
    %147 = vector.extract_strided_slice %38 {offsets = [7, 0], sizes = [1, 16], strides = [1, 1]} : vector<9x16xf32> to vector<1x16xf32>
    %148 = vector.shape_cast %147 : vector<1x16xf32> to vector<16xf32>
    %149 = vector.shape_cast %148 : vector<16xf32> to vector<1x1x16xf32>
    %150 = vector.broadcast %149 : vector<1x1x16xf32> to vector<4x4x16xf32>
    %151 = arith.mulf %146, %150 : vector<4x4x16xf32>
    %152 = arith.addf %138, %151 : vector<4x4x16xf32>
    %c2_81 = arith.constant 2 : index
    %c2_82 = arith.constant 2 : index
    %c0_83 = arith.constant 0 : index
    %153 = vector.load %arg8[%c2_81, %c2_82, %c0_83] : memref<10x10x16xf32, #tpu.memory_space<vmem>>, vector<8x8x16xf32>
    %154 = vector.extract_strided_slice %37 {offsets = [8, 0], sizes = [1, 16], strides = [1, 1]} : vector<9x16xf32> to vector<1x16xf32>
    %155 = vector.shape_cast %154 : vector<1x16xf32> to vector<16xf32>
    %156 = vector.shape_cast %155 : vector<16xf32> to vector<1x1x16xf32>
    %157 = vector.broadcast %156 : vector<1x1x16xf32> to vector<8x8x16xf32>
    %158 = arith.mulf %153, %157 : vector<8x8x16xf32>
    %159 = arith.addf %145, %158 : vector<8x8x16xf32>
    %c2_84 = arith.constant 2 : index
    %c2_85 = arith.constant 2 : index
    %c0_86 = arith.constant 0 : index
    %160 = tpu.strided_load %arg8[%c2_84, %c2_85, %c0_86] {strides = array<i32: 2, 2, 1>} : memref<10x10x16xf32, #tpu.memory_space<vmem>>, vector<4x4x16xf32>
    %161 = vector.extract_strided_slice %38 {offsets = [8, 0], sizes = [1, 16], strides = [1, 1]} : vector<9x16xf32> to vector<1x16xf32>
    %162 = vector.shape_cast %161 : vector<1x16xf32> to vector<16xf32>
    %163 = vector.shape_cast %162 : vector<16xf32> to vector<1x1x16xf32>
    %164 = vector.broadcast %163 : vector<1x1x16xf32> to vector<4x4x16xf32>
    %165 = arith.mulf %160, %164 : vector<4x4x16xf32>
    %166 = arith.addf %152, %165 : vector<4x4x16xf32>
    %167 = arith.truncf %159 : vector<8x8x16xf32> to vector<8x8x16xbf16>
    %c0_87 = arith.constant 0 : index
    %c0_88 = arith.constant 0 : index
    %c0_89 = arith.constant 0 : index
    %c0_90 = arith.constant 0 : index
    %168 = vector.load %arg6[%c0_87, %c0_88, %c0_89, %c0_90] : memref<1x8x8x16xbf16, #tpu.memory_space<vmem>>, vector<1x8x8x16xbf16>
    %169 = vector.shape_cast %168 : vector<1x8x8x16xbf16> to vector<8x8x16xbf16>
    %170 = vector.shape_cast %167 : vector<8x8x16xbf16> to vector<1x8x8x16xbf16>
    tpu.vector_store %arg6[%c0_87, %c0_88, %c0_89, %c0_90], %170 {strides = array<i32>} : memref<1x8x8x16xbf16, #tpu.memory_space<vmem>>, vector<1x8x8x16xbf16>,
    %171 = arith.truncf %166 : vector<4x4x16xf32> to vector<4x4x16xbf16>
    %c0_91 = arith.constant 0 : index
    %c0_92 = arith.constant 0 : index
    %c0_93 = arith.constant 0 : index
    %c0_94 = arith.constant 0 : index
    %172 = vector.load %arg7[%c0_91, %c0_92, %c0_93, %c0_94] : memref<1x4x4x16xbf16, #tpu.memory_space<vmem>>, vector<1x4x4x16xbf16>
    %173 = vector.shape_cast %172 : vector<1x4x4x16xbf16> to vector<4x4x16xbf16>
    %174 = vector.shape_cast %171 : vector<4x4x16xbf16> to vector<1x4x4x16xbf16>
    tpu.vector_store %arg7[%c0_91, %c0_92, %c0_93, %c0_94], %174 {strides = array<i32>} : memref<1x4x4x16xbf16, #tpu.memory_space<vmem>>, vector<1x4x4x16xbf16>,
    return
  }
  func.func @transform_0(%arg0: i32) -> (i32, i32, i32, i32) {
    %c0_i32 = arith.constant 0 : i32
    %c0_i32_0 = arith.constant 0 : i32
    %c0_i32_1 = arith.constant 0 : i32
    %c0_i32_2 = arith.constant 0 : i32
    return %arg0, %c0_i32, %c0_i32_0, %c0_i32_1 : i32, i32, i32, i32
  }
  func.func @transform_1(%arg0: i32) -> (i32, i32) {
    %c0_i32 = arith.constant 0 : i32
    %c0_i32_0 = arith.constant 0 : i32
    %c0_i32_1 = arith.constant 0 : i32
    return %c0_i32, %c0_i32_0 : i32, i32
  }
  func.func @transform_2(%arg0: i32) -> (i32, i32) {
    %c0_i32 = arith.constant 0 : i32
    %c0_i32_0 = arith.constant 0 : i32
    %c0_i32_1 = arith.constant 0 : i32
    return %c0_i32, %c0_i32_0 : i32, i32
  }
  func.func @transform_3(%arg0: i32) -> (i32, i32) {
    %c0_i32 = arith.constant 0 : i32
    %c0_i32_0 = arith.constant 0 : i32
    %c0_i32_1 = arith.constant 0 : i32
    return %c0_i32, %c0_i32_0 : i32, i32
  }
  func.func @transform_4(%arg0: i32) -> (i32, i32) {
    %c0_i32 = arith.constant 0 : i32
    %c0_i32_0 = arith.constant 0 : i32
    %c0_i32_1 = arith.constant 0 : i32
    return %c0_i32, %c0_i32_0 : i32, i32
  }
  func.func @transform_5(%arg0: i32) -> (i32, i32, i32, i32) {
    %c0_i32 = arith.constant 0 : i32
    %c0_i32_0 = arith.constant 0 : i32
    %c0_i32_1 = arith.constant 0 : i32
    %c0_i32_2 = arith.constant 0 : i32
    return %arg0, %c0_i32, %c0_i32_0, %c0_i32_1 : i32, i32, i32, i32
  }
  func.func @transform_6(%arg0: i32) -> (i32, i32, i32, i32) {
    %c0_i32 = arith.constant 0 : i32
    %c0_i32_0 = arith.constant 0 : i32
    %c0_i32_1 = arith.constant 0 : i32
    %c0_i32_2 = arith.constant 0 : i32
    return %arg0, %c0_i32, %c0_i32_0, %c0_i32_1 : i32, i32, i32, i32
  }
}

module attributes {stable_mosaic.version = 11 : i64} {
  func.func @_attn_flash_kernel(%arg0: i32, %arg1: i32, %arg2: i32, %arg3: memref<1x64x16xbf16, #tpu.memory_space<vmem>>, %arg4: memref<1x16x16xbf16, #tpu.memory_space<vmem>>, %arg5: memref<16x32xbf16, #tpu.memory_space<vmem>>, %arg6: memref<32x16xbf16, #tpu.memory_space<vmem>>, %arg7: memref<16x32xbf16, #tpu.memory_space<vmem>>, %arg8: memref<32x16xbf16, #tpu.memory_space<vmem>>, %arg9: memref<1x16xf32, #tpu.memory_space<vmem>>, %arg10: memref<1x64x16xf32, #tpu.memory_space<vmem>>, %arg11: memref<2x64x16xbf16, #tpu.memory_space<vmem>>, %arg12: memref<2x64x1xf32, #tpu.memory_space<vmem>>, %arg13: memref<2x64x1xf32, #tpu.memory_space<vmem>>, %arg14: memref<2x64x16xf32, #tpu.memory_space<vmem>>) attributes {dimension_semantics = [#tpu.dimension_semantics<parallel>, #tpu.dimension_semantics<parallel>, #tpu.dimension_semantics<arbitrary>], iteration_bounds = array<i64: 2, 1, 1>, scalar_prefetch = 0 : i64, scratch_operands = 4 : i64, tpu.core_type = #tpu.core_type<tc>, window_params = [{transform_indices = @transform_0, window_bounds = array<i64: 1, 64, 16>}, {transform_indices = @transform_1, window_bounds = array<i64: 1, 16, 16>}, {pipeline_mode = #tpu.pipeline_mode<synchronous>, transform_indices = @transform_2, window_bounds = array<i64: 16, 32>}, {pipeline_mode = #tpu.pipeline_mode<synchronous>, transform_indices = @transform_3, window_bounds = array<i64: 32, 16>}, {pipeline_mode = #tpu.pipeline_mode<synchronous>, transform_indices = @transform_4, window_bounds = array<i64: 16, 32>}, {pipeline_mode = #tpu.pipeline_mode<synchronous>, transform_indices = @transform_5, window_bounds = array<i64: 32, 16>}, {pipeline_mode = #tpu.pipeline_mode<synchronous>, transform_indices = @transform_6, window_bounds = array<i64: 1, 16>}, {transform_indices = @transform_7, window_bounds = array<i64: 1, 64, 16>}]} {
    %c0_i32 = arith.constant 0 : i32
    %0 = arith.cmpi eq, %arg2, %c0_i32 : i32
    %1 = arith.extui %0 : i1 to i32
    %c0_i32_0 = arith.constant 0 : i32
    %2 = arith.cmpi ne, %1, %c0_i32_0 : i32
    scf.if %2 {
      %c0_59 = arith.constant 0 : index
      %c0_60 = arith.constant 0 : index
      %c0_61 = arith.constant 0 : index
      %88 = vector.load %arg3[%c0_59, %c0_60, %c0_61] : memref<1x64x16xbf16, #tpu.memory_space<vmem>>, vector<1x64x16xbf16>
      %89 = vector.shape_cast %88 : vector<1x64x16xbf16> to vector<64x16xbf16>
      %c0_62 = arith.constant 0 : index
      %c0_63 = arith.constant 0 : index
      %90 = vector.load %arg5[%c0_62, %c0_63] : memref<16x32xbf16, #tpu.memory_space<vmem>>, vector<16x32xbf16>
      %cst_64 = arith.constant dense<0.000000e+00> : vector<64x32xf32>
      %91 = tpu.matmul %89, %90, %cst_64 {dimension_numbers = #tpu.dot_dimension_numbers<[1], [0], [0], [1], [0, 0, 1, 1], [], []>} : vector<64x16xbf16>, vector<16x32xbf16>, vector<64x32xf32> -> vector<64x32xf32>
      %92 = arith.truncf %91 : vector<64x32xf32> to vector<64x32xbf16>
      %93 = vector.extract_strided_slice %92 {offsets = [0, 0], sizes = [64, 16], strides = [1, 1]} : vector<64x32xbf16> to vector<64x16xbf16>
      %c0_65 = arith.constant 0 : index
      %c0_66 = arith.constant 0 : index
      %c0_67 = arith.constant 0 : index
      %94 = vector.load %arg11[%c0_65, %c0_66, %c0_67] : memref<2x64x16xbf16, #tpu.memory_space<vmem>>, vector<1x64x16xbf16>
      %95 = vector.shape_cast %94 : vector<1x64x16xbf16> to vector<64x16xbf16>
      %96 = vector.shape_cast %93 : vector<64x16xbf16> to vector<1x64x16xbf16>
      tpu.vector_store %arg11[%c0_65, %c0_66, %c0_67], %96 {strides = array<i32>} : memref<2x64x16xbf16, #tpu.memory_space<vmem>>, vector<1x64x16xbf16>,
      %97 = vector.extract_strided_slice %92 {offsets = [0, 16], sizes = [64, 16], strides = [1, 1]} : vector<64x32xbf16> to vector<64x16xbf16>
      %c1_68 = arith.constant 1 : index
      %c0_69 = arith.constant 0 : index
      %c0_70 = arith.constant 0 : index
      %98 = vector.load %arg11[%c1_68, %c0_69, %c0_70] : memref<2x64x16xbf16, #tpu.memory_space<vmem>>, vector<1x64x16xbf16>
      %99 = vector.shape_cast %98 : vector<1x64x16xbf16> to vector<64x16xbf16>
      %100 = vector.shape_cast %97 : vector<64x16xbf16> to vector<1x64x16xbf16>
      tpu.vector_store %arg11[%c1_68, %c0_69, %c0_70], %100 {strides = array<i32>} : memref<2x64x16xbf16, #tpu.memory_space<vmem>>, vector<1x64x16xbf16>,
      %cst_71 = arith.constant 0xFF800000 : f32
      %101 = vector.broadcast %cst_71 : f32 to vector<2x64x1xf32>
      %c0_72 = arith.constant 0 : index
      %c0_73 = arith.constant 0 : index
      %c0_74 = arith.constant 0 : index
      %102 = vector.load %arg12[%c0_72, %c0_73, %c0_74] : memref<2x64x1xf32, #tpu.memory_space<vmem>>, vector<2x64x1xf32>
      tpu.vector_store %arg12[%c0_72, %c0_73, %c0_74], %101 {strides = array<i32>} : memref<2x64x1xf32, #tpu.memory_space<vmem>>, vector<2x64x1xf32>,
      %cst_75 = arith.constant 0.000000e+00 : f32
      %103 = vector.broadcast %cst_75 : f32 to vector<2x64x1xf32>
      %c0_76 = arith.constant 0 : index
      %c0_77 = arith.constant 0 : index
      %c0_78 = arith.constant 0 : index
      %104 = vector.load %arg13[%c0_76, %c0_77, %c0_78] : memref<2x64x1xf32, #tpu.memory_space<vmem>>, vector<2x64x1xf32>
      tpu.vector_store %arg13[%c0_76, %c0_77, %c0_78], %103 {strides = array<i32>} : memref<2x64x1xf32, #tpu.memory_space<vmem>>, vector<2x64x1xf32>,
      %cst_79 = arith.constant 0.000000e+00 : f32
      %105 = vector.broadcast %cst_79 : f32 to vector<2x64x16xf32>
      %c0_80 = arith.constant 0 : index
      %c0_81 = arith.constant 0 : index
      %c0_82 = arith.constant 0 : index
      %106 = vector.load %arg14[%c0_80, %c0_81, %c0_82] : memref<2x64x16xf32, #tpu.memory_space<vmem>>, vector<2x64x16xf32>
      tpu.vector_store %arg14[%c0_80, %c0_81, %c0_82], %105 {strides = array<i32>} : memref<2x64x16xf32, #tpu.memory_space<vmem>>, vector<2x64x16xf32>,
    } else {
    }
    %c0 = arith.constant 0 : index
    %c0_1 = arith.constant 0 : index
    %c0_2 = arith.constant 0 : index
    %3 = vector.load %arg4[%c0, %c0_1, %c0_2] : memref<1x16x16xbf16, #tpu.memory_space<vmem>>, vector<1x16x16xbf16>
    %4 = vector.shape_cast %3 : vector<1x16x16xbf16> to vector<16x16xbf16>
    %c0_3 = arith.constant 0 : index
    %c0_4 = arith.constant 0 : index
    %5 = vector.load %arg6[%c0_3, %c0_4] : memref<32x16xbf16, #tpu.memory_space<vmem>>, vector<32x16xbf16>
    %cst = arith.constant dense<0.000000e+00> : vector<32x16xf32>
    %6 = tpu.matmul %5, %4, %cst {dimension_numbers = #tpu.dot_dimension_numbers<[1], [1], [0], [0], [0, 0, 1, 0], [], []>} : vector<32x16xbf16>, vector<16x16xbf16>, vector<32x16xf32> -> vector<32x16xf32>
    %7 = arith.truncf %6 : vector<32x16xf32> to vector<32x16xbf16>
    %c0_5 = arith.constant 0 : index
    %c0_6 = arith.constant 0 : index
    %8 = vector.load %arg7[%c0_5, %c0_6] : memref<16x32xbf16, #tpu.memory_space<vmem>>, vector<16x32xbf16>
    %cst_7 = arith.constant dense<0.000000e+00> : vector<16x32xf32>
    %9 = tpu.matmul %4, %8, %cst_7 {dimension_numbers = #tpu.dot_dimension_numbers<[1], [0], [0], [1], [0, 0, 1, 1], [], []>} : vector<16x16xbf16>, vector<16x32xbf16>, vector<16x32xf32> -> vector<16x32xf32>
    %10 = arith.truncf %9 : vector<16x32xf32> to vector<16x32xbf16>
    %c0_8 = arith.constant 0 : index
    %c0_9 = arith.constant 0 : index
    %c0_10 = arith.constant 0 : index
    %11 = vector.load %arg11[%c0_8, %c0_9, %c0_10] : memref<2x64x16xbf16, #tpu.memory_space<vmem>>, vector<1x64x16xbf16>
    %12 = vector.shape_cast %11 : vector<1x64x16xbf16> to vector<64x16xbf16>
    %13 = vector.extract_strided_slice %7 {offsets = [0, 0], sizes = [16, 16], strides = [1, 1]} : vector<32x16xbf16> to vector<16x16xbf16>
    %cst_11 = arith.constant dense<0.000000e+00> : vector<64x16xf32>
    %14 = tpu.matmul %12, %13, %cst_11 {dimension_numbers = #tpu.dot_dimension_numbers<[1], [0], [0], [1], [0, 0, 1, 1], [], []>} : vector<64x16xbf16>, vector<16x16xbf16>, vector<64x16xf32> -> vector<64x16xf32>
    %c0_12 = arith.constant 0 : index
    %c0_13 = arith.constant 0 : index
    %c0_14 = arith.constant 0 : index
    %15 = vector.load %arg12[%c0_12, %c0_13, %c0_14] : memref<2x64x1xf32, #tpu.memory_space<vmem>>, vector<1x64x1xf32>
    %16 = vector.shape_cast %15 : vector<1x64x1xf32> to vector<64x1xf32>
    %cst_15 = arith.constant dense<0xFF800000> : vector<64xf32>
    %17 = vector.multi_reduction <maximumf>, %14, %cst_15 [1] : vector<64x16xf32> to vector<64xf32>
    %18 = vector.shape_cast %17 : vector<64xf32> to vector<64x1xf32>
    %19 = arith.maximumf %16, %18 : vector<64x1xf32>
    %20 = arith.subf %16, %19 : vector<64x1xf32>
    %21 = math.exp %20 : vector<64x1xf32>
    %22 = vector.broadcast %19 : vector<64x1xf32> to vector<64x16xf32>
    %23 = arith.subf %14, %22 : vector<64x16xf32>
    %24 = math.exp %23 : vector<64x16xf32>
    %c0_16 = arith.constant 0 : index
    %c0_17 = arith.constant 0 : index
    %c0_18 = arith.constant 0 : index
    %25 = vector.load %arg13[%c0_16, %c0_17, %c0_18] : memref<2x64x1xf32, #tpu.memory_space<vmem>>, vector<1x64x1xf32>
    %26 = vector.shape_cast %25 : vector<1x64x1xf32> to vector<64x1xf32>
    %27 = arith.mulf %21, %26 : vector<64x1xf32>
    %cst_19 = arith.constant dense<0.000000e+00> : vector<64xf32>
    %28 = vector.multi_reduction <add>, %24, %cst_19 [1] : vector<64x16xf32> to vector<64xf32>
    %29 = vector.shape_cast %28 : vector<64xf32> to vector<64x1xf32>
    %30 = arith.addf %27, %29 : vector<64x1xf32>
    %c0_20 = arith.constant 0 : index
    %c0_21 = arith.constant 0 : index
    %c0_22 = arith.constant 0 : index
    %31 = vector.load %arg13[%c0_20, %c0_21, %c0_22] : memref<2x64x1xf32, #tpu.memory_space<vmem>>, vector<1x64x1xf32>
    %32 = vector.shape_cast %31 : vector<1x64x1xf32> to vector<64x1xf32>
    %33 = vector.shape_cast %30 : vector<64x1xf32> to vector<1x64x1xf32>
    tpu.vector_store %arg13[%c0_20, %c0_21, %c0_22], %33 {strides = array<i32>} : memref<2x64x1xf32, #tpu.memory_space<vmem>>, vector<1x64x1xf32>,
    %c0_23 = arith.constant 0 : index
    %c0_24 = arith.constant 0 : index
    %c0_25 = arith.constant 0 : index
    %34 = vector.load %arg14[%c0_23, %c0_24, %c0_25] : memref<2x64x16xf32, #tpu.memory_space<vmem>>, vector<1x64x16xf32>
    %35 = vector.shape_cast %34 : vector<1x64x16xf32> to vector<64x16xf32>
    %36 = vector.broadcast %21 : vector<64x1xf32> to vector<64x16xf32>
    %37 = arith.mulf %36, %35 : vector<64x16xf32>
    %38 = arith.truncf %24 : vector<64x16xf32> to vector<64x16xbf16>
    %39 = vector.extract_strided_slice %10 {offsets = [0, 0], sizes = [16, 16], strides = [1, 1]} : vector<16x32xbf16> to vector<16x16xbf16>
    %cst_26 = arith.constant dense<0.000000e+00> : vector<64x16xf32>
    %40 = tpu.matmul %38, %39, %cst_26 {dimension_numbers = #tpu.dot_dimension_numbers<[1], [0], [0], [1], [0, 0, 1, 1], [], []>} : vector<64x16xbf16>, vector<16x16xbf16>, vector<64x16xf32> -> vector<64x16xf32>
    %41 = arith.addf %37, %40 : vector<64x16xf32>
    %c0_27 = arith.constant 0 : index
    %c0_28 = arith.constant 0 : index
    %c0_29 = arith.constant 0 : index
    %42 = vector.load %arg14[%c0_27, %c0_28, %c0_29] : memref<2x64x16xf32, #tpu.memory_space<vmem>>, vector<1x64x16xf32>
    %43 = vector.shape_cast %42 : vector<1x64x16xf32> to vector<64x16xf32>
    %44 = vector.shape_cast %41 : vector<64x16xf32> to vector<1x64x16xf32>
    tpu.vector_store %arg14[%c0_27, %c0_28, %c0_29], %44 {strides = array<i32>} : memref<2x64x16xf32, #tpu.memory_space<vmem>>, vector<1x64x16xf32>,
    %c0_30 = arith.constant 0 : index
    %c0_31 = arith.constant 0 : index
    %c0_32 = arith.constant 0 : index
    %45 = vector.load %arg12[%c0_30, %c0_31, %c0_32] : memref<2x64x1xf32, #tpu.memory_space<vmem>>, vector<1x64x1xf32>
    %46 = vector.shape_cast %45 : vector<1x64x1xf32> to vector<64x1xf32>
    %47 = vector.shape_cast %19 : vector<64x1xf32> to vector<1x64x1xf32>
    tpu.vector_store %arg12[%c0_30, %c0_31, %c0_32], %47 {strides = array<i32>} : memref<2x64x1xf32, #tpu.memory_space<vmem>>, vector<1x64x1xf32>,
    %c1 = arith.constant 1 : index
    %c0_33 = arith.constant 0 : index
    %c0_34 = arith.constant 0 : index
    %48 = vector.load %arg11[%c1, %c0_33, %c0_34] : memref<2x64x16xbf16, #tpu.memory_space<vmem>>, vector<1x64x16xbf16>
    %49 = vector.shape_cast %48 : vector<1x64x16xbf16> to vector<64x16xbf16>
    %50 = vector.extract_strided_slice %7 {offsets = [16, 0], sizes = [16, 16], strides = [1, 1]} : vector<32x16xbf16> to vector<16x16xbf16>
    %cst_35 = arith.constant dense<0.000000e+00> : vector<64x16xf32>
    %51 = tpu.matmul %49, %50, %cst_35 {dimension_numbers = #tpu.dot_dimension_numbers<[1], [0], [0], [1], [0, 0, 1, 1], [], []>} : vector<64x16xbf16>, vector<16x16xbf16>, vector<64x16xf32> -> vector<64x16xf32>
    %c1_36 = arith.constant 1 : index
    %c0_37 = arith.constant 0 : index
    %c0_38 = arith.constant 0 : index
    %52 = vector.load %arg12[%c1_36, %c0_37, %c0_38] : memref<2x64x1xf32, #tpu.memory_space<vmem>>, vector<1x64x1xf32>
    %53 = vector.shape_cast %52 : vector<1x64x1xf32> to vector<64x1xf32>
    %cst_39 = arith.constant dense<0xFF800000> : vector<64xf32>
    %54 = vector.multi_reduction <maximumf>, %51, %cst_39 [1] : vector<64x16xf32> to vector<64xf32>
    %55 = vector.shape_cast %54 : vector<64xf32> to vector<64x1xf32>
    %56 = arith.maximumf %53, %55 : vector<64x1xf32>
    %57 = arith.subf %53, %56 : vector<64x1xf32>
    %58 = math.exp %57 : vector<64x1xf32>
    %59 = vector.broadcast %56 : vector<64x1xf32> to vector<64x16xf32>
    %60 = arith.subf %51, %59 : vector<64x16xf32>
    %61 = math.exp %60 : vector<64x16xf32>
    %c1_40 = arith.constant 1 : index
    %c0_41 = arith.constant 0 : index
    %c0_42 = arith.constant 0 : index
    %62 = vector.load %arg13[%c1_40, %c0_41, %c0_42] : memref<2x64x1xf32, #tpu.memory_space<vmem>>, vector<1x64x1xf32>
    %63 = vector.shape_cast %62 : vector<1x64x1xf32> to vector<64x1xf32>
    %64 = arith.mulf %58, %63 : vector<64x1xf32>
    %cst_43 = arith.constant dense<0.000000e+00> : vector<64xf32>
    %65 = vector.multi_reduction <add>, %61, %cst_43 [1] : vector<64x16xf32> to vector<64xf32>
    %66 = vector.shape_cast %65 : vector<64xf32> to vector<64x1xf32>
    %67 = arith.addf %64, %66 : vector<64x1xf32>
    %c1_44 = arith.constant 1 : index
    %c0_45 = arith.constant 0 : index
    %c0_46 = arith.constant 0 : index
    %68 = vector.load %arg13[%c1_44, %c0_45, %c0_46] : memref<2x64x1xf32, #tpu.memory_space<vmem>>, vector<1x64x1xf32>
    %69 = vector.shape_cast %68 : vector<1x64x1xf32> to vector<64x1xf32>
    %70 = vector.shape_cast %67 : vector<64x1xf32> to vector<1x64x1xf32>
    tpu.vector_store %arg13[%c1_44, %c0_45, %c0_46], %70 {strides = array<i32>} : memref<2x64x1xf32, #tpu.memory_space<vmem>>, vector<1x64x1xf32>,
    %c1_47 = arith.constant 1 : index
    %c0_48 = arith.constant 0 : index
    %c0_49 = arith.constant 0 : index
    %71 = vector.load %arg14[%c1_47, %c0_48, %c0_49] : memref<2x64x16xf32, #tpu.memory_space<vmem>>, vector<1x64x16xf32>
    %72 = vector.shape_cast %71 : vector<1x64x16xf32> to vector<64x16xf32>
    %73 = vector.broadcast %58 : vector<64x1xf32> to vector<64x16xf32>
    %74 = arith.mulf %73, %72 : vector<64x16xf32>
    %75 = arith.truncf %61 : vector<64x16xf32> to vector<64x16xbf16>
    %76 = vector.extract_strided_slice %10 {offsets = [0, 16], sizes = [16, 16], strides = [1, 1]} : vector<16x32xbf16> to vector<16x16xbf16>
    %cst_50 = arith.constant dense<0.000000e+00> : vector<64x16xf32>
    %77 = tpu.matmul %75, %76, %cst_50 {dimension_numbers = #tpu.dot_dimension_numbers<[1], [0], [0], [1], [0, 0, 1, 1], [], []>} : vector<64x16xbf16>, vector<16x16xbf16>, vector<64x16xf32> -> vector<64x16xf32>
    %78 = arith.addf %74, %77 : vector<64x16xf32>
    %c1_51 = arith.constant 1 : index
    %c0_52 = arith.constant 0 : index
    %c0_53 = arith.constant 0 : index
    %79 = vector.load %arg14[%c1_51, %c0_52, %c0_53] : memref<2x64x16xf32, #tpu.memory_space<vmem>>, vector<1x64x16xf32>
    %80 = vector.shape_cast %79 : vector<1x64x16xf32> to vector<64x16xf32>
    %81 = vector.shape_cast %78 : vector<64x16xf32> to vector<1x64x16xf32>
    tpu.vector_store %arg14[%c1_51, %c0_52, %c0_53], %81 {strides = array<i32>} : memref<2x64x16xf32, #tpu.memory_space<vmem>>, vector<1x64x16xf32>,
    %c1_54 = arith.constant 1 : index
    %c0_55 = arith.constant 0 : index
    %c0_56 = arith.constant 0 : index
    %82 = vector.load %arg12[%c1_54, %c0_55, %c0_56] : memref<2x64x1xf32, #tpu.memory_space<vmem>>, vector<1x64x1xf32>
    %83 = vector.shape_cast %82 : vector<1x64x1xf32> to vector<64x1xf32>
    %84 = vector.shape_cast %56 : vector<64x1xf32> to vector<1x64x1xf32>
    tpu.vector_store %arg12[%c1_54, %c0_55, %c0_56], %84 {strides = array<i32>} : memref<2x64x1xf32, #tpu.memory_space<vmem>>, vector<1x64x1xf32>,
    %c0_i32_57 = arith.constant 0 : i32
    %85 = arith.cmpi eq, %arg2, %c0_i32_57 : i32
    %86 = arith.extui %85 : i1 to i32
    %c0_i32_58 = arith.constant 0 : i32
    %87 = arith.cmpi ne, %86, %c0_i32_58 : i32
    scf.if %87 {
      %c0_59 = arith.constant 0 : index
      %c0_60 = arith.constant 0 : index
      %c0_61 = arith.constant 0 : index
      %88 = vector.load %arg13[%c0_59, %c0_60, %c0_61] : memref<2x64x1xf32, #tpu.memory_space<vmem>>, vector<1x64x1xf32>
      %89 = vector.shape_cast %88 : vector<1x64x1xf32> to vector<64x1xf32>
      %90 = tpu.reciprocal %89 : vector<64x1xf32> -> vector<64x1xf32>
      %c0_62 = arith.constant 0 : index
      %c0_63 = arith.constant 0 : index
      %c0_64 = arith.constant 0 : index
      %91 = vector.load %arg14[%c0_62, %c0_63, %c0_64] : memref<2x64x16xf32, #tpu.memory_space<vmem>>, vector<1x64x16xf32>
      %92 = vector.shape_cast %91 : vector<1x64x16xf32> to vector<64x16xf32>
      %93 = vector.broadcast %90 : vector<64x1xf32> to vector<64x16xf32>
      %94 = arith.mulf %92, %93 : vector<64x16xf32>
      %95 = arith.truncf %94 : vector<64x16xf32> to vector<64x16xbf16>
      %c1_65 = arith.constant 1 : index
      %c0_66 = arith.constant 0 : index
      %c0_67 = arith.constant 0 : index
      %96 = vector.load %arg13[%c1_65, %c0_66, %c0_67] : memref<2x64x1xf32, #tpu.memory_space<vmem>>, vector<1x64x1xf32>
      %97 = vector.shape_cast %96 : vector<1x64x1xf32> to vector<64x1xf32>
      %98 = tpu.reciprocal %97 : vector<64x1xf32> -> vector<64x1xf32>
      %c1_68 = arith.constant 1 : index
      %c0_69 = arith.constant 0 : index
      %c0_70 = arith.constant 0 : index
      %99 = vector.load %arg14[%c1_68, %c0_69, %c0_70] : memref<2x64x16xf32, #tpu.memory_space<vmem>>, vector<1x64x16xf32>
      %100 = vector.shape_cast %99 : vector<1x64x16xf32> to vector<64x16xf32>
      %101 = vector.broadcast %98 : vector<64x1xf32> to vector<64x16xf32>
      %102 = arith.mulf %100, %101 : vector<64x16xf32>
      %103 = arith.truncf %102 : vector<64x16xf32> to vector<64x16xbf16>
      %104 = tpu.concatenate %95, %103 in 1 : vector<64x16xbf16>, vector<64x16xbf16> -> vector<64x32xbf16>
      %c0_71 = arith.constant 0 : index
      %c0_72 = arith.constant 0 : index
      %105 = vector.load %arg8[%c0_71, %c0_72] : memref<32x16xbf16, #tpu.memory_space<vmem>>, vector<32x16xbf16>
      %cst_73 = arith.constant dense<0.000000e+00> : vector<64x16xf32>
      %106 = tpu.matmul %104, %105, %cst_73 {dimension_numbers = #tpu.dot_dimension_numbers<[1], [0], [0], [1], [0, 0, 1, 1], [], []>} : vector<64x32xbf16>, vector<32x16xbf16>, vector<64x16xf32> -> vector<64x16xf32>
      %c0_74 = arith.constant 0 : index
      %c0_75 = arith.constant 0 : index
      %107 = vector.load %arg9[%c0_74, %c0_75] : memref<1x16xf32, #tpu.memory_space<vmem>>, vector<1x16xf32>
      %108 = vector.broadcast %107 : vector<1x16xf32> to vector<64x16xf32>
      %109 = arith.addf %106, %108 : vector<64x16xf32>
      %c0_76 = arith.constant 0 : index
      %c0_77 = arith.constant 0 : index
      %c0_78 = arith.constant 0 : index
      %110 = vector.load %arg10[%c0_76, %c0_77, %c0_78] : memref<1x64x16xf32, #tpu.memory_space<vmem>>, vector<1x64x16xf32>
      %111 = vector.shape_cast %110 : vector<1x64x16xf32> to vector<64x16xf32>
      %112 = vector.shape_cast %109 : vector<64x16xf32> to vector<1x64x16xf32>
      tpu.vector_store %arg10[%c0_76, %c0_77, %c0_78], %112 {strides = array<i32>} : memref<1x64x16xf32, #tpu.memory_space<vmem>>, vector<1x64x16xf32>,
    } else {
    }
    return
  }
  func.func @transform_0(%arg0: i32, %arg1: i32, %arg2: i32) -> (i32, i32, i32) {
    %c0_i32 = arith.constant 0 : i32
    %c0_i32_0 = arith.constant 0 : i32
    return %arg0, %arg1, %c0_i32 : i32, i32, i32
  }
  func.func @transform_1(%arg0: i32, %arg1: i32, %arg2: i32) -> (i32, i32, i32) {
    %c0_i32 = arith.constant 0 : i32
    %c0_i32_0 = arith.constant 0 : i32
    return %arg0, %arg2, %c0_i32 : i32, i32, i32
  }
  func.func @transform_2(%arg0: i32, %arg1: i32, %arg2: i32) -> (i32, i32) {
    %c0_i32 = arith.constant 0 : i32
    %c0_i32_0 = arith.constant 0 : i32
    %c0_i32_1 = arith.constant 0 : i32
    return %c0_i32, %c0_i32_0 : i32, i32
  }
  func.func @transform_3(%arg0: i32, %arg1: i32, %arg2: i32) -> (i32, i32) {
    %c0_i32 = arith.constant 0 : i32
    %c0_i32_0 = arith.constant 0 : i32
    %c0_i32_1 = arith.constant 0 : i32
    return %c0_i32, %c0_i32_0 : i32, i32
  }
  func.func @transform_4(%arg0: i32, %arg1: i32, %arg2: i32) -> (i32, i32) {
    %c0_i32 = arith.constant 0 : i32
    %c0_i32_0 = arith.constant 0 : i32
    %c0_i32_1 = arith.constant 0 : i32
    return %c0_i32, %c0_i32_0 : i32, i32
  }
  func.func @transform_5(%arg0: i32, %arg1: i32, %arg2: i32) -> (i32, i32) {
    %c0_i32 = arith.constant 0 : i32
    %c0_i32_0 = arith.constant 0 : i32
    %c0_i32_1 = arith.constant 0 : i32
    return %c0_i32, %c0_i32_0 : i32, i32
  }
  func.func @transform_6(%arg0: i32, %arg1: i32, %arg2: i32) -> (i32, i32) {
    %c0_i32 = arith.constant 0 : i32
    %c0_i32_0 = arith.constant 0 : i32
    %c0_i32_1 = arith.constant 0 : i32
    return %c0_i32, %c0_i32_0 : i32, i32
  }
  func.func @transform_7(%arg0: i32, %arg1: i32, %arg2: i32) -> (i32, i32, i32) {
    %c0_i32 = arith.constant 0 : i32
    %c0_i32_0 = arith.constant 0 : i32
    return %arg0, %arg1, %c0_i32 : i32, i32, i32
  }
}

</mosaic_0001>

<llo_original>
// kernel: attention_forward.2
$region0: #{attention_forward.2}
  #allocation0 [shape = 'u32[]', space=smem, size = 0x4, offset = 0x4, fixed_abs, tag = 'smem constant byte address 0x4 - core index']
  #allocation1 [shape = 'u32[144,128]{1,0:T(1,128)}', space=vmem, size = 0x12000, scoped, tag = 'internal scratch']
  #allocation2 [shape = 'f32[10,10,16]{2,1,0:T(8,128)}', space=vmem, size = 0x14000, scoped, tag = 'scratch operand']
  %s0 = inlined_call_operand.vmem [shape: f32[2,8,8,16], index: 0, kind: input, shape index: {}]
  %s1 = inlined_call_operand.vmem [shape: f32[1,16], index: 1, kind: input, shape index: {}]
  %s2 = inlined_call_operand.vmem [shape: f32[1,16], index: 2, kind: input, shape index: {}]
  %s3 = inlined_call_operand.vmem [shape: f32[9,16], index: 3, kind: input, shape index: {}]
  %s4 = inlined_call_operand.vmem [shape: f32[9,16], index: 4, kind: input, shape index: {}]
  %s5 = inlined_call_operand.vmem [shape: bf16[2,8,8,16], index: 5, kind: output, shape index: {0}]
  %s6 = inlined_call_operand.vmem [shape: bf16[2,4,4,16], index: 6, kind: output, shape index: {1}]
  %7 = xla_tuple %s5, %s6
  %s8 = sld [smem:[#allocation0]]
  $region61: #{attention_forward.2} parent=0
    _
  %s10 = ssub.s32 1, %s8
  %s11 = scalar_select 0, %s10, %s8
  loop: start=0, step=1, limit=4
  $region2: #{attention_forward.2} parent=0 // loop_pre_header
    _
  $region3: #{attention_forward.2} parent=0 // loop_header
    %s13 = sphi 0, %s17
    %p14 = scmp.ge.s32.totalorder %s13, 4
    %s23 = sphi 0, %s25
    %s26 = sphi 0, %s23
    %s27 = sphi 0, %s26
    %s43 = sphi 0, %s27
    %s47 = sphi 0, %s47
    %s49 = sphi 0, %s47
    %s50 = sphi 0, %s49
    %s64 = sphi 0, %s50
    %s68 = sphi 0, %s68
    %s70 = sphi 0, %s68
    %s71 = sphi 0, %s70
    %s85 = sphi 0, %s71
    %s89 = sphi 0, %s89
    %s91 = sphi 0, %s89
    %s92 = sphi 0, %s91
    %s106 = sphi 0, %s92
    %s110 = sphi 0, %s110
    %s112 = sphi 0, %s110
    %s113 = sphi 0, %s112
    %s127 = sphi 0, %s113
    %s133 = sphi 0, %s135
    %s136 = sphi 0, %s133
    %s137 = sphi 0, %s136
    %s153 = sphi 0, %s137
    %s159 = sphi 0, %s161
    %s162 = sphi 0, %s159
    %s163 = sphi 0, %s162
    %s179 = sphi 0, %s163
  $region4: #{attention_forward.2} parent=0 // loop_header_branch
    %16 = sbr.rel (%p14) target = $region8
  $region5: #{attention_forward.2} parent=0 // loop_body
    %s18 = ssub.s32 %s13, 1
    %s19 = ssub.s32 %s13, 2
    %s20 = sadd.s32 %s13, 1
    %s21 = ssub.s32 %s13, %s20
    %p22 = scmp.eq.s32.totalorder %s21, 0
    %s24 = sadd.s32 %s23, 1
    %s25 = scalar_select %p22, %s23, %s24
    %p28 = pneg %p22
    %p29 = scmp.eq.s32.totalorder %s13, 1
    %p30 = por %p28, %p29
    %p31 = scmp.ne.s32.totalorder %s23, %s26
    %p32 = scmp.eq.s32.totalorder %s13, 0
    %p33 = por %p31, %p32
    %p34 = scmp.ne.s32.totalorder %s23, %s26
    %p35 = scmp.eq.s32.totalorder %s18, 1
    %p36 = por %p34, %p35
    %p37 = scmp.ne.s32.totalorder %s26, %s27
    %p38 = scmp.eq.s32.totalorder %s18, 0
    %p39 = por %p37, %p38
    %p40 = scmp.ne.s32.totalorder %s26, %s27
    %p41 = scmp.eq.s32.totalorder %s19, 1
    %p42 = por %p40, %p41
    %p44 = scmp.ne.s32.totalorder %s27, %s43
    %p45 = scmp.eq.s32.totalorder %s19, 0
    %p46 = por %p44, %p45
    %s48 = sadd.s32 %s47, 1
    %p51 = scmp.eq.s32.totalorder %s13, 1
    %p52 = scmp.ne.s32.totalorder %s47, %s49
    %p53 = scmp.eq.s32.totalorder %s13, 0
    %p54 = por %p52, %p53
    %p55 = scmp.ne.s32.totalorder %s47, %s49
    %p56 = scmp.eq.s32.totalorder %s18, 1
    %p57 = por %p55, %p56
    %p58 = scmp.ne.s32.totalorder %s49, %s50
    %p59 = scmp.eq.s32.totalorder %s18, 0
    %p60 = por %p58, %p59
    %p61 = scmp.ne.s32.totalorder %s49, %s50
    %p62 = scmp.eq.s32.totalorder %s19, 1
    %p63 = por %p61, %p62
    %p65 = scmp.ne.s32.totalorder %s50, %s64
    %p66 = scmp.eq.s32.totalorder %s19, 0
    %p67 = por %p65, %p66
    %s69 = sadd.s32 %s68, 1
    %p72 = scmp.eq.s32.totalorder %s13, 1
    %p73 = scmp.ne.s32.totalorder %s68, %s70
    %p74 = scmp.eq.s32.totalorder %s13, 0
    %p75 = por %p73, %p74
    %p76 = scmp.ne.s32.totalorder %s68, %s70
    %p77 = scmp.eq.s32.totalorder %s18, 1
    %p78 = por %p76, %p77
    %p79 = scmp.ne.s32.totalorder %s70, %s71
    %p80 = scmp.eq.s32.totalorder %s18, 0
    %p81 = por %p79, %p80
    %p82 = scmp.ne.s32.totalorder %s70, %s71
    %p83 = scmp.eq.s32.totalorder %s19, 1
    %p84 = por %p82, %p83
    %p86 = scmp.ne.s32.totalorder %s71, %s85
    %p87 = scmp.eq.s32.totalorder %s19, 0
    %p88 = por %p86, %p87
    %s90 = sadd.s32 %s89, 1
    %p93 = scmp.eq.s32.totalorder %s13, 1
    %p94 = scmp.ne.s32.totalorder %s89, %s91
    %p95 = scmp.eq.s32.totalorder %s13, 0
    %p96 = por %p94, %p95
    %p97 = scmp.ne.s32.totalorder %s89, %s91
    %p98 = scmp.eq.s32.totalorder %s18, 1
    %p99 = por %p97, %p98
    %p100 = scmp.ne.s32.totalorder %s91, %s92
    %p101 = scmp.eq.s32.totalorder %s18, 0
    %p102 = por %p100, %p101
    %p103 = scmp.ne.s32.totalorder %s91, %s92
    %p104 = scmp.eq.s32.totalorder %s19, 1
    %p105 = por %p103, %p104
    %p107 = scmp.ne.s32.totalorder %s92, %s106
    %p108 = scmp.eq.s32.totalorder %s19, 0
    %p109 = por %p107, %p108
    %s111 = sadd.s32 %s110, 1
    %p114 = scmp.eq.s32.totalorder %s13, 1
    %p115 = scmp.ne.s32.totalorder %s110, %s112
    %p116 = scmp.eq.s32.totalorder %s13, 0
    %p117 = por %p115, %p116
    %p118 = scmp.ne.s32.totalorder %s110, %s112
    %p119 = scmp.eq.s32.totalorder %s18, 1
    %p120 = por %p118, %p119
    %p121 = scmp.ne.s32.totalorder %s112, %s113
    %p122 = scmp.eq.s32.totalorder %s18, 0
    %p123 = por %p121, %p122
    %p124 = scmp.ne.s32.totalorder %s112, %s113
    %p125 = scmp.eq.s32.totalorder %s19, 1
    %p126 = por %p124, %p125
    %p128 = scmp.ne.s32.totalorder %s113, %s127
    %p129 = scmp.eq.s32.totalorder %s19, 0
    %p130 = por %p128, %p129
    %s131 = ssub.s32 %s13, %s20
    %p132 = scmp.eq.s32.totalorder %s131, 0
    %s134 = sadd.s32 %s133, 1
    %s135 = scalar_select %p132, %s133, %s134
    %p138 = pneg %p132
    %p139 = scmp.eq.s32.totalorder %s13, 1
    %p140 = por %p138, %p139
    %p141 = scmp.ne.s32.totalorder %s133, %s136
    %p142 = scmp.eq.s32.totalorder %s13, 0
    %p143 = por %p141, %p142
    %p144 = scmp.ne.s32.totalorder %s133, %s136
    %p145 = scmp.eq.s32.totalorder %s18, 1
    %p146 = por %p144, %p145
    %p147 = scmp.ne.s32.totalorder %s136, %s137
    %p148 = scmp.eq.s32.totalorder %s18, 0
    %p149 = por %p147, %p148
    %p150 = scmp.ne.s32.totalorder %s136, %s137
    %p151 = scmp.eq.s32.totalorder %s19, 1
    %p152 = por %p150, %p151
    %p154 = scmp.ne.s32.totalorder %s137, %s153
    %p155 = scmp.eq.s32.totalorder %s19, 0
    %p156 = por %p154, %p155
    %s157 = ssub.s32 %s13, %s20
    %p158 = scmp.eq.s32.totalorder %s157, 0
    %s160 = sadd.s32 %s159, 1
    %s161 = scalar_select %p158, %s159, %s160
    %p164 = pneg %p158
    %p165 = scmp.eq.s32.totalorder %s13, 1
    %p166 = por %p164, %p165
    %p167 = scmp.ne.s32.totalorder %s159, %s162
    %p168 = scmp.eq.s32.totalorder %s13, 0
    %p169 = por %p167, %p168
    %p170 = scmp.ne.s32.totalorder %s159, %s162
    %p171 = scmp.eq.s32.totalorder %s18, 1
    %p172 = por %p170, %p171
    %p173 = scmp.ne.s32.totalorder %s162, %s163
    %p174 = scmp.eq.s32.totalorder %s18, 0
    %p175 = por %p173, %p174
    %p176 = scmp.ne.s32.totalorder %s162, %s163
    %p177 = scmp.eq.s32.totalorder %s19, 1
    %p178 = por %p176, %p177
    %p180 = scmp.ne.s32.totalorder %s163, %s179
    %p181 = scmp.eq.s32.totalorder %s19, 0
    %p182 = por %p180, %p181
    %p183 = scmp.le.s32.totalorder 1, %s13
    %p184 = scmp.lt.s32.totalorder %s13, 3
    %p185 = pnand %p183, %p184
    %p186 = pneg %p185
    // Predicated region
    $region9: #{attention_forward.2} parent=5 // pred_check
      _
    $region10: #{attention_forward.2} parent=5 // pred_check_branch
      %188 = sbr.rel (%p185) target = $region12
    $region11: #{attention_forward.2} parent=5 // pred_region
      %s189 = ssub.s32 %s13, 1
      // Predicated region
      $region13: #{attention_forward.2} parent=11 // pred_check
        %p190 = pneg %p60
      $region14: #{attention_forward.2} parent=11 // pred_check_branch
        %192 = sbr.rel (%p190) target = $region16
      $region15: #{attention_forward.2} parent=11 // pred_region
        _
      $region16: #{attention_forward.2} parent=11 // pred_fallthru
        _
      // Predicated region
      $region17: #{attention_forward.2} parent=11 // pred_check
        %p193 = pneg %p81
      $region18: #{attention_forward.2} parent=11 // pred_check_branch
        %195 = sbr.rel (%p193) target = $region20
      $region19: #{attention_forward.2} parent=11 // pred_region
        _
      $region20: #{attention_forward.2} parent=11 // pred_fallthru
        _
      // Predicated region
      $region21: #{attention_forward.2} parent=11 // pred_check
        %p196 = pneg %p102
      $region22: #{attention_forward.2} parent=11 // pred_check_branch
        %198 = sbr.rel (%p196) target = $region24
      $region23: #{attention_forward.2} parent=11 // pred_region
        _
      $region24: #{attention_forward.2} parent=11 // pred_fallthru
        _
      // Predicated region
      $region25: #{attention_forward.2} parent=11 // pred_check
        %p199 = pneg %p123
      $region26: #{attention_forward.2} parent=11 // pred_check_branch
        %201 = sbr.rel (%p199) target = $region28
      $region27: #{attention_forward.2} parent=11 // pred_region
        _
      $region28: #{attention_forward.2} parent=11 // pred_fallthru
        _
    $region12: #{attention_forward.2} parent=5 // pred_fallthru
      _
    %p202 = scmp.lt.s32.totalorder %s13, 2
    // Predicated region
    $region29: #{attention_forward.2} parent=5 // pred_check
      %p203 = pneg %p202
    $region30: #{attention_forward.2} parent=5 // pred_check_branch
      %205 = sbr.rel (%p203) target = $region32
    $region31: #{attention_forward.2} parent=5 // pred_region
      // Predicated region
      $region33: #{attention_forward.2} parent=31 // pred_check
        %p206 = pneg %p33
      $region34: #{attention_forward.2} parent=31 // pred_check_branch
        %208 = sbr.rel (%p206) target = $region36
      $region35: #{attention_forward.2} parent=31 // pred_region
        %p209 = scmp.lt.s32.totalorder %s13, 1
        %s210 = scalar_select %p209, %s13, 1
        %s211 = smul.addr %s210, 8
        %s212 = smul.addr %s211, 8
        %s213 = scalar_lea.vmem %s0, %s212
      $region36: #{attention_forward.2} parent=31 // pred_fallthru
        _
    $region32: #{attention_forward.2} parent=5 // pred_fallthru
      _
    %p214 = scmp.le.s32.totalorder 1, %s13
    %p215 = scmp.lt.s32.totalorder %s13, 3
    %p216 = pnand %p214, %p215
    %p217 = pneg %p216
    // Predicated region
    $region37: #{attention_forward.2} parent=5 // pred_check
      _
    $region38: #{attention_forward.2} parent=5 // pred_check_branch
      %219 = sbr.rel (%p216) target = $region40
    $region39: #{attention_forward.2} parent=5 // pred_region
      %s220 = ssub.s32 %s13, 1
      %p221 = scmp.lt.s32.totalorder %s18, 1
      %s222 = scalar_select %p221, %s18, 1
      %s223 = smul.addr %s222, 8
      %s224 = smul.addr %s223, 8
      %s225 = scalar_lea.vmem %s0, %s224
      %p226 = pneg %p39
      %p227 = pneg %p36
      %p228 = pneg %p60
      %p229 = pneg %p57
      %p230 = pneg %p81
      %p231 = pneg %p78
      %p232 = pneg %p102
      %p233 = pneg %p99
      %p234 = pneg %p123
      %p235 = pneg %p120
      %p236 = pneg %p149
      %p237 = pneg %p146
      %p238 = scmp.lt.s32.totalorder %s18, 1
      %s239 = scalar_select %p238, %s18, 1
      %s240 = smul.addr %s239, 8
      %s241 = smul.addr %s240, 4
      %s242 = scalar_lea.vmem %s5, %s241
      %p243 = pneg %p175
      %p244 = pneg %p172
      %p245 = scmp.lt.s32.totalorder %s18, 1
      %s246 = scalar_select %p245, %s18, 1
      %s247 = smul.addr %s246, 4
      %s248 = smul.addr %s247, 2
      %s249 = scalar_lea.vmem %s6, %s248
      %p250 = scmp.lt.s32.totalorder %s18, 1
      %s251 = scalar_select %p250, %s18, 1
      %s252 = smul.addr %s251, 8
      %s253 = smul.addr %s252, 8
      %s254 = scalar_lea.vmem %s0, %s253
      %p255 = scmp.lt.s32.totalorder %s18, 1
      %s256 = scalar_select %p255, %s18, 1
      %s257 = smul.addr %s256, 8
      %s258 = smul.addr %s257, 4
      %s259 = scalar_lea.vmem %s5, %s258
      %p260 = scmp.lt.s32.totalorder %s18, 1
      %s261 = scalar_select %p260, %s18, 1
      %s262 = smul.addr %s261, 4
      %s263 = smul.addr %s262, 2
      %s264 = scalar_lea.vmem %s6, %s263
      %v265 = vld [vmem:[%s254] sm:$0xff]
      %v266 = vld [vmem:[%s254 + $0x8] sm:$0xff]
      %v267 = vld [vmem:[%s254 + $0x10] sm:$0xff]
      %v268 = vld [vmem:[%s254 + $0x18] sm:$0xff]
      %v269 = vld [vmem:[%s254 + $0x20] sm:$0xff]
      %v270 = vld [vmem:[%s254 + $0x28] sm:$0xff]
      %v271 = vld [vmem:[%s254 + $0x30] sm:$0xff]
      %v272 = vld [vmem:[%s254 + $0x38] sm:$0xff]
      %vm273 = vcmask 130048
      %v274 = vsel %vm273, %v265, 0.0
      %275 = vadd.xlane.f32.xlu0 %v274
      %v276 = vpop.xlane.xlu0 %275
      %v277 = vsel %vm273, %v266, 0.0
      %278 = vadd.xlane.f32.xlu0 %v277
      %v279 = vpop.xlane.xlu0 %278
      %v280 = vsel %vm273, %v267, 0.0
      %281 = vadd.xlane.f32.xlu0 %v280
      %v282 = vpop.xlane.xlu0 %281
      %v283 = vsel %vm273, %v268, 0.0
      %284 = vadd.xlane.f32.xlu0 %v283
      %v285 = vpop.xlane.xlu0 %284
      %v286 = vsel %vm273, %v269, 0.0
      %287 = vadd.xlane.f32.xlu0 %v286
      %v288 = vpop.xlane.xlu0 %287
      %v289 = vsel %vm273, %v270, 0.0
      %290 = vadd.xlane.f32.xlu0 %v289
      %v291 = vpop.xlane.xlu0 %290
      %v292 = vsel %vm273, %v271, 0.0
      %293 = vadd.xlane.f32.xlu0 %v292
      %v294 = vpop.xlane.xlu0 %293
      %v295 = vsel %vm273, %v272, 0.0
      %296 = vadd.xlane.f32.xlu0 %v295
      %v297 = vpop.xlane.xlu0 %296
      %v298 = vrcp.pop 16.0
      %v299 = vmul.f32 %v276, %v298
      %v300 = vmul.f32 %v279, %v298
      %v301 = vmul.f32 %v282, %v298
      %v302 = vmul.f32 %v285, %v298
      %v303 = vmul.f32 %v288, %v298
      %v304 = vmul.f32 %v291, %v298
      %v305 = vmul.f32 %v294, %v298
      %v306 = vmul.f32 %v297, %v298
      %v307 = vmul.f32 %v265, %v265
      %v308 = vmul.f32 %v266, %v266
      %v309 = vmul.f32 %v267, %v267
      %v310 = vmul.f32 %v268, %v268
      %v311 = vmul.f32 %v269, %v269
      %v312 = vmul.f32 %v270, %v270
      %v313 = vmul.f32 %v271, %v271
      %v314 = vmul.f32 %v272, %v272
      %v315 = vsel %vm273, %v307, 0.0
      %316 = vadd.xlane.f32.xlu0 %v315
      %v317 = vpop.xlane.xlu0 %316
      %v318 = vsel %vm273, %v308, 0.0
      %319 = vadd.xlane.f32.xlu0 %v318
      %v320 = vpop.xlane.xlu0 %319
      %v321 = vsel %vm273, %v309, 0.0
      %322 = vadd.xlane.f32.xlu0 %v321
      %v323 = vpop.xlane.xlu0 %322
      %v324 = vsel %vm273, %v310, 0.0
      %325 = vadd.xlane.f32.xlu0 %v324
      %v326 = vpop.xlane.xlu0 %325
      %v327 = vsel %vm273, %v311, 0.0
      %328 = vadd.xlane.f32.xlu0 %v327
      %v329 = vpop.xlane.xlu0 %328
      %v330 = vsel %vm273, %v312, 0.0
      %331 = vadd.xlane.f32.xlu0 %v330
      %v332 = vpop.xlane.xlu0 %331
      %v333 = vsel %vm273, %v313, 0.0
      %334 = vadd.xlane.f32.xlu0 %v333
      %v335 = vpop.xlane.xlu0 %334
      %v336 = vsel %vm273, %v314, 0.0
      %337 = vadd.xlane.f32.xlu0 %v336
      %v338 = vpop.xlane.xlu0 %337
      %v339 = vmul.f32 %v317, %v298
      %v340 = vmul.f32 %v320, %v298
      %v341 = vmul.f32 %v323, %v298
      %v342 = vmul.f32 %v326, %v298
      %v343 = vmul.f32 %v329, %v298
      %v344 = vmul.f32 %v332, %v298
      %v345 = vmul.f32 %v335, %v298
      %v346 = vmul.f32 %v338, %v298
      %v347 = vsub.f32 %v265, %v299
      %v348 = vsub.f32 %v266, %v300
      %v349 = vsub.f32 %v267, %v301
      %v350 = vsub.f32 %v268, %v302
      %v351 = vsub.f32 %v269, %v303
      %v352 = vsub.f32 %v270, %v304
      %v353 = vsub.f32 %v271, %v305
      %v354 = vsub.f32 %v272, %v306
      %v355 = vmul.f32 %v299, %v299
      %v356 = vmul.f32 %v300, %v300
      %v357 = vmul.f32 %v301, %v301
      %v358 = vmul.f32 %v302, %v302
      %v359 = vmul.f32 %v303, %v303
      %v360 = vmul.f32 %v304, %v304
      %v361 = vmul.f32 %v305, %v305
      %v362 = vmul.f32 %v306, %v306
      %v363 = vsub.f32 %v339, %v355
      %v364 = vsub.f32 %v340, %v356
      %v365 = vsub.f32 %v341, %v357
      %v366 = vsub.f32 %v342, %v358
      %v367 = vsub.f32 %v343, %v359
      %v368 = vsub.f32 %v344, %v360
      %v369 = vsub.f32 %v345, %v361
      %v370 = vsub.f32 %v346, %v362
      %v371 = vadd.f32 %v363, 1e-05
      %v372 = vadd.f32 %v364, 1e-05
      %v373 = vadd.f32 %v365, 1e-05
      %v374 = vadd.f32 %v366, 1e-05
      %v375 = vadd.f32 %v367, 1e-05
      %v376 = vadd.f32 %v368, 1e-05
      %v377 = vadd.f32 %v369, 1e-05
      %v378 = vadd.f32 %v370, 1e-05
      %v379 = vrsqrt.pop %v371
      %v380 = vrsqrt.pop %v372
      %v381 = vrsqrt.pop %v373
      %v382 = vrsqrt.pop %v374
      %v383 = vrsqrt.pop %v375
      %v384 = vrsqrt.pop %v376
      %v385 = vrsqrt.pop %v377
      %v386 = vrsqrt.pop %v378
      %v387 = vmul.f32 %v347, %v379
      %v388 = vmul.f32 %v348, %v380
      %v389 = vmul.f32 %v349, %v381
      %v390 = vmul.f32 %v350, %v382
      %v391 = vmul.f32 %v351, %v383
      %v392 = vmul.f32 %v352, %v384
      %v393 = vmul.f32 %v353, %v385
      %v394 = vmul.f32 %v354, %v386
      %v395 = vld [vmem:[%s1] sm:$0x1]
      %v397 = vlaneseq
      %v398 = vshrl.u32 %v397, 7
      %v399 = vsub.s32 0, %v398
      %v400 = vrot.slane %v395, %v399
      %v402 = vmul.f32 %v387, %v400
      %v403 = vmul.f32 %v388, %v400
      %v404 = vmul.f32 %v389, %v400
      %v405 = vmul.f32 %v390, %v400
      %v406 = vmul.f32 %v391, %v400
      %v407 = vmul.f32 %v392, %v400
      %v408 = vmul.f32 %v393, %v400
      %v409 = vmul.f32 %v394, %v400
      %v410 = vld [vmem:[%s2] sm:$0x1]
      %v412 = vlaneseq
      %v413 = vshrl.u32 %v412, 7
      %v414 = vsub.s32 0, %v413
      %v415 = vrot.slane %v410, %v414
      %v417 = vadd.f32 %v402, %v415
      %v418 = vadd.f32 %v403, %v415
      %v419 = vadd.f32 %v404, %v415
      %v420 = vadd.f32 %v405, %v415
      %v421 = vadd.f32 %v406, %v415
      %v422 = vadd.f32 %v407, %v415
      %v423 = vadd.f32 %v408, %v415
      %v424 = vadd.f32 %v409, %v415
      %425 = vst.msk [vmem:[#allocation2] sm:$0xff] %vm273, 0.0
      %vm426 = vcmask 123904
      %427 = vst.msk [vmem:[#allocation2 + $0x8] sm:$0x3] %vm426, 0.0
      %s428 = scalar_lea.vmem [#allocation2], 144
      %429 = vst.msk [vmem:[%s428] sm:$0xff] %vm273, 0.0
      %430 = vst.msk [vmem:[%s428 + $0x8] sm:$0x3] %vm426, 0.0
      %vm431 = vcmask 122880
      %432 = vst.msk [vmem:[#allocation2] sm:$0x1] %vm431, 0.0
      %433 = vst.msk [vmem:[#allocation2 + $0x10] sm:$0x1] %vm431, 0.0
      %434 = vst.msk [vmem:[#allocation2 + $0x20] sm:$0x1] %vm431, 0.0
      %435 = vst.msk [vmem:[#allocation2 + $0x30] sm:$0x1] %vm431, 0.0
      %436 = vst.msk [vmem:[#allocation2 + $0x40] sm:$0x1] %vm431, 0.0
      %437 = vst.msk [vmem:[#allocation2 + $0x50] sm:$0x1] %vm431, 0.0
      %438 = vst.msk [vmem:[#allocation2 + $0x60] sm:$0x1] %vm431, 0.0
      %439 = vst.msk [vmem:[#allocation2 + $0x70] sm:$0x1] %vm431, 0.0
      %440 = vst.msk [vmem:[#allocation2 + $0x80] sm:$0x1] %vm431, 0.0
      %441 = vst.msk [vmem:[#allocation2 + $0x90] sm:$0x1] %vm431, 0.0
      %442 = vst.msk [vmem:[#allocation2 + $0x9] sm:$0x1] %vm431, 0.0
      %443 = vst.msk [vmem:[#allocation2 + $0x19] sm:$0x1] %vm431, 0.0
      %444 = vst.msk [vmem:[#allocation2 + $0x29] sm:$0x1] %vm431, 0.0
      %445 = vst.msk [vmem:[#allocation2 + $0x39] sm:$0x1] %vm431, 0.0
      %446 = vst.msk [vmem:[#allocation2 + $0x49] sm:$0x1] %vm431, 0.0
      %447 = vst.msk [vmem:[#allocation2 + $0x59] sm:$0x1] %vm431, 0.0
      %448 = vst.msk [vmem:[#allocation2 + $0x69] sm:$0x1] %vm431, 0.0
      %449 = vst.msk [vmem:[#allocation2 + $0x79] sm:$0x1] %vm431, 0.0
      %450 = vst.msk [vmem:[#allocation2 + $0x89] sm:$0x1] %vm431, 0.0
      %451 = vst.msk [vmem:[#allocation2 + $0x99] sm:$0x1] %vm431, 0.0
      %s452 = scalar_lea.vmem [#allocation2], 16
      %453 = vst.msk [vmem:[%s452 + $0x1] sm:$0xff] %vm273, %v417
      %454 = vst.msk [vmem:[%s452 + $0x11] sm:$0xff] %vm273, %v418
      %455 = vst.msk [vmem:[%s452 + $0x21] sm:$0xff] %vm273, %v419
      %456 = vst.msk [vmem:[%s452 + $0x31] sm:$0xff] %vm273, %v420
      %457 = vst.msk [vmem:[%s452 + $0x41] sm:$0xff] %vm273, %v421
      %458 = vst.msk [vmem:[%s452 + $0x51] sm:$0xff] %vm273, %v422
      %459 = vst.msk [vmem:[%s452 + $0x61] sm:$0xff] %vm273, %v423
      %460 = vst.msk [vmem:[%s452 + $0x71] sm:$0xff] %vm273, %v424
      %v461 = vld [vmem:[%s3] sm:$0xff]
      %v462 = vld [vmem:[%s3 + $0x8] sm:$0x1]
      %v463 = vld [vmem:[%s4] sm:$0xff]
      %v464 = vld [vmem:[%s4 + $0x8] sm:$0x1]
      %v465 = vld [vmem:[#allocation2] sm:$0xff]
      %v466 = vld [vmem:[#allocation2 + $0x10] sm:$0xff]
      %v467 = vld [vmem:[#allocation2 + $0x20] sm:$0xff]
      %v468 = vld [vmem:[#allocation2 + $0x30] sm:$0xff]
      %v469 = vld [vmem:[#allocation2 + $0x40] sm:$0xff]
      %v470 = vld [vmem:[#allocation2 + $0x50] sm:$0xff]
      %v471 = vld [vmem:[#allocation2 + $0x60] sm:$0xff]
      %v472 = vld [vmem:[#allocation2 + $0x70] sm:$0xff]
      %v473 = vlaneseq
      %v474 = vshrl.u32 %v473, 7
      %v475 = vsub.s32 0, %v474
      %v476 = vrot.slane %v461, %v475
      %v477 = vmul.f32 %v465, %v476
      %v478 = vmul.f32 %v466, %v476
      %v479 = vmul.f32 %v467, %v476
      %v480 = vmul.f32 %v468, %v476
      %v481 = vmul.f32 %v469, %v476
      %v482 = vmul.f32 %v470, %v476
      %v483 = vmul.f32 %v471, %v476
      %v484 = vmul.f32 %v472, %v476
      %v485 = vadd.f32 %v477, 0.0
      %v486 = vadd.f32 %v478, 0.0
      %v487 = vadd.f32 %v479, 0.0
      %v488 = vadd.f32 %v480, 0.0
      %v489 = vadd.f32 %v481, 0.0
      %v490 = vadd.f32 %v482, 0.0
      %v491 = vadd.f32 %v483, 0.0
      %v492 = vadd.f32 %v484, 0.0
      %v493 = vld [vmem:[#allocation2] ss:$2 sm:$0xf]
      %s494 = scalar_lea.vmem [#allocation2], 32
      %v495 = vld [vmem:[%s494] ss:$2 sm:$0xf]
      %s496 = scalar_lea.vmem [#allocation2], 64
      %v497 = vld [vmem:[%s496] ss:$2 sm:$0xf]
      %s498 = scalar_lea.vmem [#allocation2], 96
      %v499 = vld [vmem:[%s498] ss:$2 sm:$0xf]
      %v500 = vlaneseq
      %v501 = vshrl.u32 %v500, 7
      %v502 = vsub.s32 0, %v501
      %v503 = vrot.slane %v463, %v502
      %v504 = vmul.f32 %v493, %v503
      %v505 = vmul.f32 %v495, %v503
      %v506 = vmul.f32 %v497, %v503
      %v507 = vmul.f32 %v499, %v503
      %v508 = vadd.f32 %v504, 0.0
      %v509 = vadd.f32 %v505, 0.0
      %v510 = vadd.f32 %v506, 0.0
      %v511 = vadd.f32 %v507, 0.0
      %v512 = vld [vmem:[#allocation2 + $0x1] sm:$0xff]
      %v513 = vld [vmem:[#allocation2 + $0x11] sm:$0xff]
      %v514 = vld [vmem:[#allocation2 + $0x21] sm:$0xff]
      %v515 = vld [vmem:[#allocation2 + $0x31] sm:$0xff]
      %v516 = vld [vmem:[#allocation2 + $0x41] sm:$0xff]
      %v517 = vld [vmem:[#allocation2 + $0x51] sm:$0xff]
      %v518 = vld [vmem:[#allocation2 + $0x61] sm:$0xff]
      %v519 = vld [vmem:[#allocation2 + $0x71] sm:$0xff]
      %v520 = vlaneseq
      %v521 = vshrl.u32 %v520, 7
      %v522 = vsub.s32 1, %v521
      %v523 = vrot.slane %v461, %v522
      %v524 = vmul.f32 %v512, %v523
      %v525 = vmul.f32 %v513, %v523
      %v526 = vmul.f32 %v514, %v523
      %v527 = vmul.f32 %v515, %v523
      %v528 = vmul.f32 %v516, %v523
      %v529 = vmul.f32 %v517, %v523
      %v530 = vmul.f32 %v518, %v523
      %v531 = vmul.f32 %v519, %v523
      %v532 = vadd.f32 %v485, %v524
      %v533 = vadd.f32 %v486, %v525
      %v534 = vadd.f32 %v487, %v526
      %v535 = vadd.f32 %v488, %v527
      %v536 = vadd.f32 %v489, %v528
      %v537 = vadd.f32 %v490, %v529
      %v538 = vadd.f32 %v491, %v530
      %v539 = vadd.f32 %v492, %v531
      %s540 = scalar_lea.vmem [#allocation2], 1
      %v541 = vld [vmem:[%s540] ss:$2 sm:$0xf]
      %s542 = scalar_lea.vmem [#allocation2], 33
      %v543 = vld [vmem:[%s542] ss:$2 sm:$0xf]
      %s544 = scalar_lea.vmem [#allocation2], 65
      %v545 = vld [vmem:[%s544] ss:$2 sm:$0xf]
      %s546 = scalar_lea.vmem [#allocation2], 97
      %v547 = vld [vmem:[%s546] ss:$2 sm:$0xf]
      %v548 = vlaneseq
      %v549 = vshrl.u32 %v548, 7
      %v550 = vsub.s32 1, %v549
      %v551 = vrot.slane %v463, %v550
      %v552 = vmul.f32 %v541, %v551
      %v553 = vmul.f32 %v543, %v551
      %v554 = vmul.f32 %v545, %v551
      %v555 = vmul.f32 %v547, %v551
      %v556 = vadd.f32 %v508, %v552
      %v557 = vadd.f32 %v509, %v553
      %v558 = vadd.f32 %v510, %v554
      %v559 = vadd.f32 %v511, %v555
      %v560 = vld [vmem:[#allocation2 + $0x2] sm:$0xff]
      %v561 = vld [vmem:[#allocation2 + $0x12] sm:$0xff]
      %v562 = vld [vmem:[#allocation2 + $0x22] sm:$0xff]
      %v563 = vld [vmem:[#allocation2 + $0x32] sm:$0xff]
      %v564 = vld [vmem:[#allocation2 + $0x42] sm:$0xff]
      %v565 = vld [vmem:[#allocation2 + $0x52] sm:$0xff]
      %v566 = vld [vmem:[#allocation2 + $0x62] sm:$0xff]
      %v567 = vld [vmem:[#allocation2 + $0x72] sm:$0xff]
      %v568 = vlaneseq
      %v569 = vshrl.u32 %v568, 7
      %v570 = vsub.s32 2, %v569
      %v571 = vrot.slane %v461, %v570
      %v572 = vmul.f32 %v560, %v571
      %v573 = vmul.f32 %v561, %v571
      %v574 = vmul.f32 %v562, %v571
      %v575 = vmul.f32 %v563, %v571
      %v576 = vmul.f32 %v564, %v571
      %v577 = vmul.f32 %v565, %v571
      %v578 = vmul.f32 %v566, %v571
      %v579 = vmul.f32 %v567, %v571
      %v580 = vadd.f32 %v532, %v572
      %v581 = vadd.f32 %v533, %v573
      %v582 = vadd.f32 %v534, %v574
      %v583 = vadd.f32 %v535, %v575
      %v584 = vadd.f32 %v536, %v576
      %v585 = vadd.f32 %v537, %v577
      %v586 = vadd.f32 %v538, %v578
      %v587 = vadd.f32 %v539, %v579
      %s588 = scalar_lea.vmem [#allocation2], 2
      %v589 = vld [vmem:[%s588] ss:$2 sm:$0xf]
      %s590 = scalar_lea.vmem [#allocation2], 34
      %v591 = vld [vmem:[%s590] ss:$2 sm:$0xf]
      %s592 = scalar_lea.vmem [#allocation2], 66
      %v593 = vld [vmem:[%s592] ss:$2 sm:$0xf]
      %s594 = scalar_lea.vmem [#allocation2], 98
      %v595 = vld [vmem:[%s594] ss:$2 sm:$0xf]
      %v596 = vlaneseq
      %v597 = vshrl.u32 %v596, 7
      %v598 = vsub.s32 2, %v597
      %v599 = vrot.slane %v463, %v598
      %v600 = vmul.f32 %v589, %v599
      %v601 = vmul.f32 %v591, %v599
      %v602 = vmul.f32 %v593, %v599
      %v603 = vmul.f32 %v595, %v599
      %v604 = vadd.f32 %v556, %v600
      %v605 = vadd.f32 %v557, %v601
      %v606 = vadd.f32 %v558, %v602
      %v607 = vadd.f32 %v559, %v603
      %v608 = vld [vmem:[%s452] sm:$0xff]
      %v609 = vld [vmem:[%s452 + $0x10] sm:$0xff]
      %v610 = vld [vmem:[%s452 + $0x20] sm:$0xff]
      %v611 = vld [vmem:[%s452 + $0x30] sm:$0xff]
      %v612 = vld [vmem:[%s452 + $0x40] sm:$0xff]
      %v613 = vld [vmem:[%s452 + $0x50] sm:$0xff]
      %v614 = vld [vmem:[%s452 + $0x60] sm:$0xff]
      %v615 = vld [vmem:[%s452 + $0x70] sm:$0xff]
      %v616 = vlaneseq
      %v617 = vshrl.u32 %v616, 7
      %v618 = vsub.s32 3, %v617
      %v619 = vrot.slane %v461, %v618
      %v620 = vmul.f32 %v608, %v619
      %v621 = vmul.f32 %v609, %v619
      %v622 = vmul.f32 %v610, %v619
      %v623 = vmul.f32 %v611, %v619
      %v624 = vmul.f32 %v612, %v619
      %v625 = vmul.f32 %v613, %v619
      %v626 = vmul.f32 %v614, %v619
      %v627 = vmul.f32 %v615, %v619
      %v628 = vadd.f32 %v580, %v620
      %v629 = vadd.f32 %v581, %v621
      %v630 = vadd.f32 %v582, %v622
      %v631 = vadd.f32 %v583, %v623
      %v632 = vadd.f32 %v584, %v624
      %v633 = vadd.f32 %v585, %v625
      %v634 = vadd.f32 %v586, %v626
      %v635 = vadd.f32 %v587, %v627
      %v636 = vld [vmem:[%s452] ss:$2 sm:$0xf]
      %s637 = scalar_lea.vmem %s452, 32 [#allocation2]
      %v638 = vld [vmem:[%s637] ss:$2 sm:$0xf]
      %s639 = scalar_lea.vmem %s452, 64 [#allocation2]
      %v640 = vld [vmem:[%s639] ss:$2 sm:$0xf]
      %s641 = scalar_lea.vmem %s452, 96 [#allocation2]
      %v642 = vld [vmem:[%s641] ss:$2 sm:$0xf]
      %v643 = vlaneseq
      %v644 = vshrl.u32 %v643, 7
      %v645 = vsub.s32 3, %v644
      %v646 = vrot.slane %v463, %v645
      %v647 = vmul.f32 %v636, %v646
      %v648 = vmul.f32 %v638, %v646
      %v649 = vmul.f32 %v640, %v646
      %v650 = vmul.f32 %v642, %v646
      %v651 = vadd.f32 %v604, %v647
      %v652 = vadd.f32 %v605, %v648
      %v653 = vadd.f32 %v606, %v649
      %v654 = vadd.f32 %v607, %v650
      %v655 = vld [vmem:[%s452 + $0x1] sm:$0xff]
      %v656 = vld [vmem:[%s452 + $0x11] sm:$0xff]
      %v657 = vld [vmem:[%s452 + $0x21] sm:$0xff]
      %v658 = vld [vmem:[%s452 + $0x31] sm:$0xff]
      %v659 = vld [vmem:[%s452 + $0x41] sm:$0xff]
      %v660 = vld [vmem:[%s452 + $0x51] sm:$0xff]
      %v661 = vld [vmem:[%s452 + $0x61] sm:$0xff]
      %v662 = vld [vmem:[%s452 + $0x71] sm:$0xff]
      %v663 = vlaneseq
      %v664 = vshrl.u32 %v663, 7
      %v665 = vsub.s32 4, %v664
      %v666 = vrot.slane %v461, %v665
      %v667 = vmul.f32 %v655, %v666
      %v668 = vmul.f32 %v656, %v666
      %v669 = vmul.f32 %v657, %v666
      %v670 = vmul.f32 %v658, %v666
      %v671 = vmul.f32 %v659, %v666
      %v672 = vmul.f32 %v660, %v666
      %v673 = vmul.f32 %v661, %v666
      %v674 = vmul.f32 %v662, %v666
      %v675 = vadd.f32 %v628, %v667
      %v676 = vadd.f32 %v629, %v668
      %v677 = vadd.f32 %v630, %v669
      %v678 = vadd.f32 %v631, %v670
      %v679 = vadd.f32 %v632, %v671
      %v680 = vadd.f32 %v633, %v672
      %v681 = vadd.f32 %v634, %v673
      %v682 = vadd.f32 %v635, %v674
      %s683 = scalar_lea.vmem %s452, 1 [#allocation2]
      %v684 = vld [vmem:[%s683] ss:$2 sm:$0xf]
      %s685 = scalar_lea.vmem %s452, 33 [#allocation2]
      %v686 = vld [vmem:[%s685] ss:$2 sm:$0xf]
      %s687 = scalar_lea.vmem %s452, 65 [#allocation2]
      %v688 = vld [vmem:[%s687] ss:$2 sm:$0xf]
      %s689 = scalar_lea.vmem %s452, 97 [#allocation2]
      %v690 = vld [vmem:[%s689] ss:$2 sm:$0xf]
      %v691 = vlaneseq
      %v692 = vshrl.u32 %v691, 7
      %v693 = vsub.s32 4, %v692
      %v694 = vrot.slane %v463, %v693
      %v695 = vmul.f32 %v684, %v694
      %v696 = vmul.f32 %v686, %v694
      %v697 = vmul.f32 %v688, %v694
      %v698 = vmul.f32 %v690, %v694
      %v699 = vadd.f32 %v651, %v695
      %v700 = vadd.f32 %v652, %v696
      %v701 = vadd.f32 %v653, %v697
      %v702 = vadd.f32 %v654, %v698
      %v703 = vld [vmem:[%s452 + $0x2] sm:$0xff]
      %v704 = vld [vmem:[%s452 + $0x12] sm:$0xff]
      %v705 = vld [vmem:[%s452 + $0x22] sm:$0xff]
      %v706 = vld [vmem:[%s452 + $0x32] sm:$0xff]
      %v707 = vld [vmem:[%s452 + $0x42] sm:$0xff]
      %v708 = vld [vmem:[%s452 + $0x52] sm:$0xff]
      %v709 = vld [vmem:[%s452 + $0x62] sm:$0xff]
      %v710 = vld [vmem:[%s452 + $0x72] sm:$0xff]
      %v711 = vlaneseq
      %v712 = vshrl.u32 %v711, 7
      %v713 = vsub.s32 5, %v712
      %v714 = vrot.slane %v461, %v713
      %v715 = vmul.f32 %v703, %v714
      %v716 = vmul.f32 %v704, %v714
      %v717 = vmul.f32 %v705, %v714
      %v718 = vmul.f32 %v706, %v714
      %v719 = vmul.f32 %v707, %v714
      %v720 = vmul.f32 %v708, %v714
      %v721 = vmul.f32 %v709, %v714
      %v722 = vmul.f32 %v710, %v714
      %v723 = vadd.f32 %v675, %v715
      %v724 = vadd.f32 %v676, %v716
      %v725 = vadd.f32 %v677, %v717
      %v726 = vadd.f32 %v678, %v718
      %v727 = vadd.f32 %v679, %v719
      %v728 = vadd.f32 %v680, %v720
      %v729 = vadd.f32 %v681, %v721
      %v730 = vadd.f32 %v682, %v722
      %s731 = scalar_lea.vmem %s452, 2 [#allocation2]
      %v732 = vld [vmem:[%s731] ss:$2 sm:$0xf]
      %s733 = scalar_lea.vmem %s452, 34 [#allocation2]
      %v734 = vld [vmem:[%s733] ss:$2 sm:$0xf]
      %s735 = scalar_lea.vmem %s452, 66 [#allocation2]
      %v736 = vld [vmem:[%s735] ss:$2 sm:$0xf]
      %s737 = scalar_lea.vmem %s452, 98 [#allocation2]
      %v738 = vld [vmem:[%s737] ss:$2 sm:$0xf]
      %v739 = vlaneseq
      %v740 = vshrl.u32 %v739, 7
      %v741 = vsub.s32 5, %v740
      %v742 = vrot.slane %v463, %v741
      %v743 = vmul.f32 %v732, %v742
      %v744 = vmul.f32 %v734, %v742
      %v745 = vmul.f32 %v736, %v742
      %v746 = vmul.f32 %v738, %v742
      %v747 = vadd.f32 %v699, %v743
      %v748 = vadd.f32 %v700, %v744
      %v749 = vadd.f32 %v701, %v745
      %v750 = vadd.f32 %v702, %v746
      %s751 = scalar_lea.vmem [#allocation2], 32
      %v752 = vld [vmem:[%s751] sm:$0xff]
      %v753 = vld [vmem:[%s751 + $0x10] sm:$0xff]
      %v754 = vld [vmem:[%s751 + $0x20] sm:$0xff]
      %v755 = vld [vmem:[%s751 + $0x30] sm:$0xff]
      %v756 = vld [vmem:[%s751 + $0x40] sm:$0xff]
      %v757 = vld [vmem:[%s751 + $0x50] sm:$0xff]
      %v758 = vld [vmem:[%s751 + $0x60] sm:$0xff]
      %v759 = vld [vmem:[%s751 + $0x70] sm:$0xff]
      %v760 = vlaneseq
      %v761 = vshrl.u32 %v760, 7
      %v762 = vsub.s32 6, %v761
      %v763 = vrot.slane %v461, %v762
      %v764 = vmul.f32 %v752, %v763
      %v765 = vmul.f32 %v753, %v763
      %v766 = vmul.f32 %v754, %v763
      %v767 = vmul.f32 %v755, %v763
      %v768 = vmul.f32 %v756, %v763
      %v769 = vmul.f32 %v757, %v763
      %v770 = vmul.f32 %v758, %v763
      %v771 = vmul.f32 %v759, %v763
      %v772 = vadd.f32 %v723, %v764
      %v773 = vadd.f32 %v724, %v765
      %v774 = vadd.f32 %v725, %v766
      %v775 = vadd.f32 %v726, %v767
      %v776 = vadd.f32 %v727, %v768
      %v777 = vadd.f32 %v728, %v769
      %v778 = vadd.f32 %v729, %v770
      %v779 = vadd.f32 %v730, %v771
      %v780 = vld [vmem:[%s751] ss:$2 sm:$0xf]
      %s781 = scalar_lea.vmem %s751, 32 [#allocation2]
      %v782 = vld [vmem:[%s781] ss:$2 sm:$0xf]
      %s783 = scalar_lea.vmem %s751, 64 [#allocation2]
      %v784 = vld [vmem:[%s783] ss:$2 sm:$0xf]
      %s785 = scalar_lea.vmem %s751, 96 [#allocation2]
      %v786 = vld [vmem:[%s785] ss:$2 sm:$0xf]
      %v787 = vlaneseq
      %v788 = vshrl.u32 %v787, 7
      %v789 = vsub.s32 6, %v788
      %v790 = vrot.slane %v463, %v789
      %v791 = vmul.f32 %v780, %v790
      %v792 = vmul.f32 %v782, %v790
      %v793 = vmul.f32 %v784, %v790
      %v794 = vmul.f32 %v786, %v790
      %v795 = vadd.f32 %v747, %v791
      %v796 = vadd.f32 %v748, %v792
      %v797 = vadd.f32 %v749, %v793
      %v798 = vadd.f32 %v750, %v794
      %v799 = vld [vmem:[%s751 + $0x1] sm:$0xff]
      %v800 = vld [vmem:[%s751 + $0x11] sm:$0xff]
      %v801 = vld [vmem:[%s751 + $0x21] sm:$0xff]
      %v802 = vld [vmem:[%s751 + $0x31] sm:$0xff]
      %v803 = vld [vmem:[%s751 + $0x41] sm:$0xff]
      %v804 = vld [vmem:[%s751 + $0x51] sm:$0xff]
      %v805 = vld [vmem:[%s751 + $0x61] sm:$0xff]
      %v806 = vld [vmem:[%s751 + $0x71] sm:$0xff]
      %v807 = vlaneseq
      %v808 = vshrl.u32 %v807, 7
      %v809 = vsub.s32 7, %v808
      %v810 = vrot.slane %v461, %v809
      %v811 = vmul.f32 %v799, %v810
      %v812 = vmul.f32 %v800, %v810
      %v813 = vmul.f32 %v801, %v810
      %v814 = vmul.f32 %v802, %v810
      %v815 = vmul.f32 %v803, %v810
      %v816 = vmul.f32 %v804, %v810
      %v817 = vmul.f32 %v805, %v810
      %v818 = vmul.f32 %v806, %v810
      %v819 = vadd.f32 %v772, %v811
      %v820 = vadd.f32 %v773, %v812
      %v821 = vadd.f32 %v774, %v813
      %v822 = vadd.f32 %v775, %v814
      %v823 = vadd.f32 %v776, %v815
      %v824 = vadd.f32 %v777, %v816
      %v825 = vadd.f32 %v778, %v817
      %v826 = vadd.f32 %v779, %v818
      %s827 = scalar_lea.vmem %s751, 1 [#allocation2]
      %v828 = vld [vmem:[%s827] ss:$2 sm:$0xf]
      %s829 = scalar_lea.vmem %s751, 33 [#allocation2]
      %v830 = vld [vmem:[%s829] ss:$2 sm:$0xf]
      %s831 = scalar_lea.vmem %s751, 65 [#allocation2]
      %v832 = vld [vmem:[%s831] ss:$2 sm:$0xf]
      %s833 = scalar_lea.vmem %s751, 97 [#allocation2]
      %v834 = vld [vmem:[%s833] ss:$2 sm:$0xf]
      %v835 = vlaneseq
      %v836 = vshrl.u32 %v835, 7
      %v837 = vsub.s32 7, %v836
      %v838 = vrot.slane %v463, %v837
      %v839 = vmul.f32 %v828, %v838
      %v840 = vmul.f32 %v830, %v838
      %v841 = vmul.f32 %v832, %v838
      %v842 = vmul.f32 %v834, %v838
      %v843 = vadd.f32 %v795, %v839
      %v844 = vadd.f32 %v796, %v840
      %v845 = vadd.f32 %v797, %v841
      %v846 = vadd.f32 %v798, %v842
      %v847 = vld [vmem:[%s751 + $0x2] sm:$0xff]
      %v848 = vld [vmem:[%s751 + $0x12] sm:$0xff]
      %v849 = vld [vmem:[%s751 + $0x22] sm:$0xff]
      %v850 = vld [vmem:[%s751 + $0x32] sm:$0xff]
      %v851 = vld [vmem:[%s751 + $0x42] sm:$0xff]
      %v852 = vld [vmem:[%s751 + $0x52] sm:$0xff]
      %v853 = vld [vmem:[%s751 + $0x62] sm:$0xff]
      %v854 = vld [vmem:[%s751 + $0x72] sm:$0xff]
      %v855 = vlaneseq
      %v856 = vshrl.u32 %v855, 7
      %v857 = vsub.s32 0, %v856
      %v858 = vrot.slane %v462, %v857
      %v859 = vmul.f32 %v847, %v858
      %v860 = vmul.f32 %v848, %v858
      %v861 = vmul.f32 %v849, %v858
      %v862 = vmul.f32 %v850, %v858
      %v863 = vmul.f32 %v851, %v858
      %v864 = vmul.f32 %v852, %v858
      %v865 = vmul.f32 %v853, %v858
      %v866 = vmul.f32 %v854, %v858
      %v867 = vadd.f32 %v819, %v859
      %v868 = vadd.f32 %v820, %v860
      %v869 = vadd.f32 %v821, %v861
      %v870 = vadd.f32 %v822, %v862
      %v871 = vadd.f32 %v823, %v863
      %v872 = vadd.f32 %v824, %v864
      %v873 = vadd.f32 %v825, %v865
      %v874 = vadd.f32 %v826, %v866
      %s875 = scalar_lea.vmem %s751, 2 [#allocation2]
      %v876 = vld [vmem:[%s875] ss:$2 sm:$0xf]
      %s877 = scalar_lea.vmem %s751, 34 [#allocation2]
      %v878 = vld [vmem:[%s877] ss:$2 sm:$0xf]
      %s879 = scalar_lea.vmem %s751, 66 [#allocation2]
      %v880 = vld [vmem:[%s879] ss:$2 sm:$0xf]
      %s881 = scalar_lea.vmem %s751, 98 [#allocation2]
      %v882 = vld [vmem:[%s881] ss:$2 sm:$0xf]
      %v883 = vlaneseq
      %v884 = vshrl.u32 %v883, 7
      %v885 = vsub.s32 0, %v884
      %v886 = vrot.slane %v464, %v885
      %v887 = vmul.f32 %v876, %v886
      %v888 = vmul.f32 %v878, %v886
      %v889 = vmul.f32 %v880, %v886
      %v890 = vmul.f32 %v882, %v886
      %v891 = vadd.f32 %v843, %v887
      %v892 = vadd.f32 %v844, %v888
      %v893 = vadd.f32 %v845, %v889
      %v894 = vadd.f32 %v846, %v890
      %v895 = vpack.c.bf16 %v867, %v867
      %v896 = vpack.c.bf16 %v868, %v868
      %v897 = vpack.c.bf16 %v869, %v869
      %v898 = vpack.c.bf16 %v870, %v870
      %v899 = vpack.c.bf16 %v871, %v871
      %v900 = vpack.c.bf16 %v872, %v872
      %v901 = vpack.c.bf16 %v873, %v873
      %v902 = vpack.c.bf16 %v874, %v874
      %vm903 = vcmask 125952
      %904 = vst.msk [vmem:[%s259] sm:$0xf] %vm903, %v895
      %905 = vst.msk [vmem:[%s259 + $0x4] sm:$0xf] %vm903, %v896
      %906 = vst.msk [vmem:[%s259 + $0x8] sm:$0xf] %vm903, %v897
      %907 = vst.msk [vmem:[%s259 + $0xc] sm:$0xf] %vm903, %v898
      %908 = vst.msk [vmem:[%s259 + $0x10] sm:$0xf] %vm903, %v899
      %909 = vst.msk [vmem:[%s259 + $0x14] sm:$0xf] %vm903, %v900
      %910 = vst.msk [vmem:[%s259 + $0x18] sm:$0xf] %vm903, %v901
      %911 = vst.msk [vmem:[%s259 + $0x1c] sm:$0xf] %vm903, %v902
      %v912 = vpack.c.bf16 %v891, %v891
      %v913 = vpack.c.bf16 %v892, %v892
      %v914 = vpack.c.bf16 %v893, %v893
      %v915 = vpack.c.bf16 %v894, %v894
      %916 = vst.msk [vmem:[%s264] sm:$0x3] %vm426, %v912
      %917 = vst.msk [vmem:[%s264 + $0x2] sm:$0x3] %vm426, %v913
      %918 = vst.msk [vmem:[%s264 + $0x4] sm:$0x3] %vm426, %v914
      %919 = vst.msk [vmem:[%s264 + $0x6] sm:$0x3] %vm426, %v915
      %p920 = scmp.lt.s32.totalorder %s18, 1
      %s921 = scalar_select %p920, %s18, 1
      %s922 = smul.addr %s921, 8
      %s923 = smul.addr %s922, 4
      %s924 = scalar_lea.vmem %s5, %s923
      %p925 = scmp.lt.s32.totalorder %s18, 1
      %s926 = scalar_select %p925, %s18, 1
      %s927 = smul.addr %s926, 4
      %s928 = smul.addr %s927, 2
      %s929 = scalar_lea.vmem %s6, %s928
      // Predicated region
      $region41: #{attention_forward.2} parent=39 // pred_check
        %p930 = pneg %p146
      $region42: #{attention_forward.2} parent=39 // pred_check_branch
        %932 = sbr.rel (%p930) target = $region44
      $region43: #{attention_forward.2} parent=39 // pred_region
        _
      $region44: #{attention_forward.2} parent=39 // pred_fallthru
        _
      // Predicated region
      $region45: #{attention_forward.2} parent=39 // pred_check
        %p933 = pneg %p172
      $region46: #{attention_forward.2} parent=39 // pred_check_branch
        %935 = sbr.rel (%p933) target = $region48
      $region47: #{attention_forward.2} parent=39 // pred_region
        _
      $region48: #{attention_forward.2} parent=39 // pred_fallthru
        _
    $region40: #{attention_forward.2} parent=5 // pred_fallthru
      _
    %p936 = scmp.le.s32.totalorder 2, %s13
    // Predicated region
    $region49: #{attention_forward.2} parent=5 // pred_check
      %p937 = pneg %p936
    $region50: #{attention_forward.2} parent=5 // pred_check_branch
      %939 = sbr.rel (%p937) target = $region52
    $region51: #{attention_forward.2} parent=5 // pred_region
      %s940 = ssub.s32 %s13, 2
      // Predicated region
      $region53: #{attention_forward.2} parent=51 // pred_check
        %p941 = pneg %p152
      $region54: #{attention_forward.2} parent=51 // pred_check_branch
        %943 = sbr.rel (%p941) target = $region56
      $region55: #{attention_forward.2} parent=51 // pred_region
        %p944 = scmp.lt.s32.totalorder %s19, 1
        %s945 = scalar_select %p944, %s19, 1
        %s946 = smul.addr %s945, 8
        %s947 = smul.addr %s946, 4
        %s948 = scalar_lea.vmem %s5, %s947
      $region56: #{attention_forward.2} parent=51 // pred_fallthru
        _
      // Predicated region
      $region57: #{attention_forward.2} parent=51 // pred_check
        %p949 = pneg %p178
      $region58: #{attention_forward.2} parent=51 // pred_check_branch
        %951 = sbr.rel (%p949) target = $region60
      $region59: #{attention_forward.2} parent=51 // pred_region
        %p952 = scmp.lt.s32.totalorder %s19, 1
        %s953 = scalar_select %p952, %s19, 1
        %s954 = smul.addr %s953, 4
        %s955 = smul.addr %s954, 2
        %s956 = scalar_lea.vmem %s6, %s955
      $region60: #{attention_forward.2} parent=51 // pred_fallthru
        _
    $region52: #{attention_forward.2} parent=5 // pred_fallthru
      _
  $region6: #{attention_forward.2} parent=0 // loop_footer
    %s17 = sadd.s32 1, %s13
  $region7: #{attention_forward.2} parent=0 // loop_footer_branch
    %12 = sbr.rel target = $region3
  $region8: #{attention_forward.2} parent=0 // loop_exit
    _

// kernel: attention_forward.3
$region0: #{attention_forward.3}
  #allocation0 [shape = 'u32[]', space=smem, size = 0x4, offset = 0x4, fixed_abs, tag = 'smem constant byte address 0x4 - core index']
  #allocation1 [shape = 'u32[144,128]{1,0:T(1,128)}', space=vmem, size = 0x12000, scoped, tag = 'internal scratch']
  #allocation2 [shape = 'bf16[2,64,16]{2,1,0:T(8,128)(2,1)}', space=vmem, size = 0x8000, scoped, tag = 'scratch operand']
  #allocation3 [shape = 'f32[2,64,1]{2,1,0:T(8,128)}', space=vmem, size = 0x10000, scoped, tag = 'scratch operand']
  #allocation4 [shape = 'f32[2,64,1]{2,1,0:T(8,128)}', space=vmem, size = 0x10000, scoped, tag = 'scratch operand']
  #allocation5 [shape = 'f32[2,64,16]{2,1,0:T(8,128)}', space=vmem, size = 0x10000, scoped, tag = 'scratch operand']
  %s0 = inlined_call_operand.vmem [shape: bf16[2,64,16], index: 0, kind: input, shape index: {}]
  %s1 = inlined_call_operand.vmem [shape: bf16[2,16,16], index: 1, kind: input, shape index: {}]
  %s2 = inlined_call_operand.vmem [shape: bf16[16,32], index: 2, kind: input, shape index: {}]
  %s3 = inlined_call_operand.vmem [shape: bf16[32,16], index: 3, kind: input, shape index: {}]
  %s4 = inlined_call_operand.vmem [shape: bf16[16,32], index: 4, kind: input, shape index: {}]
  %s5 = inlined_call_operand.vmem [shape: bf16[32,16], index: 5, kind: input, shape index: {}]
  %s6 = inlined_call_operand.vmem [shape: f32[1,16], index: 6, kind: input, shape index: {}]
  %s7 = inlined_call_operand.hbm [shape: f32[2,64,16], index: 7, kind: output, shape index: {}]
  %s8 = sld [smem:[#allocation0]]
  $region69: #{attention_forward.3} parent=0
    _
  %s10 = ssub.s32 1, %s8
  %s11 = scalar_select 0, %s10, %s8
  $region1: #{attention_forward.3} parent=0
    #allocation6 [shape = 'u8[65536]{0}', space=vmem, size = 0x10000, scoped, tag = 'output window, operand 0']
    #allocation7 [shape = 's32[2]{0}', space=sflag, size = 0x8, scoped, tag = 'scoped memory for attention_forward.3']
    %12 = vsyncpa [#allocation7], 0
    %s13 = scalar_lea.sflag [#allocation7], 1
    %14 = vsyncpa %s13, 0
    loop: start=0, step=1, limit=4
    $region2: #{attention_forward.3} parent=1 // loop_pre_header
      _
    $region3: #{attention_forward.3} parent=1 // loop_header
      %s16 = sphi 0, %s20
      %p17 = scmp.ge.s32.totalorder %s16, 4
      %s23 = sphi 0, %s42
      %s24 = sphi 0, %s38
      %s25 = sphi 0, %s34
      %s26 = sphi 0, %s23
      %s27 = sphi 0, %s24
      %s28 = sphi 0, %s25
      %s29 = sphi 0, %s26
      %s30 = sphi 0, %s27
      %s31 = sphi 0, %s28
      %s47 = sphi 0, %s49
      %s50 = sphi 0, %s47
      %s51 = sphi 0, %s50
      %s67 = sphi 0, %s51
      %s75 = sphi 0, %s77
      %s78 = sphi 0, %s75
      %s79 = sphi 0, %s78
      %s95 = sphi 0, %s79
      %s99 = sphi 0, %s99
      %s101 = sphi 0, %s99
      %s102 = sphi 0, %s101
      %s116 = sphi 0, %s102
      %s120 = sphi 0, %s120
      %s122 = sphi 0, %s120
      %s123 = sphi 0, %s122
      %s137 = sphi 0, %s123
      %s141 = sphi 0, %s141
      %s143 = sphi 0, %s141
      %s144 = sphi 0, %s143
      %s158 = sphi 0, %s144
      %s162 = sphi 0, %s162
      %s164 = sphi 0, %s162
      %s165 = sphi 0, %s164
      %s179 = sphi 0, %s165
      %s183 = sphi 0, %s183
      %s185 = sphi 0, %s183
      %s186 = sphi 0, %s185
      %s200 = sphi 0, %s186
      %s208 = sphi 0, %s210
      %s211 = sphi 0, %s208
      %s212 = sphi 0, %s211
      %s228 = sphi 0, %s212
    $region4: #{attention_forward.3} parent=1 // loop_header_branch
      %19 = sbr.rel (%p17) target = $region8
    $region5: #{attention_forward.3} parent=1 // loop_body
      %s21 = ssub.s32 %s16, 1
      %s22 = ssub.s32 %s16, 2
      %s32 = sadd.s32 1, %s25
      %p33 = scmp.ge.s32.totalorder %s32, 1
      %s34 = scalar_select %p33, 0, %s32
      %s35 = sadd.s32 1, %s24
      %s36 = scalar_select %p33, %s35, %s24
      %p37 = scmp.ge.s32.totalorder %s36, 1
      %s38 = scalar_select %p37, 0, %s36
      %s39 = sadd.s32 1, %s23
      %s40 = scalar_select %p37, %s39, %s23
      %p41 = scmp.ge.s32.totalorder %s40, 2
      %s42 = scalar_select %p41, 0, %s40
      %s43 = ssub.s32 %s23, %s42
      %s44 = ssub.s32 %s24, %s38
      %s45 = sor.u32 %s43, %s44
      %p46 = scmp.eq.s32.totalorder %s45, 0
      %s48 = sadd.s32 %s47, 1
      %s49 = scalar_select %p46, %s47, %s48
      %p52 = pneg %p46
      %p53 = scmp.eq.s32.totalorder %s16, 1
      %p54 = por %p52, %p53
      %p55 = scmp.ne.s32.totalorder %s47, %s50
      %p56 = scmp.eq.s32.totalorder %s16, 0
      %p57 = por %p55, %p56
      %p58 = scmp.ne.s32.totalorder %s47, %s50
      %p59 = scmp.eq.s32.totalorder %s21, 1
      %p60 = por %p58, %p59
      %p61 = scmp.ne.s32.totalorder %s50, %s51
      %p62 = scmp.eq.s32.totalorder %s21, 0
      %p63 = por %p61, %p62
      %p64 = scmp.ne.s32.totalorder %s50, %s51
      %p65 = scmp.eq.s32.totalorder %s22, 1
      %p66 = por %p64, %p65
      %p68 = scmp.ne.s32.totalorder %s51, %s67
      %p69 = scmp.eq.s32.totalorder %s22, 0
      %p70 = por %p68, %p69
      %s71 = ssub.s32 %s23, %s42
      %s72 = ssub.s32 %s25, %s34
      %s73 = sor.u32 %s71, %s72
      %p74 = scmp.eq.s32.totalorder %s73, 0
      %s76 = sadd.s32 %s75, 1
      %s77 = scalar_select %p74, %s75, %s76
      %p80 = pneg %p74
      %p81 = scmp.eq.s32.totalorder %s16, 1
      %p82 = por %p80, %p81
      %p83 = scmp.ne.s32.totalorder %s75, %s78
      %p84 = scmp.eq.s32.totalorder %s16, 0
      %p85 = por %p83, %p84
      %p86 = scmp.ne.s32.totalorder %s75, %s78
      %p87 = scmp.eq.s32.totalorder %s21, 1
      %p88 = por %p86, %p87
      %p89 = scmp.ne.s32.totalorder %s78, %s79
      %p90 = scmp.eq.s32.totalorder %s21, 0
      %p91 = por %p89, %p90
      %p92 = scmp.ne.s32.totalorder %s78, %s79
      %p93 = scmp.eq.s32.totalorder %s22, 1
      %p94 = por %p92, %p93
      %p96 = scmp.ne.s32.totalorder %s79, %s95
      %p97 = scmp.eq.s32.totalorder %s22, 0
      %p98 = por %p96, %p97
      %s100 = sadd.s32 %s99, 1
      %p103 = scmp.eq.s32.totalorder %s16, 1
      %p104 = scmp.ne.s32.totalorder %s99, %s101
      %p105 = scmp.eq.s32.totalorder %s16, 0
      %p106 = por %p104, %p105
      %p107 = scmp.ne.s32.totalorder %s99, %s101
      %p108 = scmp.eq.s32.totalorder %s21, 1
      %p109 = por %p107, %p108
      %p110 = scmp.ne.s32.totalorder %s101, %s102
      %p111 = scmp.eq.s32.totalorder %s21, 0
      %p112 = por %p110, %p111
      %p113 = scmp.ne.s32.totalorder %s101, %s102
      %p114 = scmp.eq.s32.totalorder %s22, 1
      %p115 = por %p113, %p114
      %p117 = scmp.ne.s32.totalorder %s102, %s116
      %p118 = scmp.eq.s32.totalorder %s22, 0
      %p119 = por %p117, %p118
      %s121 = sadd.s32 %s120, 1
      %p124 = scmp.eq.s32.totalorder %s16, 1
      %p125 = scmp.ne.s32.totalorder %s120, %s122
      %p126 = scmp.eq.s32.totalorder %s16, 0
      %p127 = por %p125, %p126
      %p128 = scmp.ne.s32.totalorder %s120, %s122
      %p129 = scmp.eq.s32.totalorder %s21, 1
      %p130 = por %p128, %p129
      %p131 = scmp.ne.s32.totalorder %s122, %s123
      %p132 = scmp.eq.s32.totalorder %s21, 0
      %p133 = por %p131, %p132
      %p134 = scmp.ne.s32.totalorder %s122, %s123
      %p135 = scmp.eq.s32.totalorder %s22, 1
      %p136 = por %p134, %p135
      %p138 = scmp.ne.s32.totalorder %s123, %s137
      %p139 = scmp.eq.s32.totalorder %s22, 0
      %p140 = por %p138, %p139
      %s142 = sadd.s32 %s141, 1
      %p145 = scmp.eq.s32.totalorder %s16, 1
      %p146 = scmp.ne.s32.totalorder %s141, %s143
      %p147 = scmp.eq.s32.totalorder %s16, 0
      %p148 = por %p146, %p147
      %p149 = scmp.ne.s32.totalorder %s141, %s143
      %p150 = scmp.eq.s32.totalorder %s21, 1
      %p151 = por %p149, %p150
      %p152 = scmp.ne.s32.totalorder %s143, %s144
      %p153 = scmp.eq.s32.totalorder %s21, 0
      %p154 = por %p152, %p153
      %p155 = scmp.ne.s32.totalorder %s143, %s144
      %p156 = scmp.eq.s32.totalorder %s22, 1
      %p157 = por %p155, %p156
      %p159 = scmp.ne.s32.totalorder %s144, %s158
      %p160 = scmp.eq.s32.totalorder %s22, 0
      %p161 = por %p159, %p160
      %s163 = sadd.s32 %s162, 1
      %p166 = scmp.eq.s32.totalorder %s16, 1
      %p167 = scmp.ne.s32.totalorder %s162, %s164
      %p168 = scmp.eq.s32.totalorder %s16, 0
      %p169 = por %p167, %p168
      %p170 = scmp.ne.s32.totalorder %s162, %s164
      %p171 = scmp.eq.s32.totalorder %s21, 1
      %p172 = por %p170, %p171
      %p173 = scmp.ne.s32.totalorder %s164, %s165
      %p174 = scmp.eq.s32.totalorder %s21, 0
      %p175 = por %p173, %p174
      %p176 = scmp.ne.s32.totalorder %s164, %s165
      %p177 = scmp.eq.s32.totalorder %s22, 1
      %p178 = por %p176, %p177
      %p180 = scmp.ne.s32.totalorder %s165, %s179
      %p181 = scmp.eq.s32.totalorder %s22, 0
      %p182 = por %p180, %p181
      %s184 = sadd.s32 %s183, 1
      %p187 = scmp.eq.s32.totalorder %s16, 1
      %p188 = scmp.ne.s32.totalorder %s183, %s185
      %p189 = scmp.eq.s32.totalorder %s16, 0
      %p190 = por %p188, %p189
      %p191 = scmp.ne.s32.totalorder %s183, %s185
      %p192 = scmp.eq.s32.totalorder %s21, 1
      %p193 = por %p191, %p192
      %p194 = scmp.ne.s32.totalorder %s185, %s186
      %p195 = scmp.eq.s32.totalorder %s21, 0
      %p196 = por %p194, %p195
      %p197 = scmp.ne.s32.totalorder %s185, %s186
      %p198 = scmp.eq.s32.totalorder %s22, 1
      %p199 = por %p197, %p198
      %p201 = scmp.ne.s32.totalorder %s186, %s200
      %p202 = scmp.eq.s32.totalorder %s22, 0
      %p203 = por %p201, %p202
      %s204 = ssub.s32 %s23, %s42
      %s205 = ssub.s32 %s24, %s38
      %s206 = sor.u32 %s204, %s205
      %p207 = scmp.eq.s32.totalorder %s206, 0
      %s209 = sadd.s32 %s208, 1
      %s210 = scalar_select %p207, %s208, %s209
      %p213 = pneg %p207
      %p214 = scmp.eq.s32.totalorder %s16, 1
      %p215 = por %p213, %p214
      %p216 = scmp.ne.s32.totalorder %s208, %s211
      %p217 = scmp.eq.s32.totalorder %s16, 0
      %p218 = por %p216, %p217
      %p219 = scmp.ne.s32.totalorder %s208, %s211
      %p220 = scmp.eq.s32.totalorder %s21, 1
      %p221 = por %p219, %p220
      %p222 = scmp.ne.s32.totalorder %s211, %s212
      %p223 = scmp.eq.s32.totalorder %s21, 0
      %p224 = por %p222, %p223
      %p225 = scmp.ne.s32.totalorder %s211, %s212
      %p226 = scmp.eq.s32.totalorder %s22, 1
      %p227 = por %p225, %p226
      %p229 = scmp.ne.s32.totalorder %s212, %s228
      %p230 = scmp.eq.s32.totalorder %s22, 0
      %p231 = por %p229, %p230
      %p232 = scmp.le.s32.totalorder 1, %s16
      %p233 = scmp.lt.s32.totalorder %s16, 3
      %p234 = pnand %p232, %p233
      %p235 = pneg %p234
      // Predicated region
      $region9: #{attention_forward.3} parent=5 // pred_check
        _
      $region10: #{attention_forward.3} parent=5 // pred_check_branch
        %237 = sbr.rel (%p234) target = $region12
      $region11: #{attention_forward.3} parent=5 // pred_region
        %s238 = ssub.s32 %s16, 1
        // Predicated region
        $region13: #{attention_forward.3} parent=11 // pred_check
          %p239 = pneg %p112
        $region14: #{attention_forward.3} parent=11 // pred_check_branch
          %241 = sbr.rel (%p239) target = $region16
        $region15: #{attention_forward.3} parent=11 // pred_region
          _
        $region16: #{attention_forward.3} parent=11 // pred_fallthru
          _
        // Predicated region
        $region17: #{attention_forward.3} parent=11 // pred_check
          %p242 = pneg %p133
        $region18: #{attention_forward.3} parent=11 // pred_check_branch
          %244 = sbr.rel (%p242) target = $region20
        $region19: #{attention_forward.3} parent=11 // pred_region
          _
        $region20: #{attention_forward.3} parent=11 // pred_fallthru
          _
        // Predicated region
        $region21: #{attention_forward.3} parent=11 // pred_check
          %p245 = pneg %p154
        $region22: #{attention_forward.3} parent=11 // pred_check_branch
          %247 = sbr.rel (%p245) target = $region24
        $region23: #{attention_forward.3} parent=11 // pred_region
          _
        $region24: #{attention_forward.3} parent=11 // pred_fallthru
          _
        // Predicated region
        $region25: #{attention_forward.3} parent=11 // pred_check
          %p248 = pneg %p175
        $region26: #{attention_forward.3} parent=11 // pred_check_branch
          %250 = sbr.rel (%p248) target = $region28
        $region27: #{attention_forward.3} parent=11 // pred_region
          _
        $region28: #{attention_forward.3} parent=11 // pred_fallthru
          _
        // Predicated region
        $region29: #{attention_forward.3} parent=11 // pred_check
          %p251 = pneg %p196
        $region30: #{attention_forward.3} parent=11 // pred_check_branch
          %253 = sbr.rel (%p251) target = $region32
        $region31: #{attention_forward.3} parent=11 // pred_region
          _
        $region32: #{attention_forward.3} parent=11 // pred_fallthru
          _
      $region12: #{attention_forward.3} parent=5 // pred_fallthru
        _
      %p254 = scmp.lt.s32.totalorder %s16, 2
      // Predicated region
      $region33: #{attention_forward.3} parent=5 // pred_check
        %p255 = pneg %p254
      $region34: #{attention_forward.3} parent=5 // pred_check_branch
        %257 = sbr.rel (%p255) target = $region36
      $region35: #{attention_forward.3} parent=5 // pred_region
        // Predicated region
        $region37: #{attention_forward.3} parent=35 // pred_check
          %p258 = pneg %p57
        $region38: #{attention_forward.3} parent=35 // pred_check_branch
          %260 = sbr.rel (%p258) target = $region40
        $region39: #{attention_forward.3} parent=35 // pred_region
          %s261 = smul.u32 8, %s24
          %p262 = scmp.lt.s32.totalorder %s23, 1
          %s263 = scalar_select %p262, %s23, 1
          %p264 = scmp.lt.s32.totalorder %s261, 7
          %s265 = scalar_select %p264, %s261, 7
          %s266 = smul.addr %s263, 8
          %s267 = sadd.s32 %s265, %s266
          %s268 = smul.addr %s267, 4
          %s269 = scalar_lea.vmem %s0, %s268
          %s270 = smul.u32 8, %s24
        $region40: #{attention_forward.3} parent=35 // pred_fallthru
          _
        // Predicated region
        $region41: #{attention_forward.3} parent=35 // pred_check
          %p271 = pneg %p85
        $region42: #{attention_forward.3} parent=35 // pred_check_branch
          %273 = sbr.rel (%p271) target = $region44
        $region43: #{attention_forward.3} parent=35 // pred_region
          %s274 = smul.u32 2, %s25
          %p275 = scmp.lt.s32.totalorder %s23, 1
          %s276 = scalar_select %p275, %s23, 1
          %p277 = scmp.lt.s32.totalorder %s274, 1
          %s278 = scalar_select %p277, %s274, 1
          %s279 = smul.addr %s276, 2
          %s280 = sadd.s32 %s278, %s279
          %s281 = smul.addr %s280, 4
          %s282 = scalar_lea.vmem %s1, %s281
          %s283 = smul.u32 2, %s25
        $region44: #{attention_forward.3} parent=35 // pred_fallthru
          _
      $region36: #{attention_forward.3} parent=5 // pred_fallthru
        _
      %p284 = scmp.le.s32.totalorder 1, %s16
      %p285 = scmp.lt.s32.totalorder %s16, 3
      %p286 = pnand %p284, %p285
      %p287 = pneg %p286
      // Predicated region
      $region45: #{attention_forward.3} parent=5 // pred_check
        _
      $region46: #{attention_forward.3} parent=5 // pred_check_branch
        %289 = sbr.rel (%p286) target = $region48
      $region47: #{attention_forward.3} parent=5 // pred_region
        %s290 = ssub.s32 %s16, 1
        %s291 = smul.u32 8, %s27
        %p292 = scmp.lt.s32.totalorder %s26, 1
        %s293 = scalar_select %p292, %s26, 1
        %p294 = scmp.lt.s32.totalorder %s291, 7
        %s295 = scalar_select %p294, %s291, 7
        %s296 = smul.addr %s293, 8
        %s297 = sadd.s32 %s295, %s296
        %s298 = smul.addr %s297, 4
        %s299 = scalar_lea.vmem %s0, %s298
        %p300 = pneg %p63
        %p301 = pneg %p60
        %s302 = smul.u32 2, %s28
        %p303 = scmp.lt.s32.totalorder %s26, 1
        %s304 = scalar_select %p303, %s26, 1
        %p305 = scmp.lt.s32.totalorder %s302, 1
        %s306 = scalar_select %p305, %s302, 1
        %s307 = smul.addr %s304, 2
        %s308 = sadd.s32 %s306, %s307
        %s309 = smul.addr %s308, 4
        %s310 = scalar_lea.vmem %s1, %s309
        %p311 = pneg %p91
        %p312 = pneg %p88
        %p313 = pneg %p112
        %p314 = pneg %p109
        %p315 = pneg %p133
        %p316 = pneg %p130
        %p317 = pneg %p154
        %p318 = pneg %p151
        %p319 = pneg %p175
        %p320 = pneg %p172
        %p321 = pneg %p196
        %p322 = pneg %p193
        %p323 = pneg %p224
        %p324 = pneg %p221
        %s325 = sand.u32 %s211, 1
        %s326 = scalar_lea.sflag [#allocation7], %s325
        %s327 = sand.u32 %s211, 1
        %s328 = smul.addr %s327, 64
        %s329 = scalar_lea.vmem [#allocation6], %s328
        %s330 = smul.u32 8, %s27
        %p331 = scmp.lt.s32.totalorder %s26, 1
        %s332 = scalar_select %p331, %s26, 1
        %p333 = scmp.lt.s32.totalorder %s330, 7
        %s334 = scalar_select %p333, %s330, 7
        %s335 = smul.addr %s332, 8
        %s336 = sadd.s32 %s334, %s335
        %s337 = smul.addr %s336, 4
        %s338 = scalar_lea.vmem %s0, %s337
        %s339 = smul.u32 8, %s27
        %s340 = smul.u32 2, %s28
        %p341 = scmp.lt.s32.totalorder %s26, 1
        %s342 = scalar_select %p341, %s26, 1
        %p343 = scmp.lt.s32.totalorder %s340, 1
        %s344 = scalar_select %p343, %s340, 1
        %s345 = smul.addr %s342, 2
        %s346 = sadd.s32 %s344, %s345
        %s347 = smul.addr %s346, 4
        %s348 = scalar_lea.vmem %s1, %s347
        %s349 = smul.u32 2, %s28
        %s350 = smul.u32 8, %s27
        %p352 = scmp.eq.s32.totalorder %s28, 0
        // Predicated region
        $region49: #{attention_forward.3} parent=47 // pred_check
          %p353 = pneg %p352
        $region50: #{attention_forward.3} parent=47 // pred_check_branch
          %355 = sbr.rel (%p353) target = $region52
        $region51: #{attention_forward.3} parent=47 // pred_region
          %v356 = vld [vmem:[%s338] sm:$0xf]
          %v357 = vld [vmem:[%s338 + $0x4] sm:$0xf]
          %v358 = vld [vmem:[%s338 + $0x8] sm:$0xf]
          %v359 = vld [vmem:[%s338 + $0xc] sm:$0xf]
          %v360 = vld [vmem:[%s338 + $0x10] sm:$0xf]
          %v361 = vld [vmem:[%s338 + $0x14] sm:$0xf]
          %v362 = vld [vmem:[%s338 + $0x18] sm:$0xf]
          %v363 = vld [vmem:[%s338 + $0x1c] sm:$0xf]
          %v364 = vld [vmem:[%s2] sm:$0xf]
          %v365 = vld [vmem:[%s2 + $0x4] sm:$0xf]
          %v374 = vunpack.c.l.b16 %v356
          %v375 = vunpack.c.l.b16 %v357
          %v376 = vunpack.c.l.b16 %v358
          %v377 = vunpack.c.l.b16 %v359
          %v378 = vunpack.c.l.b16 %v360
          %v379 = vunpack.c.l.b16 %v361
          %v380 = vunpack.c.l.b16 %v362
          %v381 = vunpack.c.l.b16 %v363
          %v382 = vpack.c.b16 %v375, %v374
          %v383 = vpack.c.b16 %v377, %v376
          %v384 = vpack.c.b16 %v379, %v378
          %v385 = vpack.c.b16 %v381, %v380
          %v388 = vunpack.c.l.b16 %v364
          %v389 = vunpack.c.l.b16 %v365
          %v390 = vpack.c.b16 %v389, %v388
          %vm392 = vcmask 130048
          %v394 = vsel %vm392, %v382, 0
          %v397 = vsel %vm392, %v383, 0
          %v400 = vsel %vm392, %v384, 0
          %v403 = vsel %vm392, %v385, 0
          %405 = vmatprep.subr.bf16.mxu0 0
          %406 = vmatpush1.bf16.msra.mxu0 0
          %407 = vmatprep.subr.bf16.mxu0 0
          %408 = vmatpush1.bf16.msra.mxu0 0
          %409 = vmatprep.subr.bf16.mxu0 0
          %410 = vmatpush1.bf16.msra.mxu0 0
          %411 = vmatprep.subr.bf16.mxu0 0
          %412 = vmatpush1.bf16.msra.mxu0 0
          %413 = vmatprep.subr.bf16.mxu0 0
          %414 = vmatpush1.bf16.msra.mxu0 0
          %415 = vmatprep.subr.bf16.mxu0 0
          %416 = vmatpush1.bf16.msra.mxu0 0
          %417 = vmatprep.subr.bf16.mxu0 0
          %418 = vmatpush1.bf16.msra.mxu0 0
          %419 = vmatprep.subr.bf16.mxu0 0
          %420 = vmatpush1.bf16.msra.mxu0 %v390
          %421 = vmatprep.subr.bf16.mxu0 0
          %422 = vmatpush2.bf16.msra.mxu0 0
          %423 = vmatprep.subr.bf16.mxu0 0
          %424 = vmatpush2.bf16.msra.mxu0 0
          %425 = vmatprep.subr.bf16.mxu0 0
          %426 = vmatpush2.bf16.msra.mxu0 0
          %427 = vmatprep.subr.bf16.mxu0 0
          %428 = vmatpush2.bf16.msra.mxu0 0
          %429 = vmatprep.subr.bf16.mxu0 0
          %430 = vmatpush2.bf16.msra.mxu0 0
          %431 = vmatprep.subr.bf16.mxu0 0
          %432 = vmatpush2.bf16.msra.mxu0 0
          %433 = vmatprep.subr.bf16.mxu0 0
          %434 = vmatpush2.bf16.msra.mxu0 0
          %435 = vmatprep.subr.bf16.mxu0 0
          %436 = vmatpush2.bf16.msra.mxu0 0
          %437 = vmatprep.mubr.bf16.mxu0 0
          %438 = vmatmul.mubr.bf16.gmra.mxu0 %v394
          %v439 = vpop.f32.mrf.mxu0
          %v440 = vadd.f32 0.0, %v439
          %v441 = vpop.f32.mrf.mxu0
          %v442 = vpop.f32.mrf.mxu0
          %v443 = vadd.f32 0.0, %v442
          %v444 = vpop.f32.mrf.mxu0
          %445 = vmatprep.mubr.bf16.mxu0 0
          %446 = vmatmul.mubr.bf16.gmra.mxu0 %v397
          %v447 = vpop.f32.mrf.mxu0
          %v448 = vadd.f32 0.0, %v447
          %v449 = vpop.f32.mrf.mxu0
          %v450 = vpop.f32.mrf.mxu0
          %v451 = vadd.f32 0.0, %v450
          %v452 = vpop.f32.mrf.mxu0
          %453 = vmatprep.mubr.bf16.mxu0 0
          %454 = vmatmul.mubr.bf16.gmra.mxu0 %v400
          %v455 = vpop.f32.mrf.mxu0
          %v456 = vadd.f32 0.0, %v455
          %v457 = vpop.f32.mrf.mxu0
          %v458 = vpop.f32.mrf.mxu0
          %v459 = vadd.f32 0.0, %v458
          %v460 = vpop.f32.mrf.mxu0
          %461 = vmatprep.mubr.bf16.mxu0 0
          %462 = vmatmul.mubr.bf16.gmra.mxu0 %v403
          %v463 = vpop.f32.mrf.mxu0
          %v464 = vadd.f32 0.0, %v463
          %v465 = vpop.f32.mrf.mxu0
          %v466 = vpop.f32.mrf.mxu0
          %v467 = vadd.f32 0.0, %v466
          %v468 = vpop.f32.mrf.mxu0
          %469 = vdwg.mxu0
          %v470 = vpack.c.bf16 %v443, %v440
          %v471 = vpack.c.bf16 %v451, %v448
          %v472 = vpack.c.bf16 %v459, %v456
          %v473 = vpack.c.bf16 %v467, %v464
          %v478 = vunpack.c.l.b16 %v470
          %v479 = vunpack.c.h.b16 %v470
          %v480 = vunpack.c.l.b16 %v471
          %v481 = vunpack.c.h.b16 %v471
          %v482 = vunpack.c.l.b16 %v472
          %v483 = vunpack.c.h.b16 %v472
          %v484 = vunpack.c.l.b16 %v473
          %v485 = vunpack.c.h.b16 %v473
          %v486 = vpack.c.b16 %v478, %v478
          %v487 = vpack.c.b16 %v479, %v479
          %v488 = vpack.c.b16 %v480, %v480
          %v489 = vpack.c.b16 %v481, %v481
          %v490 = vpack.c.b16 %v482, %v482
          %v491 = vpack.c.b16 %v483, %v483
          %v492 = vpack.c.b16 %v484, %v484
          %v493 = vpack.c.b16 %v485, %v485
          %vm502 = vcmask 125952
          %503 = vst.msk [vmem:[#allocation2] sm:$0xf] %vm502, %v486
          %504 = vst.msk [vmem:[#allocation2 + $0x4] sm:$0xf] %vm502, %v487
          %505 = vst.msk [vmem:[#allocation2 + $0x8] sm:$0xf] %vm502, %v488
          %506 = vst.msk [vmem:[#allocation2 + $0xc] sm:$0xf] %vm502, %v489
          %507 = vst.msk [vmem:[#allocation2 + $0x10] sm:$0xf] %vm502, %v490
          %508 = vst.msk [vmem:[#allocation2 + $0x14] sm:$0xf] %vm502, %v491
          %509 = vst.msk [vmem:[#allocation2 + $0x18] sm:$0xf] %vm502, %v492
          %510 = vst.msk [vmem:[#allocation2 + $0x1c] sm:$0xf] %vm502, %v493
          %511 = vrot.lane.b32.xlu0 %v486, 112
          %v512 = vpop.permute.xlu0 %511
          %513 = vrot.lane.b32.xlu0 %v487, 112
          %v514 = vpop.permute.xlu0 %513
          %515 = vrot.lane.b32.xlu0 %v488, 112
          %v516 = vpop.permute.xlu0 %515
          %517 = vrot.lane.b32.xlu0 %v489, 112
          %v518 = vpop.permute.xlu0 %517
          %519 = vrot.lane.b32.xlu0 %v490, 112
          %v520 = vpop.permute.xlu0 %519
          %521 = vrot.lane.b32.xlu0 %v491, 112
          %v522 = vpop.permute.xlu0 %521
          %523 = vrot.lane.b32.xlu0 %v492, 112
          %v524 = vpop.permute.xlu0 %523
          %525 = vrot.lane.b32.xlu0 %v493, 112
          %v526 = vpop.permute.xlu0 %525
          %s535 = scalar_lea.vmem [#allocation2], 32
          %536 = vst.msk [vmem:[%s535] sm:$0xf] %vm502, %v512
          %537 = vst.msk [vmem:[%s535 + $0x4] sm:$0xf] %vm502, %v514
          %538 = vst.msk [vmem:[%s535 + $0x8] sm:$0xf] %vm502, %v516
          %539 = vst.msk [vmem:[%s535 + $0xc] sm:$0xf] %vm502, %v518
          %540 = vst.msk [vmem:[%s535 + $0x10] sm:$0xf] %vm502, %v520
          %541 = vst.msk [vmem:[%s535 + $0x14] sm:$0xf] %vm502, %v522
          %542 = vst.msk [vmem:[%s535 + $0x18] sm:$0xf] %vm502, %v524
          %543 = vst.msk [vmem:[%s535 + $0x1c] sm:$0xf] %vm502, %v526
          %vm544 = vcmask 7168
          %545 = vst.msk [vmem:[#allocation3] sm:$0xff] %vm544, -inf
          %546 = vst.msk [vmem:[#allocation3 + $0x8] sm:$0xff] %vm544, -inf
          %547 = vst.msk [vmem:[#allocation3 + $0x10] sm:$0xff] %vm544, -inf
          %548 = vst.msk [vmem:[#allocation3 + $0x18] sm:$0xff] %vm544, -inf
          %549 = vst.msk [vmem:[#allocation3 + $0x20] sm:$0xff] %vm544, -inf
          %550 = vst.msk [vmem:[#allocation3 + $0x28] sm:$0xff] %vm544, -inf
          %551 = vst.msk [vmem:[#allocation3 + $0x30] sm:$0xff] %vm544, -inf
          %552 = vst.msk [vmem:[#allocation3 + $0x38] sm:$0xff] %vm544, -inf
          %553 = vst.msk [vmem:[#allocation3 + $0x40] sm:$0xff] %vm544, -inf
          %554 = vst.msk [vmem:[#allocation3 + $0x48] sm:$0xff] %vm544, -inf
          %555 = vst.msk [vmem:[#allocation3 + $0x50] sm:$0xff] %vm544, -inf
          %556 = vst.msk [vmem:[#allocation3 + $0x58] sm:$0xff] %vm544, -inf
          %557 = vst.msk [vmem:[#allocation3 + $0x60] sm:$0xff] %vm544, -inf
          %558 = vst.msk [vmem:[#allocation3 + $0x68] sm:$0xff] %vm544, -inf
          %559 = vst.msk [vmem:[#allocation3 + $0x70] sm:$0xff] %vm544, -inf
          %560 = vst.msk [vmem:[#allocation3 + $0x78] sm:$0xff] %vm544, -inf
          %561 = vst.msk [vmem:[#allocation4] sm:$0xff] %vm544, 0.0
          %562 = vst.msk [vmem:[#allocation4 + $0x8] sm:$0xff] %vm544, 0.0
          %563 = vst.msk [vmem:[#allocation4 + $0x10] sm:$0xff] %vm544, 0.0
          %564 = vst.msk [vmem:[#allocation4 + $0x18] sm:$0xff] %vm544, 0.0
          %565 = vst.msk [vmem:[#allocation4 + $0x20] sm:$0xff] %vm544, 0.0
          %566 = vst.msk [vmem:[#allocation4 + $0x28] sm:$0xff] %vm544, 0.0
          %567 = vst.msk [vmem:[#allocation4 + $0x30] sm:$0xff] %vm544, 0.0
          %568 = vst.msk [vmem:[#allocation4 + $0x38] sm:$0xff] %vm544, 0.0
          %569 = vst.msk [vmem:[#allocation4 + $0x40] sm:$0xff] %vm544, 0.0
          %570 = vst.msk [vmem:[#allocation4 + $0x48] sm:$0xff] %vm544, 0.0
          %571 = vst.msk [vmem:[#allocation4 + $0x50] sm:$0xff] %vm544, 0.0
          %572 = vst.msk [vmem:[#allocation4 + $0x58] sm:$0xff] %vm544, 0.0
          %573 = vst.msk [vmem:[#allocation4 + $0x60] sm:$0xff] %vm544, 0.0
          %574 = vst.msk [vmem:[#allocation4 + $0x68] sm:$0xff] %vm544, 0.0
          %575 = vst.msk [vmem:[#allocation4 + $0x70] sm:$0xff] %vm544, 0.0
          %576 = vst.msk [vmem:[#allocation4 + $0x78] sm:$0xff] %vm544, 0.0
          %577 = vst.msk [vmem:[#allocation5] sm:$0xff] %vm392, 0.0
          %578 = vst.msk [vmem:[#allocation5 + $0x8] sm:$0xff] %vm392, 0.0
          %579 = vst.msk [vmem:[#allocation5 + $0x10] sm:$0xff] %vm392, 0.0
          %580 = vst.msk [vmem:[#allocation5 + $0x18] sm:$0xff] %vm392, 0.0
          %581 = vst.msk [vmem:[#allocation5 + $0x20] sm:$0xff] %vm392, 0.0
          %582 = vst.msk [vmem:[#allocation5 + $0x28] sm:$0xff] %vm392, 0.0
          %583 = vst.msk [vmem:[#allocation5 + $0x30] sm:$0xff] %vm392, 0.0
          %584 = vst.msk [vmem:[#allocation5 + $0x38] sm:$0xff] %vm392, 0.0
          %585 = vst.msk [vmem:[#allocation5 + $0x40] sm:$0xff] %vm392, 0.0
          %586 = vst.msk [vmem:[#allocation5 + $0x48] sm:$0xff] %vm392, 0.0
          %587 = vst.msk [vmem:[#allocation5 + $0x50] sm:$0xff] %vm392, 0.0
          %588 = vst.msk [vmem:[#allocation5 + $0x58] sm:$0xff] %vm392, 0.0
          %589 = vst.msk [vmem:[#allocation5 + $0x60] sm:$0xff] %vm392, 0.0
          %590 = vst.msk [vmem:[#allocation5 + $0x68] sm:$0xff] %vm392, 0.0
          %591 = vst.msk [vmem:[#allocation5 + $0x70] sm:$0xff] %vm392, 0.0
          %592 = vst.msk [vmem:[#allocation5 + $0x78] sm:$0xff] %vm392, 0.0
        $region52: #{attention_forward.3} parent=47 // pred_fallthru
          _
        %v593 = vld [vmem:[%s348] sm:$0xf]
        %v594 = vld [vmem:[%s348 + $0x4] sm:$0xf]
        %v595 = vld [vmem:[%s3] sm:$0xf]
        %v596 = vld [vmem:[%s3 + $0x4] sm:$0xf]
        %v597 = vld [vmem:[%s3 + $0x8] sm:$0xf]
        %v598 = vld [vmem:[%s3 + $0xc] sm:$0xf]
        %v603 = vunpack.c.l.b16 %v595
        %v604 = vunpack.c.l.b16 %v596
        %v605 = vunpack.c.l.b16 %v597
        %v606 = vunpack.c.l.b16 %v598
        %v607 = vpack.c.b16 %v604, %v603
        %v608 = vpack.c.b16 %v606, %v605
        %v611 = vunpack.c.l.b16 %v593
        %v612 = vunpack.c.l.b16 %v594
        %v613 = vpack.c.b16 %v612, %v611
        %vm614 = vcmask 130048
        %v616 = vsel %vm614, %v607, 0
        %v619 = vsel %vm614, %v608, 0
        %v622 = vsel %vm614, %v613, 0
        %624 = vmatprep.subr.bf16.mxu0 0
        %625 = vmatpush1.bf16.xpose.msra.mxu0 0
        %626 = vmatprep.subr.bf16.mxu0 0
        %627 = vmatpush1.bf16.xpose.msra.mxu0 0
        %628 = vmatprep.subr.bf16.mxu0 0
        %629 = vmatpush1.bf16.xpose.msra.mxu0 0
        %630 = vmatprep.subr.bf16.mxu0 0
        %631 = vmatpush1.bf16.xpose.msra.mxu0 0
        %632 = vmatprep.subr.bf16.mxu0 0
        %633 = vmatpush1.bf16.xpose.msra.mxu0 0
        %634 = vmatprep.subr.bf16.mxu0 0
        %635 = vmatpush1.bf16.xpose.msra.mxu0 0
        %636 = vmatprep.subr.bf16.mxu0 0
        %637 = vmatpush1.bf16.xpose.msra.mxu0 0
        %638 = vmatprep.subr.bf16.mxu0 0
        %639 = vmatpush1.bf16.xpose.msra.mxu0 %v622
        %640 = vmatprep.subr.bf16.mxu0 0
        %641 = vmatpush2.bf16.xpose.msra.mxu0 0
        %642 = vmatprep.subr.bf16.mxu0 0
        %643 = vmatpush2.bf16.xpose.msra.mxu0 0
        %644 = vmatprep.subr.bf16.mxu0 0
        %645 = vmatpush2.bf16.xpose.msra.mxu0 0
        %646 = vmatprep.subr.bf16.mxu0 0
        %647 = vmatpush2.bf16.xpose.msra.mxu0 0
        %648 = vmatprep.subr.bf16.mxu0 0
        %649 = vmatpush2.bf16.xpose.msra.mxu0 0
        %650 = vmatprep.subr.bf16.mxu0 0
        %651 = vmatpush2.bf16.xpose.msra.mxu0 0
        %652 = vmatprep.subr.bf16.mxu0 0
        %653 = vmatpush2.bf16.xpose.msra.mxu0 0
        %654 = vmatprep.subr.bf16.mxu0 0
        %655 = vmatpush2.bf16.xpose.msra.mxu0 0
        %656 = vmatprep.mubr.bf16.mxu0 0
        %657 = vmatmul.mubr.bf16.gmra.mxu0 %v616
        %v658 = vpop.f32.mrf.mxu0
        %v659 = vadd.f32 0.0, %v658
        %v660 = vpop.f32.mrf.mxu0
        %v661 = vpop.f32.mrf.mxu0
        %v662 = vadd.f32 0.0, %v661
        %v663 = vpop.f32.mrf.mxu0
        %664 = vmatprep.mubr.bf16.mxu0 0
        %665 = vmatmul.mubr.bf16.gmra.mxu0 %v619
        %v666 = vpop.f32.mrf.mxu0
        %v667 = vadd.f32 0.0, %v666
        %v668 = vpop.f32.mrf.mxu0
        %v669 = vpop.f32.mrf.mxu0
        %v670 = vadd.f32 0.0, %v669
        %v671 = vpop.f32.mrf.mxu0
        %672 = vdwg.mxu0
        %v673 = vpack.c.bf16 %v662, %v659
        %v674 = vpack.c.bf16 %v670, %v667
        %v675 = vld [vmem:[%s4] sm:$0xf]
        %v676 = vld [vmem:[%s4 + $0x4] sm:$0xf]
        %v679 = vunpack.c.l.b16 %v675
        %v680 = vunpack.c.l.b16 %v676
        %v681 = vpack.c.b16 %v680, %v679
        %683 = vmatprep.subr.bf16.mxu0 0
        %684 = vmatpush1.bf16.msra.mxu0 0
        %685 = vmatprep.subr.bf16.mxu0 0
        %686 = vmatpush1.bf16.msra.mxu0 0
        %687 = vmatprep.subr.bf16.mxu0 0
        %688 = vmatpush1.bf16.msra.mxu0 0
        %689 = vmatprep.subr.bf16.mxu0 0
        %690 = vmatpush1.bf16.msra.mxu0 0
        %691 = vmatprep.subr.bf16.mxu0 0
        %692 = vmatpush1.bf16.msra.mxu0 0
        %693 = vmatprep.subr.bf16.mxu0 0
        %694 = vmatpush1.bf16.msra.mxu0 0
        %695 = vmatprep.subr.bf16.mxu0 0
        %696 = vmatpush1.bf16.msra.mxu0 0
        %697 = vmatprep.subr.bf16.mxu0 0
        %698 = vmatpush1.bf16.msra.mxu0 %v681
        %699 = vmatprep.subr.bf16.mxu0 0
        %700 = vmatpush2.bf16.msra.mxu0 0
        %701 = vmatprep.subr.bf16.mxu0 0
        %702 = vmatpush2.bf16.msra.mxu0 0
        %703 = vmatprep.subr.bf16.mxu0 0
        %704 = vmatpush2.bf16.msra.mxu0 0
        %705 = vmatprep.subr.bf16.mxu0 0
        %706 = vmatpush2.bf16.msra.mxu0 0
        %707 = vmatprep.subr.bf16.mxu0 0
        %708 = vmatpush2.bf16.msra.mxu0 0
        %709 = vmatprep.subr.bf16.mxu0 0
        %710 = vmatpush2.bf16.msra.mxu0 0
        %711 = vmatprep.subr.bf16.mxu0 0
        %712 = vmatpush2.bf16.msra.mxu0 0
        %713 = vmatprep.subr.bf16.mxu0 0
        %714 = vmatpush2.bf16.msra.mxu0 0
        %715 = vmatprep.mubr.bf16.mxu0 0
        %716 = vmatmul.mubr.bf16.gmra.mxu0 %v622
        %v717 = vpop.f32.mrf.mxu0
        %v718 = vadd.f32 0.0, %v717
        %v719 = vpop.f32.mrf.mxu0
        %v720 = vpop.f32.mrf.mxu0
        %v721 = vadd.f32 0.0, %v720
        %v722 = vpop.f32.mrf.mxu0
        %723 = vdwg.mxu0
        %v724 = vpack.c.bf16 %v721, %v718
        %v725 = vld [vmem:[#allocation2] sm:$0xf]
        %v726 = vld [vmem:[#allocation2 + $0x4] sm:$0xf]
        %v727 = vld [vmem:[#allocation2 + $0x8] sm:$0xf]
        %v728 = vld [vmem:[#allocation2 + $0xc] sm:$0xf]
        %v729 = vld [vmem:[#allocation2 + $0x10] sm:$0xf]
        %v730 = vld [vmem:[#allocation2 + $0x14] sm:$0xf]
        %v731 = vld [vmem:[#allocation2 + $0x18] sm:$0xf]
        %v732 = vld [vmem:[#allocation2 + $0x1c] sm:$0xf]
        %v741 = vunpack.c.l.b16 %v725
        %v742 = vunpack.c.l.b16 %v726
        %v743 = vunpack.c.l.b16 %v727
        %v744 = vunpack.c.l.b16 %v728
        %v745 = vunpack.c.l.b16 %v729
        %v746 = vunpack.c.l.b16 %v730
        %v747 = vunpack.c.l.b16 %v731
        %v748 = vunpack.c.l.b16 %v732
        %v749 = vpack.c.b16 %v742, %v741
        %v750 = vpack.c.b16 %v744, %v743
        %v751 = vpack.c.b16 %v746, %v745
        %v752 = vpack.c.b16 %v748, %v747
        %v754 = vsel %vm614, %v749, 0
        %v757 = vsel %vm614, %v750, 0
        %v760 = vsel %vm614, %v751, 0
        %v763 = vsel %vm614, %v752, 0
        %765 = vmatprep.subr.bf16.mxu0 0
        %766 = vmatpush1.bf16.msra.mxu0 0
        %767 = vmatprep.subr.bf16.mxu0 0
        %768 = vmatpush1.bf16.msra.mxu0 0
        %769 = vmatprep.subr.bf16.mxu0 0
        %770 = vmatpush1.bf16.msra.mxu0 0
        %771 = vmatprep.subr.bf16.mxu0 0
        %772 = vmatpush1.bf16.msra.mxu0 0
        %773 = vmatprep.subr.bf16.mxu0 0
        %774 = vmatpush1.bf16.msra.mxu0 0
        %775 = vmatprep.subr.bf16.mxu0 0
        %776 = vmatpush1.bf16.msra.mxu0 0
        %777 = vmatprep.subr.bf16.mxu0 0
        %778 = vmatpush1.bf16.msra.mxu0 0
        %779 = vmatprep.subr.bf16.mxu0 0
        %780 = vmatpush1.bf16.msra.mxu0 %v673
        %781 = vmatprep.subr.bf16.mxu0 0
        %782 = vmatpush2.bf16.msra.mxu0 0
        %783 = vmatprep.subr.bf16.mxu0 0
        %784 = vmatpush2.bf16.msra.mxu0 0
        %785 = vmatprep.subr.bf16.mxu0 0
        %786 = vmatpush2.bf16.msra.mxu0 0
        %787 = vmatprep.subr.bf16.mxu0 0
        %788 = vmatpush2.bf16.msra.mxu0 0
        %789 = vmatprep.subr.bf16.mxu0 0
        %790 = vmatpush2.bf16.msra.mxu0 0
        %791 = vmatprep.subr.bf16.mxu0 0
        %792 = vmatpush2.bf16.msra.mxu0 0
        %793 = vmatprep.subr.bf16.mxu0 0
        %794 = vmatpush2.bf16.msra.mxu0 0
        %795 = vmatprep.subr.bf16.mxu0 0
        %796 = vmatpush2.bf16.msra.mxu0 0
        %797 = vmatprep.mubr.bf16.mxu0 0
        %798 = vmatmul.mubr.bf16.gmra.mxu0 %v754
        %v799 = vpop.f32.mrf.mxu0
        %v800 = vadd.f32 0.0, %v799
        %v801 = vpop.f32.mrf.mxu0
        %v802 = vpop.f32.mrf.mxu0
        %v803 = vadd.f32 0.0, %v802
        %v804 = vpop.f32.mrf.mxu0
        %805 = vmatprep.mubr.bf16.mxu0 0
        %806 = vmatmul.mubr.bf16.gmra.mxu0 %v757
        %v807 = vpop.f32.mrf.mxu0
        %v808 = vadd.f32 0.0, %v807
        %v809 = vpop.f32.mrf.mxu0
        %v810 = vpop.f32.mrf.mxu0
        %v811 = vadd.f32 0.0, %v810
        %v812 = vpop.f32.mrf.mxu0
        %813 = vmatprep.mubr.bf16.mxu0 0
        %814 = vmatmul.mubr.bf16.gmra.mxu0 %v760
        %v815 = vpop.f32.mrf.mxu0
        %v816 = vadd.f32 0.0, %v815
        %v817 = vpop.f32.mrf.mxu0
        %v818 = vpop.f32.mrf.mxu0
        %v819 = vadd.f32 0.0, %v818
        %v820 = vpop.f32.mrf.mxu0
        %821 = vmatprep.mubr.bf16.mxu0 0
        %822 = vmatmul.mubr.bf16.gmra.mxu0 %v763
        %v823 = vpop.f32.mrf.mxu0
        %v824 = vadd.f32 0.0, %v823
        %v825 = vpop.f32.mrf.mxu0
        %v826 = vpop.f32.mrf.mxu0
        %v827 = vadd.f32 0.0, %v826
        %v828 = vpop.f32.mrf.mxu0
        %829 = vdwg.mxu0
        %v830 = vld [vmem:[#allocation3] sm:$0xff]
        %v831 = vld [vmem:[#allocation3 + $0x8] sm:$0xff]
        %v832 = vld [vmem:[#allocation3 + $0x10] sm:$0xff]
        %v833 = vld [vmem:[#allocation3 + $0x18] sm:$0xff]
        %v834 = vld [vmem:[#allocation3 + $0x20] sm:$0xff]
        %v835 = vld [vmem:[#allocation3 + $0x28] sm:$0xff]
        %v836 = vld [vmem:[#allocation3 + $0x30] sm:$0xff]
        %v837 = vld [vmem:[#allocation3 + $0x38] sm:$0xff]
        %v838 = vsel %vm614, %v800, -inf
        %839 = vmax.xlane.f32.xlu0 %v838
        %v840 = vpop.xlane.xlu0 %839
        %v841 = vsel %vm614, %v803, -inf
        %842 = vmax.xlane.f32.xlu0 %v841
        %v843 = vpop.xlane.xlu0 %842
        %v844 = vsel %vm614, %v808, -inf
        %845 = vmax.xlane.f32.xlu0 %v844
        %v846 = vpop.xlane.xlu0 %845
        %v847 = vsel %vm614, %v811, -inf
        %848 = vmax.xlane.f32.xlu0 %v847
        %v849 = vpop.xlane.xlu0 %848
        %v850 = vsel %vm614, %v816, -inf
        %851 = vmax.xlane.f32.xlu0 %v850
        %v852 = vpop.xlane.xlu0 %851
        %v853 = vsel %vm614, %v819, -inf
        %854 = vmax.xlane.f32.xlu0 %v853
        %v855 = vpop.xlane.xlu0 %854
        %v856 = vsel %vm614, %v824, -inf
        %857 = vmax.xlane.f32.xlu0 %v856
        %v858 = vpop.xlane.xlu0 %857
        %v859 = vsel %vm614, %v827, -inf
        %860 = vmax.xlane.f32.xlu0 %v859
        %v861 = vpop.xlane.xlu0 %860
        %v862 = vmax.f32 %v830, %v840
        %v863 = vmax.f32 %v831, %v843
        %v864 = vmax.f32 %v832, %v846
        %v865 = vmax.f32 %v833, %v849
        %v866 = vmax.f32 %v834, %v852
        %v867 = vmax.f32 %v835, %v855
        %v868 = vmax.f32 %v836, %v858
        %v869 = vmax.f32 %v837, %v861
        %v870 = vsub.f32 %v830, %v862
        %v871 = vsub.f32 %v831, %v863
        %v872 = vsub.f32 %v832, %v864
        %v873 = vsub.f32 %v833, %v865
        %v874 = vsub.f32 %v834, %v866
        %v875 = vsub.f32 %v835, %v867
        %v876 = vsub.f32 %v836, %v868
        %v877 = vsub.f32 %v837, %v869
        %v878 = vmul.f32 %v870, 1.442695
        %v879 = vpow.pop %v878
        %v880 = vmul.f32 %v871, 1.442695
        %v881 = vpow.pop %v880
        %v882 = vmul.f32 %v872, 1.442695
        %v883 = vpow.pop %v882
        %v884 = vmul.f32 %v873, 1.442695
        %v885 = vpow.pop %v884
        %v886 = vmul.f32 %v874, 1.442695
        %v887 = vpow.pop %v886
        %v888 = vmul.f32 %v875, 1.442695
        %v889 = vpow.pop %v888
        %v890 = vmul.f32 %v876, 1.442695
        %v891 = vpow.pop %v890
        %v892 = vmul.f32 %v877, 1.442695
        %v893 = vpow.pop %v892
        %895 = vset.pattern.permute.xlu0 0
        %896 = vperm.xlu0 %895, %v862
        %v897 = vpop.permute.xlu0 %896
        %900 = vset.pattern.permute.xlu0 0
        %901 = vperm.xlu0 %900, %v863
        %v902 = vpop.permute.xlu0 %901
        %905 = vset.pattern.permute.xlu0 0
        %906 = vperm.xlu0 %905, %v864
        %v907 = vpop.permute.xlu0 %906
        %910 = vset.pattern.permute.xlu0 0
        %911 = vperm.xlu0 %910, %v865
        %v912 = vpop.permute.xlu0 %911
        %915 = vset.pattern.permute.xlu0 0
        %916 = vperm.xlu0 %915, %v866
        %v917 = vpop.permute.xlu0 %916
        %920 = vset.pattern.permute.xlu0 0
        %921 = vperm.xlu0 %920, %v867
        %v922 = vpop.permute.xlu0 %921
        %925 = vset.pattern.permute.xlu0 0
        %926 = vperm.xlu0 %925, %v868
        %v927 = vpop.permute.xlu0 %926
        %930 = vset.pattern.permute.xlu0 0
        %931 = vperm.xlu0 %930, %v869
        %v932 = vpop.permute.xlu0 %931
        %v934 = vsub.f32 %v800, %v897
        %v935 = vsub.f32 %v803, %v902
        %v936 = vsub.f32 %v808, %v907
        %v937 = vsub.f32 %v811, %v912
        %v938 = vsub.f32 %v816, %v917
        %v939 = vsub.f32 %v819, %v922
        %v940 = vsub.f32 %v824, %v927
        %v941 = vsub.f32 %v827, %v932
        %v942 = vmul.f32 %v934, 1.442695
        %v943 = vpow.pop %v942
        %v944 = vmul.f32 %v935, 1.442695
        %v945 = vpow.pop %v944
        %v946 = vmul.f32 %v936, 1.442695
        %v947 = vpow.pop %v946
        %v948 = vmul.f32 %v937, 1.442695
        %v949 = vpow.pop %v948
        %v950 = vmul.f32 %v938, 1.442695
        %v951 = vpow.pop %v950
        %v952 = vmul.f32 %v939, 1.442695
        %v953 = vpow.pop %v952
        %v954 = vmul.f32 %v940, 1.442695
        %v955 = vpow.pop %v954
        %v956 = vmul.f32 %v941, 1.442695
        %v957 = vpow.pop %v956
        %v958 = vld [vmem:[#allocation4] sm:$0xff]
        %v959 = vld [vmem:[#allocation4 + $0x8] sm:$0xff]
        %v960 = vld [vmem:[#allocation4 + $0x10] sm:$0xff]
        %v961 = vld [vmem:[#allocation4 + $0x18] sm:$0xff]
        %v962 = vld [vmem:[#allocation4 + $0x20] sm:$0xff]
        %v963 = vld [vmem:[#allocation4 + $0x28] sm:$0xff]
        %v964 = vld [vmem:[#allocation4 + $0x30] sm:$0xff]
        %v965 = vld [vmem:[#allocation4 + $0x38] sm:$0xff]
        %v966 = vmul.f32 %v879, %v958
        %v967 = vmul.f32 %v881, %v959
        %v968 = vmul.f32 %v883, %v960
        %v969 = vmul.f32 %v885, %v961
        %v970 = vmul.f32 %v887, %v962
        %v971 = vmul.f32 %v889, %v963
        %v972 = vmul.f32 %v891, %v964
        %v973 = vmul.f32 %v893, %v965
        %v974 = vsel %vm614, %v943, 0.0
        %975 = vadd.xlane.f32.xlu0 %v974
        %v976 = vpop.xlane.xlu0 %975
        %v977 = vsel %vm614, %v945, 0.0
        %978 = vadd.xlane.f32.xlu0 %v977
        %v979 = vpop.xlane.xlu0 %978
        %v980 = vsel %vm614, %v947, 0.0
        %981 = vadd.xlane.f32.xlu0 %v980
        %v982 = vpop.xlane.xlu0 %981
        %v983 = vsel %vm614, %v949, 0.0
        %984 = vadd.xlane.f32.xlu0 %v983
        %v985 = vpop.xlane.xlu0 %984
        %v986 = vsel %vm614, %v951, 0.0
        %987 = vadd.xlane.f32.xlu0 %v986
        %v988 = vpop.xlane.xlu0 %987
        %v989 = vsel %vm614, %v953, 0.0
        %990 = vadd.xlane.f32.xlu0 %v989
        %v991 = vpop.xlane.xlu0 %990
        %v992 = vsel %vm614, %v955, 0.0
        %993 = vadd.xlane.f32.xlu0 %v992
        %v994 = vpop.xlane.xlu0 %993
        %v995 = vsel %vm614, %v957, 0.0
        %996 = vadd.xlane.f32.xlu0 %v995
        %v997 = vpop.xlane.xlu0 %996
        %v998 = vadd.f32 %v966, %v976
        %v999 = vadd.f32 %v967, %v979
        %v1000 = vadd.f32 %v968, %v982
        %v1001 = vadd.f32 %v969, %v985
        %v1002 = vadd.f32 %v970, %v988
        %v1003 = vadd.f32 %v971, %v991
        %v1004 = vadd.f32 %v972, %v994
        %v1005 = vadd.f32 %v973, %v997
        %vm1006 = vcmask 7168
        %1007 = vst.msk [vmem:[#allocation4] sm:$0xff] %vm1006, %v998
        %1008 = vst.msk [vmem:[#allocation4 + $0x8] sm:$0xff] %vm1006, %v999
        %1009 = vst.msk [vmem:[#allocation4 + $0x10] sm:$0xff] %vm1006, %v1000
        %1010 = vst.msk [vmem:[#allocation4 + $0x18] sm:$0xff] %vm1006, %v1001
        %1011 = vst.msk [vmem:[#allocation4 + $0x20] sm:$0xff] %vm1006, %v1002
        %1012 = vst.msk [vmem:[#allocation4 + $0x28] sm:$0xff] %vm1006, %v1003
        %1013 = vst.msk [vmem:[#allocation4 + $0x30] sm:$0xff] %vm1006, %v1004
        %1014 = vst.msk [vmem:[#allocation4 + $0x38] sm:$0xff] %vm1006, %v1005
        %v1015 = vld [vmem:[#allocation5] sm:$0xff]
        %v1016 = vld [vmem:[#allocation5 + $0x8] sm:$0xff]
        %v1017 = vld [vmem:[#allocation5 + $0x10] sm:$0xff]
        %v1018 = vld [vmem:[#allocation5 + $0x18] sm:$0xff]
        %v1019 = vld [vmem:[#allocation5 + $0x20] sm:$0xff]
        %v1020 = vld [vmem:[#allocation5 + $0x28] sm:$0xff]
        %v1021 = vld [vmem:[#allocation5 + $0x30] sm:$0xff]
        %v1022 = vld [vmem:[#allocation5 + $0x38] sm:$0xff]
        %1024 = vset.pattern.permute.xlu0 0
        %1025 = vperm.xlu0 %1024, %v879
        %v1026 = vpop.permute.xlu0 %1025
        %1029 = vset.pattern.permute.xlu0 0
        %1030 = vperm.xlu0 %1029, %v881
        %v1031 = vpop.permute.xlu0 %1030
        %1034 = vset.pattern.permute.xlu0 0
        %1035 = vperm.xlu0 %1034, %v883
        %v1036 = vpop.permute.xlu0 %1035
        %1039 = vset.pattern.permute.xlu0 0
        %1040 = vperm.xlu0 %1039, %v885
        %v1041 = vpop.permute.xlu0 %1040
        %1044 = vset.pattern.permute.xlu0 0
        %1045 = vperm.xlu0 %1044, %v887
        %v1046 = vpop.permute.xlu0 %1045
        %1049 = vset.pattern.permute.xlu0 0
        %1050 = vperm.xlu0 %1049, %v889
        %v1051 = vpop.permute.xlu0 %1050
        %1054 = vset.pattern.permute.xlu0 0
        %1055 = vperm.xlu0 %1054, %v891
        %v1056 = vpop.permute.xlu0 %1055
        %1059 = vset.pattern.permute.xlu0 0
        %1060 = vperm.xlu0 %1059, %v893
        %v1061 = vpop.permute.xlu0 %1060
        %v1063 = vmul.f32 %v1026, %v1015
        %v1064 = vmul.f32 %v1031, %v1016
        %v1065 = vmul.f32 %v1036, %v1017
        %v1066 = vmul.f32 %v1041, %v1018
        %v1067 = vmul.f32 %v1046, %v1019
        %v1068 = vmul.f32 %v1051, %v1020
        %v1069 = vmul.f32 %v1056, %v1021
        %v1070 = vmul.f32 %v1061, %v1022
        %v1071 = vpack.c.bf16 %v945, %v943
        %v1072 = vpack.c.bf16 %v949, %v947
        %v1073 = vpack.c.bf16 %v953, %v951
        %v1074 = vpack.c.bf16 %v957, %v955
        %v1076 = vsel %vm614, %v1071, 0
        %v1079 = vsel %vm614, %v1072, 0
        %v1082 = vsel %vm614, %v1073, 0
        %v1085 = vsel %vm614, %v1074, 0
        %1087 = vmatprep.subr.bf16.mxu0 0
        %1088 = vmatpush1.bf16.msra.mxu0 0
        %1089 = vmatprep.subr.bf16.mxu0 0
        %1090 = vmatpush1.bf16.msra.mxu0 0
        %1091 = vmatprep.subr.bf16.mxu0 0
        %1092 = vmatpush1.bf16.msra.mxu0 0
        %1093 = vmatprep.subr.bf16.mxu0 0
        %1094 = vmatpush1.bf16.msra.mxu0 0
        %1095 = vmatprep.subr.bf16.mxu0 0
        %1096 = vmatpush1.bf16.msra.mxu0 0
        %1097 = vmatprep.subr.bf16.mxu0 0
        %1098 = vmatpush1.bf16.msra.mxu0 0
        %1099 = vmatprep.subr.bf16.mxu0 0
        %1100 = vmatpush1.bf16.msra.mxu0 0
        %1101 = vmatprep.subr.bf16.mxu0 0
        %1102 = vmatpush1.bf16.msra.mxu0 %v724
        %1103 = vmatprep.subr.bf16.mxu0 0
        %1104 = vmatpush2.bf16.msra.mxu0 0
        %1105 = vmatprep.subr.bf16.mxu0 0
        %1106 = vmatpush2.bf16.msra.mxu0 0
        %1107 = vmatprep.subr.bf16.mxu0 0
        %1108 = vmatpush2.bf16.msra.mxu0 0
        %1109 = vmatprep.subr.bf16.mxu0 0
        %1110 = vmatpush2.bf16.msra.mxu0 0
        %1111 = vmatprep.subr.bf16.mxu0 0
        %1112 = vmatpush2.bf16.msra.mxu0 0
        %1113 = vmatprep.subr.bf16.mxu0 0
        %1114 = vmatpush2.bf16.msra.mxu0 0
        %1115 = vmatprep.subr.bf16.mxu0 0
        %1116 = vmatpush2.bf16.msra.mxu0 0
        %1117 = vmatprep.subr.bf16.mxu0 0
        %1118 = vmatpush2.bf16.msra.mxu0 0
        %1119 = vmatprep.mubr.bf16.mxu0 0
        %1120 = vmatmul.mubr.bf16.gmra.mxu0 %v1076
        %v1121 = vpop.f32.mrf.mxu0
        %v1122 = vadd.f32 0.0, %v1121
        %v1123 = vpop.f32.mrf.mxu0
        %v1124 = vpop.f32.mrf.mxu0
        %v1125 = vadd.f32 0.0, %v1124
        %v1126 = vpop.f32.mrf.mxu0
        %1127 = vmatprep.mubr.bf16.mxu0 0
        %1128 = vmatmul.mubr.bf16.gmra.mxu0 %v1079
        %v1129 = vpop.f32.mrf.mxu0
        %v1130 = vadd.f32 0.0, %v1129
        %v1131 = vpop.f32.mrf.mxu0
        %v1132 = vpop.f32.mrf.mxu0
        %v1133 = vadd.f32 0.0, %v1132
        %v1134 = vpop.f32.mrf.mxu0
        %1135 = vmatprep.mubr.bf16.mxu0 0
        %1136 = vmatmul.mubr.bf16.gmra.mxu0 %v1082
        %v1137 = vpop.f32.mrf.mxu0
        %v1138 = vadd.f32 0.0, %v1137
        %v1139 = vpop.f32.mrf.mxu0
        %v1140 = vpop.f32.mrf.mxu0
        %v1141 = vadd.f32 0.0, %v1140
        %v1142 = vpop.f32.mrf.mxu0
        %1143 = vmatprep.mubr.bf16.mxu0 0
        %1144 = vmatmul.mubr.bf16.gmra.mxu0 %v1085
        %v1145 = vpop.f32.mrf.mxu0
        %v1146 = vadd.f32 0.0, %v1145
        %v1147 = vpop.f32.mrf.mxu0
        %v1148 = vpop.f32.mrf.mxu0
        %v1149 = vadd.f32 0.0, %v1148
        %v1150 = vpop.f32.mrf.mxu0
        %1151 = vdwg.mxu0
        %v1152 = vadd.f32 %v1063, %v1122
        %v1153 = vadd.f32 %v1064, %v1125
        %v1154 = vadd.f32 %v1065, %v1130
        %v1155 = vadd.f32 %v1066, %v1133
        %v1156 = vadd.f32 %v1067, %v1138
        %v1157 = vadd.f32 %v1068, %v1141
        %v1158 = vadd.f32 %v1069, %v1146
        %v1159 = vadd.f32 %v1070, %v1149
        %1160 = vst.msk [vmem:[#allocation5] sm:$0xff] %vm614, %v1152
        %1161 = vst.msk [vmem:[#allocation5 + $0x8] sm:$0xff] %vm614, %v1153
        %1162 = vst.msk [vmem:[#allocation5 + $0x10] sm:$0xff] %vm614, %v1154
        %1163 = vst.msk [vmem:[#allocation5 + $0x18] sm:$0xff] %vm614, %v1155
        %1164 = vst.msk [vmem:[#allocation5 + $0x20] sm:$0xff] %vm614, %v1156
        %1165 = vst.msk [vmem:[#allocation5 + $0x28] sm:$0xff] %vm614, %v1157
        %1166 = vst.msk [vmem:[#allocation5 + $0x30] sm:$0xff] %vm614, %v1158
        %1167 = vst.msk [vmem:[#allocation5 + $0x38] sm:$0xff] %vm614, %v1159
        %1168 = vst.msk [vmem:[#allocation3] sm:$0xff] %vm1006, %v862
        %1169 = vst.msk [vmem:[#allocation3 + $0x8] sm:$0xff] %vm1006, %v863
        %1170 = vst.msk [vmem:[#allocation3 + $0x10] sm:$0xff] %vm1006, %v864
        %1171 = vst.msk [vmem:[#allocation3 + $0x18] sm:$0xff] %vm1006, %v865
        %1172 = vst.msk [vmem:[#allocation3 + $0x20] sm:$0xff] %vm1006, %v866
        %1173 = vst.msk [vmem:[#allocation3 + $0x28] sm:$0xff] %vm1006, %v867
        %1174 = vst.msk [vmem:[#allocation3 + $0x30] sm:$0xff] %vm1006, %v868
        %1175 = vst.msk [vmem:[#allocation3 + $0x38] sm:$0xff] %vm1006, %v869
        %s1176 = scalar_lea.vmem [#allocation2], 32
        %v1177 = vld [vmem:[%s1176] sm:$0xf]
        %v1178 = vld [vmem:[%s1176 + $0x4] sm:$0xf]
        %v1179 = vld [vmem:[%s1176 + $0x8] sm:$0xf]
        %v1180 = vld [vmem:[%s1176 + $0xc] sm:$0xf]
        %v1181 = vld [vmem:[%s1176 + $0x10] sm:$0xf]
        %v1182 = vld [vmem:[%s1176 + $0x14] sm:$0xf]
        %v1183 = vld [vmem:[%s1176 + $0x18] sm:$0xf]
        %v1184 = vld [vmem:[%s1176 + $0x1c] sm:$0xf]
        %v1193 = vunpack.c.l.b16 %v1177
        %v1194 = vunpack.c.l.b16 %v1178
        %v1195 = vunpack.c.l.b16 %v1179
        %v1196 = vunpack.c.l.b16 %v1180
        %v1197 = vunpack.c.l.b16 %v1181
        %v1198 = vunpack.c.l.b16 %v1182
        %v1199 = vunpack.c.l.b16 %v1183
        %v1200 = vunpack.c.l.b16 %v1184
        %v1201 = vpack.c.b16 %v1194, %v1193
        %v1202 = vpack.c.b16 %v1196, %v1195
        %v1203 = vpack.c.b16 %v1198, %v1197
        %v1204 = vpack.c.b16 %v1200, %v1199
        %v1206 = vsel %vm614, %v1201, 0
        %v1209 = vsel %vm614, %v1202, 0
        %v1212 = vsel %vm614, %v1203, 0
        %v1215 = vsel %vm614, %v1204, 0
        %1217 = vmatprep.subr.bf16.mxu0 0
        %1218 = vmatpush1.bf16.msra.mxu0 0
        %1219 = vmatprep.subr.bf16.mxu0 0
        %1220 = vmatpush1.bf16.msra.mxu0 0
        %1221 = vmatprep.subr.bf16.mxu0 0
        %1222 = vmatpush1.bf16.msra.mxu0 0
        %1223 = vmatprep.subr.bf16.mxu0 0
        %1224 = vmatpush1.bf16.msra.mxu0 0
        %1225 = vmatprep.subr.bf16.mxu0 0
        %1226 = vmatpush1.bf16.msra.mxu0 0
        %1227 = vmatprep.subr.bf16.mxu0 0
        %1228 = vmatpush1.bf16.msra.mxu0 0
        %1229 = vmatprep.subr.bf16.mxu0 0
        %1230 = vmatpush1.bf16.msra.mxu0 0
        %1231 = vmatprep.subr.bf16.mxu0 0
        %1232 = vmatpush1.bf16.msra.mxu0 %v674
        %1233 = vmatprep.subr.bf16.mxu0 0
        %1234 = vmatpush2.bf16.msra.mxu0 0
        %1235 = vmatprep.subr.bf16.mxu0 0
        %1236 = vmatpush2.bf16.msra.mxu0 0
        %1237 = vmatprep.subr.bf16.mxu0 0
        %1238 = vmatpush2.bf16.msra.mxu0 0
        %1239 = vmatprep.subr.bf16.mxu0 0
        %1240 = vmatpush2.bf16.msra.mxu0 0
        %1241 = vmatprep.subr.bf16.mxu0 0
        %1242 = vmatpush2.bf16.msra.mxu0 0
        %1243 = vmatprep.subr.bf16.mxu0 0
        %1244 = vmatpush2.bf16.msra.mxu0 0
        %1245 = vmatprep.subr.bf16.mxu0 0
        %1246 = vmatpush2.bf16.msra.mxu0 0
        %1247 = vmatprep.subr.bf16.mxu0 0
        %1248 = vmatpush2.bf16.msra.mxu0 0
        %1249 = vmatprep.mubr.bf16.mxu0 0
        %1250 = vmatmul.mubr.bf16.gmra.mxu0 %v1206
        %v1251 = vpop.f32.mrf.mxu0
        %v1252 = vadd.f32 0.0, %v1251
        %v1253 = vpop.f32.mrf.mxu0
        %v1254 = vpop.f32.mrf.mxu0
        %v1255 = vadd.f32 0.0, %v1254
        %v1256 = vpop.f32.mrf.mxu0
        %1257 = vmatprep.mubr.bf16.mxu0 0
        %1258 = vmatmul.mubr.bf16.gmra.mxu0 %v1209
        %v1259 = vpop.f32.mrf.mxu0
        %v1260 = vadd.f32 0.0, %v1259
        %v1261 = vpop.f32.mrf.mxu0
        %v1262 = vpop.f32.mrf.mxu0
        %v1263 = vadd.f32 0.0, %v1262
        %v1264 = vpop.f32.mrf.mxu0
        %1265 = vmatprep.mubr.bf16.mxu0 0
        %1266 = vmatmul.mubr.bf16.gmra.mxu0 %v1212
        %v1267 = vpop.f32.mrf.mxu0
        %v1268 = vadd.f32 0.0, %v1267
        %v1269 = vpop.f32.mrf.mxu0
        %v1270 = vpop.f32.mrf.mxu0
        %v1271 = vadd.f32 0.0, %v1270
        %v1272 = vpop.f32.mrf.mxu0
        %1273 = vmatprep.mubr.bf16.mxu0 0
        %1274 = vmatmul.mubr.bf16.gmra.mxu0 %v1215
        %v1275 = vpop.f32.mrf.mxu0
        %v1276 = vadd.f32 0.0, %v1275
        %v1277 = vpop.f32.mrf.mxu0
        %v1278 = vpop.f32.mrf.mxu0
        %v1279 = vadd.f32 0.0, %v1278
        %v1280 = vpop.f32.mrf.mxu0
        %1281 = vdwg.mxu0
        %s1282 = scalar_lea.vmem [#allocation3], 64
        %v1283 = vld [vmem:[%s1282] sm:$0xff]
        %v1284 = vld [vmem:[%s1282 + $0x8] sm:$0xff]
        %v1285 = vld [vmem:[%s1282 + $0x10] sm:$0xff]
        %v1286 = vld [vmem:[%s1282 + $0x18] sm:$0xff]
        %v1287 = vld [vmem:[%s1282 + $0x20] sm:$0xff]
        %v1288 = vld [vmem:[%s1282 + $0x28] sm:$0xff]
        %v1289 = vld [vmem:[%s1282 + $0x30] sm:$0xff]
        %v1290 = vld [vmem:[%s1282 + $0x38] sm:$0xff]
        %v1291 = vsel %vm614, %v1252, -inf
        %1292 = vmax.xlane.f32.xlu0 %v1291
        %v1293 = vpop.xlane.xlu0 %1292
        %v1294 = vsel %vm614, %v1255, -inf
        %1295 = vmax.xlane.f32.xlu0 %v1294
        %v1296 = vpop.xlane.xlu0 %1295
        %v1297 = vsel %vm614, %v1260, -inf
        %1298 = vmax.xlane.f32.xlu0 %v1297
        %v1299 = vpop.xlane.xlu0 %1298
        %v1300 = vsel %vm614, %v1263, -inf
        %1301 = vmax.xlane.f32.xlu0 %v1300
        %v1302 = vpop.xlane.xlu0 %1301
        %v1303 = vsel %vm614, %v1268, -inf
        %1304 = vmax.xlane.f32.xlu0 %v1303
        %v1305 = vpop.xlane.xlu0 %1304
        %v1306 = vsel %vm614, %v1271, -inf
        %1307 = vmax.xlane.f32.xlu0 %v1306
        %v1308 = vpop.xlane.xlu0 %1307
        %v1309 = vsel %vm614, %v1276, -inf
        %1310 = vmax.xlane.f32.xlu0 %v1309
        %v1311 = vpop.xlane.xlu0 %1310
        %v1312 = vsel %vm614, %v1279, -inf
        %1313 = vmax.xlane.f32.xlu0 %v1312
        %v1314 = vpop.xlane.xlu0 %1313
        %v1315 = vmax.f32 %v1283, %v1293
        %v1316 = vmax.f32 %v1284, %v1296
        %v1317 = vmax.f32 %v1285, %v1299
        %v1318 = vmax.f32 %v1286, %v1302
        %v1319 = vmax.f32 %v1287, %v1305
        %v1320 = vmax.f32 %v1288, %v1308
        %v1321 = vmax.f32 %v1289, %v1311
        %v1322 = vmax.f32 %v1290, %v1314
        %v1323 = vsub.f32 %v1283, %v1315
        %v1324 = vsub.f32 %v1284, %v1316
        %v1325 = vsub.f32 %v1285, %v1317
        %v1326 = vsub.f32 %v1286, %v1318
        %v1327 = vsub.f32 %v1287, %v1319
        %v1328 = vsub.f32 %v1288, %v1320
        %v1329 = vsub.f32 %v1289, %v1321
        %v1330 = vsub.f32 %v1290, %v1322
        %v1331 = vmul.f32 %v1323, 1.442695
        %v1332 = vpow.pop %v1331
        %v1333 = vmul.f32 %v1324, 1.442695
        %v1334 = vpow.pop %v1333
        %v1335 = vmul.f32 %v1325, 1.442695
        %v1336 = vpow.pop %v1335
        %v1337 = vmul.f32 %v1326, 1.442695
        %v1338 = vpow.pop %v1337
        %v1339 = vmul.f32 %v1327, 1.442695
        %v1340 = vpow.pop %v1339
        %v1341 = vmul.f32 %v1328, 1.442695
        %v1342 = vpow.pop %v1341
        %v1343 = vmul.f32 %v1329, 1.442695
        %v1344 = vpow.pop %v1343
        %v1345 = vmul.f32 %v1330, 1.442695
        %v1346 = vpow.pop %v1345
        %1348 = vset.pattern.permute.xlu0 0
        %1349 = vperm.xlu0 %1348, %v1315
        %v1350 = vpop.permute.xlu0 %1349
        %1353 = vset.pattern.permute.xlu0 0
        %1354 = vperm.xlu0 %1353, %v1316
        %v1355 = vpop.permute.xlu0 %1354
        %1358 = vset.pattern.permute.xlu0 0
        %1359 = vperm.xlu0 %1358, %v1317
        %v1360 = vpop.permute.xlu0 %1359
        %1363 = vset.pattern.permute.xlu0 0
        %1364 = vperm.xlu0 %1363, %v1318
        %v1365 = vpop.permute.xlu0 %1364
        %1368 = vset.pattern.permute.xlu0 0
        %1369 = vperm.xlu0 %1368, %v1319
        %v1370 = vpop.permute.xlu0 %1369
        %1373 = vset.pattern.permute.xlu0 0
        %1374 = vperm.xlu0 %1373, %v1320
        %v1375 = vpop.permute.xlu0 %1374
        %1378 = vset.pattern.permute.xlu0 0
        %1379 = vperm.xlu0 %1378, %v1321
        %v1380 = vpop.permute.xlu0 %1379
        %1383 = vset.pattern.permute.xlu0 0
        %1384 = vperm.xlu0 %1383, %v1322
        %v1385 = vpop.permute.xlu0 %1384
        %v1387 = vsub.f32 %v1252, %v1350
        %v1388 = vsub.f32 %v1255, %v1355
        %v1389 = vsub.f32 %v1260, %v1360
        %v1390 = vsub.f32 %v1263, %v1365
        %v1391 = vsub.f32 %v1268, %v1370
        %v1392 = vsub.f32 %v1271, %v1375
        %v1393 = vsub.f32 %v1276, %v1380
        %v1394 = vsub.f32 %v1279, %v1385
        %v1395 = vmul.f32 %v1387, 1.442695
        %v1396 = vpow.pop %v1395
        %v1397 = vmul.f32 %v1388, 1.442695
        %v1398 = vpow.pop %v1397
        %v1399 = vmul.f32 %v1389, 1.442695
        %v1400 = vpow.pop %v1399
        %v1401 = vmul.f32 %v1390, 1.442695
        %v1402 = vpow.pop %v1401
        %v1403 = vmul.f32 %v1391, 1.442695
        %v1404 = vpow.pop %v1403
        %v1405 = vmul.f32 %v1392, 1.442695
        %v1406 = vpow.pop %v1405
        %v1407 = vmul.f32 %v1393, 1.442695
        %v1408 = vpow.pop %v1407
        %v1409 = vmul.f32 %v1394, 1.442695
        %v1410 = vpow.pop %v1409
        %s1411 = scalar_lea.vmem [#allocation4], 64
        %v1412 = vld [vmem:[%s1411] sm:$0xff]
        %v1413 = vld [vmem:[%s1411 + $0x8] sm:$0xff]
        %v1414 = vld [vmem:[%s1411 + $0x10] sm:$0xff]
        %v1415 = vld [vmem:[%s1411 + $0x18] sm:$0xff]
        %v1416 = vld [vmem:[%s1411 + $0x20] sm:$0xff]
        %v1417 = vld [vmem:[%s1411 + $0x28] sm:$0xff]
        %v1418 = vld [vmem:[%s1411 + $0x30] sm:$0xff]
        %v1419 = vld [vmem:[%s1411 + $0x38] sm:$0xff]
        %v1420 = vmul.f32 %v1332, %v1412
        %v1421 = vmul.f32 %v1334, %v1413
        %v1422 = vmul.f32 %v1336, %v1414
        %v1423 = vmul.f32 %v1338, %v1415
        %v1424 = vmul.f32 %v1340, %v1416
        %v1425 = vmul.f32 %v1342, %v1417
        %v1426 = vmul.f32 %v1344, %v1418
        %v1427 = vmul.f32 %v1346, %v1419
        %v1428 = vsel %vm614, %v1396, 0.0
        %1429 = vadd.xlane.f32.xlu0 %v1428
        %v1430 = vpop.xlane.xlu0 %1429
        %v1431 = vsel %vm614, %v1398, 0.0
        %1432 = vadd.xlane.f32.xlu0 %v1431
        %v1433 = vpop.xlane.xlu0 %1432
        %v1434 = vsel %vm614, %v1400, 0.0
        %1435 = vadd.xlane.f32.xlu0 %v1434
        %v1436 = vpop.xlane.xlu0 %1435
        %v1437 = vsel %vm614, %v1402, 0.0
        %1438 = vadd.xlane.f32.xlu0 %v1437
        %v1439 = vpop.xlane.xlu0 %1438
        %v1440 = vsel %vm614, %v1404, 0.0
        %1441 = vadd.xlane.f32.xlu0 %v1440
        %v1442 = vpop.xlane.xlu0 %1441
        %v1443 = vsel %vm614, %v1406, 0.0
        %1444 = vadd.xlane.f32.xlu0 %v1443
        %v1445 = vpop.xlane.xlu0 %1444
        %v1446 = vsel %vm614, %v1408, 0.0
        %1447 = vadd.xlane.f32.xlu0 %v1446
        %v1448 = vpop.xlane.xlu0 %1447
        %v1449 = vsel %vm614, %v1410, 0.0
        %1450 = vadd.xlane.f32.xlu0 %v1449
        %v1451 = vpop.xlane.xlu0 %1450
        %v1452 = vadd.f32 %v1420, %v1430
        %v1453 = vadd.f32 %v1421, %v1433
        %v1454 = vadd.f32 %v1422, %v1436
        %v1455 = vadd.f32 %v1423, %v1439
        %v1456 = vadd.f32 %v1424, %v1442
        %v1457 = vadd.f32 %v1425, %v1445
        %v1458 = vadd.f32 %v1426, %v1448
        %v1459 = vadd.f32 %v1427, %v1451
        %1460 = vst.msk [vmem:[%s1411] sm:$0xff] %vm1006, %v1452
        %1461 = vst.msk [vmem:[%s1411 + $0x8] sm:$0xff] %vm1006, %v1453
        %1462 = vst.msk [vmem:[%s1411 + $0x10] sm:$0xff] %vm1006, %v1454
        %1463 = vst.msk [vmem:[%s1411 + $0x18] sm:$0xff] %vm1006, %v1455
        %1464 = vst.msk [vmem:[%s1411 + $0x20] sm:$0xff] %vm1006, %v1456
        %1465 = vst.msk [vmem:[%s1411 + $0x28] sm:$0xff] %vm1006, %v1457
        %1466 = vst.msk [vmem:[%s1411 + $0x30] sm:$0xff] %vm1006, %v1458
        %1467 = vst.msk [vmem:[%s1411 + $0x38] sm:$0xff] %vm1006, %v1459
        %s1468 = scalar_lea.vmem [#allocation5], 64
        %v1469 = vld [vmem:[%s1468] sm:$0xff]
        %v1470 = vld [vmem:[%s1468 + $0x8] sm:$0xff]
        %v1471 = vld [vmem:[%s1468 + $0x10] sm:$0xff]
        %v1472 = vld [vmem:[%s1468 + $0x18] sm:$0xff]
        %v1473 = vld [vmem:[%s1468 + $0x20] sm:$0xff]
        %v1474 = vld [vmem:[%s1468 + $0x28] sm:$0xff]
        %v1475 = vld [vmem:[%s1468 + $0x30] sm:$0xff]
        %v1476 = vld [vmem:[%s1468 + $0x38] sm:$0xff]
        %1478 = vset.pattern.permute.xlu0 0
        %1479 = vperm.xlu0 %1478, %v1332
        %v1480 = vpop.permute.xlu0 %1479
        %1483 = vset.pattern.permute.xlu0 0
        %1484 = vperm.xlu0 %1483, %v1334
        %v1485 = vpop.permute.xlu0 %1484
        %1488 = vset.pattern.permute.xlu0 0
        %1489 = vperm.xlu0 %1488, %v1336
        %v1490 = vpop.permute.xlu0 %1489
        %1493 = vset.pattern.permute.xlu0 0
        %1494 = vperm.xlu0 %1493, %v1338
        %v1495 = vpop.permute.xlu0 %1494
        %1498 = vset.pattern.permute.xlu0 0
        %1499 = vperm.xlu0 %1498, %v1340
        %v1500 = vpop.permute.xlu0 %1499
        %1503 = vset.pattern.permute.xlu0 0
        %1504 = vperm.xlu0 %1503, %v1342
        %v1505 = vpop.permute.xlu0 %1504
        %1508 = vset.pattern.permute.xlu0 0
        %1509 = vperm.xlu0 %1508, %v1344
        %v1510 = vpop.permute.xlu0 %1509
        %1513 = vset.pattern.permute.xlu0 0
        %1514 = vperm.xlu0 %1513, %v1346
        %v1515 = vpop.permute.xlu0 %1514
        %v1517 = vmul.f32 %v1480, %v1469
        %v1518 = vmul.f32 %v1485, %v1470
        %v1519 = vmul.f32 %v1490, %v1471
        %v1520 = vmul.f32 %v1495, %v1472
        %v1521 = vmul.f32 %v1500, %v1473
        %v1522 = vmul.f32 %v1505, %v1474
        %v1523 = vmul.f32 %v1510, %v1475
        %v1524 = vmul.f32 %v1515, %v1476
        %v1525 = vpack.c.bf16 %v1398, %v1396
        %v1526 = vpack.c.bf16 %v1402, %v1400
        %v1527 = vpack.c.bf16 %v1406, %v1404
        %v1528 = vpack.c.bf16 %v1410, %v1408
        %1530 = vrot.lane.b32.xlu0 %v724, 112
        %v1531 = vpop.permute.xlu0 %1530
        %v1534 = vsel %vm614, %v1525, 0
        %v1537 = vsel %vm614, %v1526, 0
        %v1540 = vsel %vm614, %v1527, 0
        %v1543 = vsel %vm614, %v1528, 0
        %1545 = vmatprep.subr.bf16.mxu0 0
        %1546 = vmatpush1.bf16.msra.mxu0 0
        %1547 = vmatprep.subr.bf16.mxu0 0
        %1548 = vmatpush1.bf16.msra.mxu0 0
        %1549 = vmatprep.subr.bf16.mxu0 0
        %1550 = vmatpush1.bf16.msra.mxu0 0
        %1551 = vmatprep.subr.bf16.mxu0 0
        %1552 = vmatpush1.bf16.msra.mxu0 0
        %1553 = vmatprep.subr.bf16.mxu0 0
        %1554 = vmatpush1.bf16.msra.mxu0 0
        %1555 = vmatprep.subr.bf16.mxu0 0
        %1556 = vmatpush1.bf16.msra.mxu0 0
        %1557 = vmatprep.subr.bf16.mxu0 0
        %1558 = vmatpush1.bf16.msra.mxu0 0
        %1559 = vmatprep.subr.bf16.mxu0 0
        %1560 = vmatpush1.bf16.msra.mxu0 %v1531
        %1561 = vmatprep.subr.bf16.mxu0 0
        %1562 = vmatpush2.bf16.msra.mxu0 0
        %1563 = vmatprep.subr.bf16.mxu0 0
        %1564 = vmatpush2.bf16.msra.mxu0 0
        %1565 = vmatprep.subr.bf16.mxu0 0
        %1566 = vmatpush2.bf16.msra.mxu0 0
        %1567 = vmatprep.subr.bf16.mxu0 0
        %1568 = vmatpush2.bf16.msra.mxu0 0
        %1569 = vmatprep.subr.bf16.mxu0 0
        %1570 = vmatpush2.bf16.msra.mxu0 0
        %1571 = vmatprep.subr.bf16.mxu0 0
        %1572 = vmatpush2.bf16.msra.mxu0 0
        %1573 = vmatprep.subr.bf16.mxu0 0
        %1574 = vmatpush2.bf16.msra.mxu0 0
        %1575 = vmatprep.subr.bf16.mxu0 0
        %1576 = vmatpush2.bf16.msra.mxu0 0
        %1577 = vmatprep.mubr.bf16.mxu0 0
        %1578 = vmatmul.mubr.bf16.gmra.mxu0 %v1534
        %v1579 = vpop.f32.mrf.mxu0
        %v1580 = vadd.f32 0.0, %v1579
        %v1581 = vpop.f32.mrf.mxu0
        %v1582 = vpop.f32.mrf.mxu0
        %v1583 = vadd.f32 0.0, %v1582
        %v1584 = vpop.f32.mrf.mxu0
        %1585 = vmatprep.mubr.bf16.mxu0 0
        %1586 = vmatmul.mubr.bf16.gmra.mxu0 %v1537
        %v1587 = vpop.f32.mrf.mxu0
        %v1588 = vadd.f32 0.0, %v1587
        %v1589 = vpop.f32.mrf.mxu0
        %v1590 = vpop.f32.mrf.mxu0
        %v1591 = vadd.f32 0.0, %v1590
        %v1592 = vpop.f32.mrf.mxu0
        %1593 = vmatprep.mubr.bf16.mxu0 0
        %1594 = vmatmul.mubr.bf16.gmra.mxu0 %v1540
        %v1595 = vpop.f32.mrf.mxu0
        %v1596 = vadd.f32 0.0, %v1595
        %v1597 = vpop.f32.mrf.mxu0
        %v1598 = vpop.f32.mrf.mxu0
        %v1599 = vadd.f32 0.0, %v1598
        %v1600 = vpop.f32.mrf.mxu0
        %1601 = vmatprep.mubr.bf16.mxu0 0
        %1602 = vmatmul.mubr.bf16.gmra.mxu0 %v1543
        %v1603 = vpop.f32.mrf.mxu0
        %v1604 = vadd.f32 0.0, %v1603
        %v1605 = vpop.f32.mrf.mxu0
        %v1606 = vpop.f32.mrf.mxu0
        %v1607 = vadd.f32 0.0, %v1606
        %v1608 = vpop.f32.mrf.mxu0
        %1609 = vdwg.mxu0
        %v1610 = vadd.f32 %v1517, %v1580
        %v1611 = vadd.f32 %v1518, %v1583
        %v1612 = vadd.f32 %v1519, %v1588
        %v1613 = vadd.f32 %v1520, %v1591
        %v1614 = vadd.f32 %v1521, %v1596
        %v1615 = vadd.f32 %v1522, %v1599
        %v1616 = vadd.f32 %v1523, %v1604
        %v1617 = vadd.f32 %v1524, %v1607
        %1618 = vst.msk [vmem:[%s1468] sm:$0xff] %vm614, %v1610
        %1619 = vst.msk [vmem:[%s1468 + $0x8] sm:$0xff] %vm614, %v1611
        %1620 = vst.msk [vmem:[%s1468 + $0x10] sm:$0xff] %vm614, %v1612
        %1621 = vst.msk [vmem:[%s1468 + $0x18] sm:$0xff] %vm614, %v1613
        %1622 = vst.msk [vmem:[%s1468 + $0x20] sm:$0xff] %vm614, %v1614
        %1623 = vst.msk [vmem:[%s1468 + $0x28] sm:$0xff] %vm614, %v1615
        %1624 = vst.msk [vmem:[%s1468 + $0x30] sm:$0xff] %vm614, %v1616
        %1625 = vst.msk [vmem:[%s1468 + $0x38] sm:$0xff] %vm614, %v1617
        %1626 = vst.msk [vmem:[%s1282] sm:$0xff] %vm1006, %v1315
        %1627 = vst.msk [vmem:[%s1282 + $0x8] sm:$0xff] %vm1006, %v1316
        %1628 = vst.msk [vmem:[%s1282 + $0x10] sm:$0xff] %vm1006, %v1317
        %1629 = vst.msk [vmem:[%s1282 + $0x18] sm:$0xff] %vm1006, %v1318
        %1630 = vst.msk [vmem:[%s1282 + $0x20] sm:$0xff] %vm1006, %v1319
        %1631 = vst.msk [vmem:[%s1282 + $0x28] sm:$0xff] %vm1006, %v1320
        %1632 = vst.msk [vmem:[%s1282 + $0x30] sm:$0xff] %vm1006, %v1321
        %1633 = vst.msk [vmem:[%s1282 + $0x38] sm:$0xff] %vm1006, %v1322
        // Predicated region
        $region53: #{attention_forward.3} parent=47 // pred_check
          %p1634 = pneg %p352
        $region54: #{attention_forward.3} parent=47 // pred_check_branch
          %1636 = sbr.rel (%p1634) target = $region56
        $region55: #{attention_forward.3} parent=47 // pred_region
          %v1637 = vld [vmem:[#allocation4] sm:$0xff]
          %v1638 = vld [vmem:[#allocation4 + $0x8] sm:$0xff]
          %v1639 = vld [vmem:[#allocation4 + $0x10] sm:$0xff]
          %v1640 = vld [vmem:[#allocation4 + $0x18] sm:$0xff]
          %v1641 = vld [vmem:[#allocation4 + $0x20] sm:$0xff]
          %v1642 = vld [vmem:[#allocation4 + $0x28] sm:$0xff]
          %v1643 = vld [vmem:[#allocation4 + $0x30] sm:$0xff]
          %v1644 = vld [vmem:[#allocation4 + $0x38] sm:$0xff]
          %v1645 = vrcp.pop %v1637
          %v1646 = vrcp.pop %v1638
          %v1647 = vrcp.pop %v1639
          %v1648 = vrcp.pop %v1640
          %v1649 = vrcp.pop %v1641
          %v1650 = vrcp.pop %v1642
          %v1651 = vrcp.pop %v1643
          %v1652 = vrcp.pop %v1644
          %v1653 = vld [vmem:[#allocation5] sm:$0xff]
          %v1654 = vld [vmem:[#allocation5 + $0x8] sm:$0xff]
          %v1655 = vld [vmem:[#allocation5 + $0x10] sm:$0xff]
          %v1656 = vld [vmem:[#allocation5 + $0x18] sm:$0xff]
          %v1657 = vld [vmem:[#allocation5 + $0x20] sm:$0xff]
          %v1658 = vld [vmem:[#allocation5 + $0x28] sm:$0xff]
          %v1659 = vld [vmem:[#allocation5 + $0x30] sm:$0xff]
          %v1660 = vld [vmem:[#allocation5 + $0x38] sm:$0xff]
          %1662 = vset.pattern.permute.xlu0 0
          %1663 = vperm.xlu0 %1662, %v1645
          %v1664 = vpop.permute.xlu0 %1663
          %1667 = vset.pattern.permute.xlu0 0
          %1668 = vperm.xlu0 %1667, %v1646
          %v1669 = vpop.permute.xlu0 %1668
          %1672 = vset.pattern.permute.xlu0 0
          %1673 = vperm.xlu0 %1672, %v1647
          %v1674 = vpop.permute.xlu0 %1673
          %1677 = vset.pattern.permute.xlu0 0
          %1678 = vperm.xlu0 %1677, %v1648
          %v1679 = vpop.permute.xlu0 %1678
          %1682 = vset.pattern.permute.xlu0 0
          %1683 = vperm.xlu0 %1682, %v1649
          %v1684 = vpop.permute.xlu0 %1683
          %1687 = vset.pattern.permute.xlu0 0
          %1688 = vperm.xlu0 %1687, %v1650
          %v1689 = vpop.permute.xlu0 %1688
          %1692 = vset.pattern.permute.xlu0 0
          %1693 = vperm.xlu0 %1692, %v1651
          %v1694 = vpop.permute.xlu0 %1693
          %1697 = vset.pattern.permute.xlu0 0
          %1698 = vperm.xlu0 %1697, %v1652
          %v1699 = vpop.permute.xlu0 %1698
          %v1701 = vmul.f32 %v1653, %v1664
          %v1702 = vmul.f32 %v1654, %v1669
          %v1703 = vmul.f32 %v1655, %v1674
          %v1704 = vmul.f32 %v1656, %v1679
          %v1705 = vmul.f32 %v1657, %v1684
          %v1706 = vmul.f32 %v1658, %v1689
          %v1707 = vmul.f32 %v1659, %v1694
          %v1708 = vmul.f32 %v1660, %v1699
          %v1709 = vpack.c.bf16 %v1702, %v1701
          %v1710 = vpack.c.bf16 %v1704, %v1703
          %v1711 = vpack.c.bf16 %v1706, %v1705
          %v1712 = vpack.c.bf16 %v1708, %v1707
          %v1713 = vld [vmem:[%s1411] sm:$0xff]
          %v1714 = vld [vmem:[%s1411 + $0x8] sm:$0xff]
          %v1715 = vld [vmem:[%s1411 + $0x10] sm:$0xff]
          %v1716 = vld [vmem:[%s1411 + $0x18] sm:$0xff]
          %v1717 = vld [vmem:[%s1411 + $0x20] sm:$0xff]
          %v1718 = vld [vmem:[%s1411 + $0x28] sm:$0xff]
          %v1719 = vld [vmem:[%s1411 + $0x30] sm:$0xff]
          %v1720 = vld [vmem:[%s1411 + $0x38] sm:$0xff]
          %v1721 = vrcp.pop %v1713
          %v1722 = vrcp.pop %v1714
          %v1723 = vrcp.pop %v1715
          %v1724 = vrcp.pop %v1716
          %v1725 = vrcp.pop %v1717
          %v1726 = vrcp.pop %v1718
          %v1727 = vrcp.pop %v1719
          %v1728 = vrcp.pop %v1720
          %v1729 = vld [vmem:[%s1468] sm:$0xff]
          %v1730 = vld [vmem:[%s1468 + $0x8] sm:$0xff]
          %v1731 = vld [vmem:[%s1468 + $0x10] sm:$0xff]
          %v1732 = vld [vmem:[%s1468 + $0x18] sm:$0xff]
          %v1733 = vld [vmem:[%s1468 + $0x20] sm:$0xff]
          %v1734 = vld [vmem:[%s1468 + $0x28] sm:$0xff]
          %v1735 = vld [vmem:[%s1468 + $0x30] sm:$0xff]
          %v1736 = vld [vmem:[%s1468 + $0x38] sm:$0xff]
          %1738 = vset.pattern.permute.xlu0 0
          %1739 = vperm.xlu0 %1738, %v1721
          %v1740 = vpop.permute.xlu0 %1739
          %1743 = vset.pattern.permute.xlu0 0
          %1744 = vperm.xlu0 %1743, %v1722
          %v1745 = vpop.permute.xlu0 %1744
          %1748 = vset.pattern.permute.xlu0 0
          %1749 = vperm.xlu0 %1748, %v1723
          %v1750 = vpop.permute.xlu0 %1749
          %1753 = vset.pattern.permute.xlu0 0
          %1754 = vperm.xlu0 %1753, %v1724
          %v1755 = vpop.permute.xlu0 %1754
          %1758 = vset.pattern.permute.xlu0 0
          %1759 = vperm.xlu0 %1758, %v1725
          %v1760 = vpop.permute.xlu0 %1759
          %1763 = vset.pattern.permute.xlu0 0
          %1764 = vperm.xlu0 %1763, %v1726
          %v1765 = vpop.permute.xlu0 %1764
          %1768 = vset.pattern.permute.xlu0 0
          %1769 = vperm.xlu0 %1768, %v1727
          %v1770 = vpop.permute.xlu0 %1769
          %1773 = vset.pattern.permute.xlu0 0
          %1774 = vperm.xlu0 %1773, %v1728
          %v1775 = vpop.permute.xlu0 %1774
          %v1777 = vmul.f32 %v1729, %v1740
          %v1778 = vmul.f32 %v1730, %v1745
          %v1779 = vmul.f32 %v1731, %v1750
          %v1780 = vmul.f32 %v1732, %v1755
          %v1781 = vmul.f32 %v1733, %v1760
          %v1782 = vmul.f32 %v1734, %v1765
          %v1783 = vmul.f32 %v1735, %v1770
          %v1784 = vmul.f32 %v1736, %v1775
          %v1785 = vpack.c.bf16 %v1778, %v1777
          %v1786 = vpack.c.bf16 %v1780, %v1779
          %v1787 = vpack.c.bf16 %v1782, %v1781
          %v1788 = vpack.c.bf16 %v1784, %v1783
          %1793 = vrot.lane.b32.xlu0 %v1785, 16
          %v1794 = vpop.permute.xlu0 %1793
          %1795 = vrot.lane.b32.xlu0 %v1786, 16
          %v1796 = vpop.permute.xlu0 %1795
          %1797 = vrot.lane.b32.xlu0 %v1787, 16
          %v1798 = vpop.permute.xlu0 %1797
          %1799 = vrot.lane.b32.xlu0 %v1788, 16
          %v1800 = vpop.permute.xlu0 %1799
          %v1803 = vsel %vm614, %v1709, %v1794
          %v1806 = vsel %vm614, %v1710, %v1796
          %v1809 = vsel %vm614, %v1711, %v1798
          %v1812 = vsel %vm614, %v1712, %v1800
          %v1813 = vld [vmem:[%s5] sm:$0xf]
          %v1814 = vld [vmem:[%s5 + $0x4] sm:$0xf]
          %v1815 = vld [vmem:[%s5 + $0x8] sm:$0xf]
          %v1816 = vld [vmem:[%s5 + $0xc] sm:$0xf]
          %v1817 = vld [vmem:[%s6] sm:$0x1]
          %v1819 = vlaneseq
          %v1820 = vshrl.u32 %v1819, 7
          %v1821 = vsub.s32 0, %v1820
          %v1822 = vrot.slane %v1817, %v1821
          %v1828 = vunpack.c.l.b16 %v1813
          %v1829 = vunpack.c.l.b16 %v1814
          %v1830 = vunpack.c.l.b16 %v1815
          %v1831 = vunpack.c.l.b16 %v1816
          %v1832 = vpack.c.b16 %v1829, %v1828
          %v1833 = vpack.c.b16 %v1831, %v1830
          %vm1836 = vcmask 261120
          %v1837 = vsel %vm1836, %v1803, 0
          %v1839 = vsel %vm1836, %v1806, 0
          %v1841 = vsel %vm1836, %v1809, 0
          %v1843 = vsel %vm1836, %v1812, 0
          %1845 = vmatprep.subr.bf16.mxu0 0
          %1846 = vmatpush1.bf16.msra.mxu0 0
          %1847 = vmatprep.subr.bf16.mxu0 0
          %1848 = vmatpush1.bf16.msra.mxu0 0
          %1849 = vmatprep.subr.bf16.mxu0 0
          %1850 = vmatpush1.bf16.msra.mxu0 0
          %1851 = vmatprep.subr.bf16.mxu0 0
          %1852 = vmatpush1.bf16.msra.mxu0 0
          %1853 = vmatprep.subr.bf16.mxu0 0
          %1854 = vmatpush1.bf16.msra.mxu0 0
          %1855 = vmatprep.subr.bf16.mxu0 0
          %1856 = vmatpush1.bf16.msra.mxu0 0
          %1857 = vmatprep.subr.bf16.mxu0 0
          %1858 = vmatpush1.bf16.msra.mxu0 %v1833
          %1859 = vmatprep.subr.bf16.mxu0 0
          %1860 = vmatpush1.bf16.msra.mxu0 %v1832
          %1861 = vmatprep.subr.bf16.mxu0 0
          %1862 = vmatpush2.bf16.msra.mxu0 0
          %1863 = vmatprep.subr.bf16.mxu0 0
          %1864 = vmatpush2.bf16.msra.mxu0 0
          %1865 = vmatprep.subr.bf16.mxu0 0
          %1866 = vmatpush2.bf16.msra.mxu0 0
          %1867 = vmatprep.subr.bf16.mxu0 0
          %1868 = vmatpush2.bf16.msra.mxu0 0
          %1869 = vmatprep.subr.bf16.mxu0 0
          %1870 = vmatpush2.bf16.msra.mxu0 0
          %1871 = vmatprep.subr.bf16.mxu0 0
          %1872 = vmatpush2.bf16.msra.mxu0 0
          %1873 = vmatprep.subr.bf16.mxu0 0
          %1874 = vmatpush2.bf16.msra.mxu0 0
          %1875 = vmatprep.subr.bf16.mxu0 0
          %1876 = vmatpush2.bf16.msra.mxu0 0
          %1877 = vmatprep.mubr.bf16.mxu0 0
          %1878 = vmatmul.mubr.bf16.gmra.mxu0 %v1837
          %v1879 = vpop.f32.mrf.mxu0
          %v1880 = vadd.f32 %v1822, %v1879
          %v1881 = vpop.f32.mrf.mxu0
          %v1882 = vpop.f32.mrf.mxu0
          %v1883 = vadd.f32 %v1822, %v1882
          %v1884 = vpop.f32.mrf.mxu0
          %1885 = vmatprep.mubr.bf16.mxu0 0
          %1886 = vmatmul.mubr.bf16.gmra.mxu0 %v1839
          %v1887 = vpop.f32.mrf.mxu0
          %v1888 = vadd.f32 %v1822, %v1887
          %v1889 = vpop.f32.mrf.mxu0
          %v1890 = vpop.f32.mrf.mxu0
          %v1891 = vadd.f32 %v1822, %v1890
          %v1892 = vpop.f32.mrf.mxu0
          %1893 = vmatprep.mubr.bf16.mxu0 0
          %1894 = vmatmul.mubr.bf16.gmra.mxu0 %v1841
          %v1895 = vpop.f32.mrf.mxu0
          %v1896 = vadd.f32 %v1822, %v1895
          %v1897 = vpop.f32.mrf.mxu0
          %v1898 = vpop.f32.mrf.mxu0
          %v1899 = vadd.f32 %v1822, %v1898
          %v1900 = vpop.f32.mrf.mxu0
          %1901 = vmatprep.mubr.bf16.mxu0 0
          %1902 = vmatmul.mubr.bf16.gmra.mxu0 %v1843
          %v1903 = vpop.f32.mrf.mxu0
          %v1904 = vadd.f32 %v1822, %v1903
          %v1905 = vpop.f32.mrf.mxu0
          %v1906 = vpop.f32.mrf.mxu0
          %v1907 = vadd.f32 %v1822, %v1906
          %v1908 = vpop.f32.mrf.mxu0
          %1909 = vdwg.mxu0
          %1910 = vst.msk [vmem:[%s329] sm:$0xff] %vm614, %v1880
          %1911 = vst.msk [vmem:[%s329 + $0x8] sm:$0xff] %vm614, %v1883
          %1912 = vst.msk [vmem:[%s329 + $0x10] sm:$0xff] %vm614, %v1888
          %1913 = vst.msk [vmem:[%s329 + $0x18] sm:$0xff] %vm614, %v1891
          %1914 = vst.msk [vmem:[%s329 + $0x20] sm:$0xff] %vm614, %v1896
          %1915 = vst.msk [vmem:[%s329 + $0x28] sm:$0xff] %vm614, %v1899
          %1916 = vst.msk [vmem:[%s329 + $0x30] sm:$0xff] %vm614, %v1904
          %1917 = vst.msk [vmem:[%s329 + $0x38] sm:$0xff] %vm614, %v1907
        $region56: #{attention_forward.3} parent=47 // pred_fallthru
          _
        %s1918 = sand.u32 %s211, 1
        %s1919 = scalar_lea.sflag [#allocation7], %s1918
        %s1920 = sand.u32 %s211, 1
        %s1921 = smul.addr %s1920, 64
        %s1922 = scalar_lea.vmem [#allocation6], %s1921
        // Predicated region
        $region57: #{attention_forward.3} parent=47 // pred_check
          %p1923 = pneg %p221
        $region58: #{attention_forward.3} parent=47 // pred_check_branch
          %1925 = sbr.rel (%p1923) target = $region60
        $region59: #{attention_forward.3} parent=47 // pred_region
          %s1926 = smul.u32 8, %s27
          %s1928 = ssub.s32 1024, 1024
          %1929 = vsyncadd %s1919, %s1928
          %s1930 = smul.addr %s26, 8
          %s1931 = sadd.s32 %s1926, %s1930
          %s1932 = smul.addr %s1931, 128
          %s1933 = scalar_lea.hbm %s7, %s1932
          %s1934 = sshll.u32 %s1922, 4
          %s1935 = int_to_ptr.vmem [resolvable:$true] %s1934
          %1940 = dma.vmem_to_hbm [thread:$0]  %s1935, 1024, %s1933, %s1919, 128, 128, 8
        $region60: #{attention_forward.3} parent=47 // pred_fallthru
          _
      $region48: #{attention_forward.3} parent=5 // pred_fallthru
        _
      %p1941 = scmp.le.s32.totalorder 2, %s16
      // Predicated region
      $region61: #{attention_forward.3} parent=5 // pred_check
        %p1942 = pneg %p1941
      $region62: #{attention_forward.3} parent=5 // pred_check_branch
        %1944 = sbr.rel (%p1942) target = $region64
      $region63: #{attention_forward.3} parent=5 // pred_region
        %s1945 = ssub.s32 %s16, 2
        // Predicated region
        $region65: #{attention_forward.3} parent=63 // pred_check
          %p1946 = pneg %p227
        $region66: #{attention_forward.3} parent=63 // pred_check_branch
          %1948 = sbr.rel (%p1946) target = $region68
        $region67: #{attention_forward.3} parent=63 // pred_region
          %s1949 = sand.u32 %s212, 1
          %s1950 = scalar_lea.sflag [#allocation7], %s1949
          %s1951 = sand.u32 %s212, 1
          %s1952 = smul.addr %s1951, 64
          %s1953 = scalar_lea.vmem [#allocation6], %s1952
          %1954 = dma.done %s1950, 1024
        $region68: #{attention_forward.3} parent=63 // pred_fallthru
          _
      $region64: #{attention_forward.3} parent=5 // pred_fallthru
        _
    $region6: #{attention_forward.3} parent=1 // loop_footer
      %s20 = sadd.s32 1, %s16
    $region7: #{attention_forward.3} parent=1 // loop_footer_branch
      %15 = sbr.rel target = $region3
    $region8: #{attention_forward.3} parent=1 // loop_exit
      _
    %1955 = vsyncpa [#allocation7], 1
    %s1956 = scalar_lea.sflag [#allocation7], 1
    %1957 = vsyncpa %s1956, 1

</llo_original>
